<compile_context>
chip_gen: v7x
topology: tpu7x:2x2x1
jax: 0.10.0
libtpu: 0.0.40
codegen_flags: <defaults>
</compile_context>

<pallas_src>
import numpy as np

import jax
import jax.numpy as jnp
from jax.experimental import pallas as pl
from jax.experimental.pallas import tpu as pltpu

LANES = 128
EPS = 1e-5
N_BATCH = 2


# ---------------------------------------------------------------------------
# The single fused Pallas kernel
# ---------------------------------------------------------------------------

def _resnet_kernel(x_ref,                      # (N, 81, 128) bf16 stem im2col patches
                   w0_ref, gb0_ref,            # (128, 128) bf16 | (2, 128) f32
                   s1_ref, w1_ref, gb1_ref,    # (4, 25, 81) | (512, 256) | (2, 256)
                   s2_ref, w2_ref, gb2_ref,    # (4,  9, 25) | (512, 256) | (2, 256)
                   s3_ref, w3_ref, gb3_ref,    # (4,  4,  9) | (512, 256) | (2, 256)
                   wf_ref, bf_ref,             # (128, 512) bf16 | (1, 128) f32
                   o_ref):                     # (npad, 128) f32
    f32, bf16 = jnp.float32, jnp.bfloat16
    n = x_ref.shape[0]
    npad = o_ref.shape[0]

    def bn_fold(ys, gb_ref):
        # Training-mode batch statistics over every row of every image
        # (matches torch BatchNorm2d in train mode, gamma=1 / beta=0 on real
        # channels), computed in one pass and folded into a single per-column
        # scale/shift.  gamma is exactly 0 on padded columns so padded lanes
        # stay 0 through the residual add.
        cnt = sum(y.shape[0] for y in ys)
        ssum = ys[0].sum(axis=0, keepdims=True)
        ssq = (ys[0] * ys[0]).sum(axis=0, keepdims=True)
        for y in ys[1:]:
            ssum = ssum + y.sum(axis=0, keepdims=True)
            ssq = ssq + (y * y).sum(axis=0, keepdims=True)
        mu = ssum * (1.0 / cnt)
        var = ssq * (1.0 / cnt) - mu * mu
        scale = gb_ref[0:1, :] * jax.lax.rsqrt(var + EPS)
        shift = gb_ref[1:2, :] - mu * scale
        return scale, shift

    # ----- stem: conv2x2(1->16, s=2, p=1) -> BN -> ReLU ---------------------
    # im2col of the Cin=1 input is pure layout and was done in the wrapper.
    w0 = w0_ref[...]
    ys = [jnp.dot(x_ref[b], w0, preferred_element_type=f32) for b in range(n)]
    scale, shift = bn_fold(ys, gb0_ref)
    acts = [jnp.maximum(y * scale + shift, 0.0) for y in ys]    # n x (81, 128) f32

    # ----- residual stages: relu(BN(conv(x)) + BN(conv_down(x))) ------------
    # Per-image 0/1 gather matrices (O(N), not O(N^2)); the gather for all
    # images at once is ONE lane-wide bf16 matmul per tap, then the conv is
    # per-tap accumulation against the stacked (main | downsample) 256-wide RHS.
    def stage(s_ref, w_ref, gb_ref, acts):
        m_out = s_ref.shape[1]
        act_wide = jnp.concatenate(acts, axis=1).astype(bf16)   # (m_in, n*128)
        rows = [jnp.dot(s_ref[k], act_wide,
                        preferred_element_type=f32).astype(bf16)  # exact: 0/1 gather
                for k in range(4)]                              # (m_out, n*128)
        ys = []
        for b in range(n):
            sl = slice(b * LANES, (b + 1) * LANES)
            y = jnp.dot(rows[0][:, sl], w_ref[0:LANES, :],
                        preferred_element_type=f32)
            for k in range(1, 4):
                y = y + jnp.dot(rows[k][:, sl],
                                w_ref[k * LANES:(k + 1) * LANES, :],
                                preferred_element_type=f32)
            ys.append(y)                                        # (m_out, 256) f32
        scale, shift = bn_fold(ys, gb_ref)
        outs = []
        for y in ys:
            z = y * scale + shift
            outs.append(jnp.maximum(z[:, :LANES] + z[:, LANES:], 0.0))
        return outs                                             # n x (m_out, 128)

    acts = stage(s1_ref, w1_ref, gb1_ref, acts)   # 9x9 -> 5x5, 16ch
    acts = stage(s2_ref, w2_ref, gb2_ref, acts)   # 5x5 -> 3x3, 32ch
    acts = stage(s3_ref, w3_ref, gb3_ref, acts)   # 3x3 -> 2x2, 64ch

    # ----- fc head: torch's NCHW flatten folded into the weight layout ------
    # logits[b, o] = sum_{hw, c} act3_b[hw, c] * Wfc[c*4 + hw, o] + bias[o]
    # wf_ref[c, hw*128 + o] = Wfc[c*4 + hw, o]  ->  per image ONE 512-wide
    # matmul, then pick row hw of lane-block hw with an iota mask and reduce.
    wf = wf_ref[...]
    hw_iota = jax.lax.broadcasted_iota(jnp.int32, (4, 1), 0)
    out_iota = jax.lax.broadcasted_iota(jnp.int32, (npad, 1), 0)
    out = jnp.zeros((npad, LANES), f32)
    for b in range(n):
        t = jnp.dot(acts[b].astype(bf16), wf,
                    preferred_element_type=f32)                 # (4, 512)
        picked = jnp.zeros((4, LANES), f32)
        for hw in range(4):
            blk = t[:, hw * LANES:(hw + 1) * LANES]
            picked = picked + jnp.where(hw_iota == hw, blk, 0.0)
        logits_b = picked.sum(axis=0, keepdims=True)            # (1, 128)
        out = out + jnp.where(out_iota == b, logits_b, 0.0)
    o_ref[...] = out + bf_ref[...]


# ---------------------------------------------------------------------------
# Wrapper
# ---------------------------------------------------------------------------

def _stem_patches(x_nchw):
    """im2col of the Cin=1 input for conv2x2(s=2, p=1): (N, 81, 128) bf16."""
    n, _, h, w = x_nchw.shape
    ho, wo = h // 2 + 1, w // 2 + 1
    x = x_nchw.astype(jnp.float32)[:, 0, :, :]
    xp = jnp.pad(x, ((0, 0), (1, 1), (1, 1)))
    cols = [xp[:, kh:kh + 2 * ho:2, kw:kw + 2 * wo:2]            # (n, ho, wo)
            for kh in range(2) for kw in range(2)]               # k = kh*2 + kw
    p = jnp.stack(cols, axis=-1).reshape(n, ho * wo, 4)
    p = jnp.pad(p, ((0, 0), (0, 0), (0, LANES - 4)))
    return p.astype(jnp.bfloat16)


def resnet_forward(prep, x_nchw):
    n = x_nchw.shape[0]
    npad = ((n + 7) // 8) * 8
    p0 = _stem_patches(x_nchw)

    args = (p0,
            prep["w0"], prep["gb0"],
            prep["s1"], prep["w1"], prep["gb1"],
            prep["s2"], prep["w2"], prep["gb2"],
            prep["s3"], prep["w3"], prep["gb3"],
            prep["wf"], prep["bf"])

    vmem = lambda: pl.BlockSpec(memory_space=pltpu.MemorySpace.VMEM)
    out = pl.pallas_call(
        _resnet_kernel,
        out_shape=jax.ShapeDtypeStruct((npad, LANES), jnp.float32),
        in_specs=[vmem() for _ in args],
        out_specs=vmem(),
    )(*args)
    return out[:n, :10]


# ---------------------------------------------------------------------------
# Parameter / constant preparation (host-side, done once)
# ---------------------------------------------------------------------------

def _selection_matrices(h, w):
    """Per-image 0/1 gather matrices of conv2x2(s=2, p=1): (4, ho*wo, h*w) bf16."""
    ho, wo = h // 2 + 1, w // 2 + 1
    s = np.zeros((4, ho * wo, h * w), np.float32)
    for k in range(4):
        kh, kw = divmod(k, 2)
        for oh in range(ho):
            ih = 2 * oh + kh - 1
            if not 0 <= ih < h:
                continue
            for ow in range(wo):
                iw = 2 * ow + kw - 1
                if not 0 <= iw < w:
                    continue
                s[k, oh * wo + ow, ih * w + iw] = 1.0
    return jnp.asarray(s, jnp.bfloat16)


def _stack_conv_weight(w_oihw, cout_pad=LANES):
    """torch (Cout, Cin, 2, 2) -> (4*128, cout_pad) f32, rows ordered [k*128 + ci]."""
    cout, cin = w_oihw.shape[:2]
    w = w_oihw.reshape(cout, cin, 4)             # [co, ci, k], k = kh*2 + kw
    w = jnp.transpose(w, (2, 1, 0))              # [k, ci, co]
    w = jnp.pad(w, ((0, 0), (0, LANES - cin), (0, cout_pad - cout)))
    return w.reshape(4 * LANES, cout_pad)


def _stem_weight(w_oihw):
    """torch (16, 1, 2, 2) -> (128, 128): row k (= kh*2+kw), col co."""
    cout = w_oihw.shape[0]
    w = jnp.transpose(w_oihw.reshape(cout, 4), (1, 0))           # [k, co]
    return jnp.pad(w, ((0, LANES - 4), (0, LANES - cout)))


def _bn_gb(cout_list, width):
    """Packed (2, width) f32: row0 = gamma (1 on real channels), row1 = beta."""
    g = np.zeros((width,), np.float32)
    for i, c in enumerate(cout_list):
        g[i * LANES:i * LANES + c] = 1.0
    return jnp.asarray(np.stack([g, np.zeros_like(g)], axis=0))


def init_params(key):
    ks = jax.random.split(key, 9)

    def conv_w(k, cout, cin):
        return jax.random.normal(k, (cout, cin, 2, 2), jnp.float32) * 0.2

    return {
        "stem_w": conv_w(ks[0], 16, 1),
        "l1_w": conv_w(ks[1], 16, 16), "l1_wd": conv_w(ks[2], 16, 16),
        "l2_w": conv_w(ks[3], 32, 16), "l2_wd": conv_w(ks[4], 32, 16),
        "l3_w": conv_w(ks[5], 64, 32), "l3_wd": conv_w(ks[6], 64, 32),
        "fc_w": jax.random.normal(ks[7], (256, 10), jnp.float32) * 0.05,
        "fc_b": jax.random.normal(ks[8], (1, 10), jnp.float32) * 0.01,
    }


def prepare(params):
    """Pad / stack / bf16-cast all constants once (all MXU operands -> bf16)."""
    bf16 = jnp.bfloat16
    prep = {}
    # per-image gather matrices for the three residual-stage convs
    for i, h in enumerate((9, 5, 3), start=1):
        prep[f"s{i}"] = _selection_matrices(h, h)
    # stem (Cin=1): weight only; its im2col happens in the wrapper
    prep["w0"] = _stem_weight(params["stem_w"]).astype(bf16)
    prep["gb0"] = _bn_gb([16], LANES)
    # residual stages: main | downsample weights stacked into a 256-wide RHS
    for i, (wm, wd, cout) in enumerate(
            ((params["l1_w"], params["l1_wd"], 16),
             (params["l2_w"], params["l2_wd"], 32),
             (params["l3_w"], params["l3_wd"], 64)), start=1):
        prep[f"w{i}"] = jnp.concatenate(
            [_stack_conv_weight(wm), _stack_conv_weight(wd)], axis=1).astype(bf16)
        prep[f"gb{i}"] = _bn_gb([cout, cout], 2 * LANES)
    # fc: fold torch's NCHW flatten (index c*4 + hw) into wf[c, hw*128 + o]
    wfc = params["fc_w"].reshape(64, 4, 10)                      # [c, hw, o]
    wfc = jnp.pad(wfc, ((0, LANES - 64), (0, 0), (0, LANES - 10)))
    prep["wf"] = wfc.reshape(LANES, 4 * LANES).astype(bf16)
    prep["bf"] = jnp.pad(params["fc_b"], ((0, 0), (0, LANES - 10)))
    return prep


# ---------------------------------------------------------------------------
# Pure-JAX references
# ---------------------------------------------------------------------------

def _reference_forward(params, x_nchw, matmul_dtype=jnp.float32):
    """With matmul_dtype=bf16 the matmul operands are rounded at the same
    points as the kernel (tight check); with f32 it is the exact torch-
    semantics forward (sanity check bounding the bf16 quantization)."""
    hi = jax.lax.Precision.HIGHEST

    def mm(a, b):
        return jnp.dot(a.astype(matmul_dtype), b.astype(matmul_dtype),
                       preferred_element_type=jnp.float32, precision=hi)

    def im2col(x):                                   # x: NHWC
        n, h, w, c = x.shape
        ho, wo = h // 2 + 1, w // 2 + 1
        xp = jnp.pad(x, ((0, 0), (1, 1), (1, 1), (0, 0)))
        cols = [xp[:, kh:kh + 2 * ho:2, kw:kw + 2 * wo:2, :]
                for kh in range(2) for kw in range(2)]
        p = jnp.stack(cols, axis=-1)                 # (n, ho, wo, c, 4)
        return p.reshape(n * ho * wo, c * 4), ho, wo

    def conv_bn(p, w_oihw, relu):
        cout = w_oihw.shape[0]
        wmat = jnp.transpose(w_oihw.reshape(cout, -1), (1, 0))
        y = mm(p, wmat)
        mu = y.mean(0, keepdims=True)
        var = (y * y).mean(0, keepdims=True) - mu * mu
        y = (y - mu) * jax.lax.rsqrt(var + EPS)
        return jnp.maximum(y, 0.0) if relu else y

    n = x_nchw.shape[0]
    x = jnp.transpose(x_nchw, (0, 2, 3, 1)).astype(jnp.float32)
    p, ho, wo = im2col(x)
    x = conv_bn(p, params["stem_w"], True).reshape(n, ho, wo, 16)
    for wm, wd, c in ((params["l1_w"], params["l1_wd"], 16),
                      (params["l2_w"], params["l2_wd"], 32),
                      (params["l3_w"], params["l3_wd"], 64)):
        p, ho, wo = im2col(x)
        y = jnp.maximum(conv_bn(p, wm, False) + conv_bn(p, wd, False), 0.0)
        x = y.reshape(n, ho, wo, c)
    feat = jnp.transpose(x, (0, 3, 1, 2)).reshape(n, -1)         # torch view(N, -1)
    return mm(feat, params["fc_w"]) + params["fc_b"]


# ---------------------------------------------------------------------------

if __name__ == "__main__":
    key = jax.random.PRNGKey(0)
    k_param, k_in = jax.random.split(key)
    params = init_params(k_param)
    prep = prepare(params)

    x = jax.random.normal(k_in, (N_BATCH, 1, 16, 16), jnp.float32)

    fwd = jax.jit(resnet_forward)
    logits = jax.block_until_ready(fwd(prep, x))

    assert logits.shape == (N_BATCH, 10), logits.shape
    assert bool(jnp.all(jnp.isfinite(logits)))

    # Tight gate: reference whose matmul operands are rounded to bf16 at the
    # same points as the kernel (remaining differences are f32 accumulation
    # order / transcendental ULPs only).
    ref_bf16 = jax.block_until_ready(
        _reference_forward(params, x, matmul_dtype=jnp.bfloat16))
    assert bool(jnp.allclose(logits, ref_bf16, atol=5e-3, rtol=5e-3)), (
        jnp.max(jnp.abs(logits - ref_bf16)))

    # Sanity vs the all-f32 torch-semantics reference: the gap here is purely
    # the bf16 quantization of the matmul operands.
    ref_f32 = jax.block_until_ready(_reference_forward(params, x))
    assert bool(jnp.allclose(logits, ref_f32, atol=1e-1, rtol=1e-1)), (
        jnp.max(jnp.abs(logits - ref_f32)))

    print("KERNEL_OK")
</pallas_src>

<mosaic_0001>
module attributes {stable_mosaic.version = 11 : i64} {
  func.func @_resnet_kernel(%arg0: memref<2x81x128xbf16, #tpu.memory_space<vmem>>, %arg1: memref<128x128xbf16, #tpu.memory_space<vmem>>, %arg2: memref<2x128xf32, #tpu.memory_space<vmem>>, %arg3: memref<4x25x81xbf16, #tpu.memory_space<vmem>>, %arg4: memref<512x256xbf16, #tpu.memory_space<vmem>>, %arg5: memref<2x256xf32, #tpu.memory_space<vmem>>, %arg6: memref<4x9x25xbf16, #tpu.memory_space<vmem>>, %arg7: memref<512x256xbf16, #tpu.memory_space<vmem>>, %arg8: memref<2x256xf32, #tpu.memory_space<vmem>>, %arg9: memref<4x4x9xbf16, #tpu.memory_space<vmem>>, %arg10: memref<512x256xbf16, #tpu.memory_space<vmem>>, %arg11: memref<2x256xf32, #tpu.memory_space<vmem>>, %arg12: memref<128x512xbf16, #tpu.memory_space<vmem>>, %arg13: memref<1x128xf32, #tpu.memory_space<vmem>>, %arg14: memref<8x128xf32, #tpu.memory_space<vmem>>) attributes {dimension_semantics = [], scalar_prefetch = 0 : i64, scratch_operands = 0 : i64, tpu.core_type = #tpu.core_type<tc>} {
    %c0 = arith.constant 0 : index
    %c0_0 = arith.constant 0 : index
    %0 = vector.load %arg1[%c0, %c0_0] : memref<128x128xbf16, #tpu.memory_space<vmem>>, vector<128x128xbf16>
    %c0_1 = arith.constant 0 : index
    %c0_2 = arith.constant 0 : index
    %c0_3 = arith.constant 0 : index
    %1 = vector.load %arg0[%c0_1, %c0_2, %c0_3] : memref<2x81x128xbf16, #tpu.memory_space<vmem>>, vector<1x81x128xbf16>
    %2 = vector.shape_cast %1 : vector<1x81x128xbf16> to vector<81x128xbf16>
    %cst = arith.constant dense<0.000000e+00> : vector<81x128xf32>
    %3 = tpu.matmul %2, %0, %cst {dimension_numbers = #tpu.dot_dimension_numbers<[1], [0], [0], [1], [0, 0, 1, 1], [], []>} : vector<81x128xbf16>, vector<128x128xbf16>, vector<81x128xf32> -> vector<81x128xf32>
    %c1 = arith.constant 1 : index
    %c0_4 = arith.constant 0 : index
    %c0_5 = arith.constant 0 : index
    %4 = vector.load %arg0[%c1, %c0_4, %c0_5] : memref<2x81x128xbf16, #tpu.memory_space<vmem>>, vector<1x81x128xbf16>
    %5 = vector.shape_cast %4 : vector<1x81x128xbf16> to vector<81x128xbf16>
    %cst_6 = arith.constant dense<0.000000e+00> : vector<81x128xf32>
    %6 = tpu.matmul %5, %0, %cst_6 {dimension_numbers = #tpu.dot_dimension_numbers<[1], [0], [0], [1], [0, 0, 1, 1], [], []>} : vector<81x128xbf16>, vector<128x128xbf16>, vector<81x128xf32> -> vector<81x128xf32>
    %cst_7 = arith.constant dense<0.000000e+00> : vector<128xf32>
    %7 = vector.multi_reduction <add>, %3, %cst_7 [0] : vector<81x128xf32> to vector<128xf32>
    %8 = vector.shape_cast %7 : vector<128xf32> to vector<1x128xf32>
    %9 = arith.mulf %3, %3 : vector<81x128xf32>
    %cst_8 = arith.constant dense<0.000000e+00> : vector<128xf32>
    %10 = vector.multi_reduction <add>, %9, %cst_8 [0] : vector<81x128xf32> to vector<128xf32>
    %11 = vector.shape_cast %10 : vector<128xf32> to vector<1x128xf32>
    %cst_9 = arith.constant dense<0.000000e+00> : vector<128xf32>
    %12 = vector.multi_reduction <add>, %6, %cst_9 [0] : vector<81x128xf32> to vector<128xf32>
    %13 = vector.shape_cast %12 : vector<128xf32> to vector<1x128xf32>
    %14 = arith.addf %8, %13 : vector<1x128xf32>
    %15 = arith.mulf %6, %6 : vector<81x128xf32>
    %cst_10 = arith.constant dense<0.000000e+00> : vector<128xf32>
    %16 = vector.multi_reduction <add>, %15, %cst_10 [0] : vector<81x128xf32> to vector<128xf32>
    %17 = vector.shape_cast %16 : vector<128xf32> to vector<1x128xf32>
    %18 = arith.addf %11, %17 : vector<1x128xf32>
    %cst_11 = arith.constant 0.00617283955 : f32
    %19 = vector.broadcast %cst_11 : f32 to vector<1x128xf32>
    %20 = arith.mulf %14, %19 : vector<1x128xf32>
    %cst_12 = arith.constant 0.00617283955 : f32
    %21 = vector.broadcast %cst_12 : f32 to vector<1x128xf32>
    %22 = arith.mulf %18, %21 : vector<1x128xf32>
    %23 = arith.mulf %20, %20 : vector<1x128xf32>
    %24 = arith.subf %22, %23 : vector<1x128xf32>
    %c0_13 = arith.constant 0 : index
    %c0_14 = arith.constant 0 : index
    %25 = vector.load %arg2[%c0_13, %c0_14] : memref<2x128xf32, #tpu.memory_space<vmem>>, vector<1x128xf32>
    %cst_15 = arith.constant 9.99999974E-6 : f32
    %26 = vector.broadcast %cst_15 : f32 to vector<1x128xf32>
    %27 = arith.addf %24, %26 : vector<1x128xf32>
    %28 = math.rsqrt %27 : vector<1x128xf32>
    %29 = arith.mulf %25, %28 : vector<1x128xf32>
    %c1_16 = arith.constant 1 : index
    %c0_17 = arith.constant 0 : index
    %30 = vector.load %arg2[%c1_16, %c0_17] : memref<2x128xf32, #tpu.memory_space<vmem>>, vector<1x128xf32>
    %31 = arith.mulf %20, %29 : vector<1x128xf32>
    %32 = arith.subf %30, %31 : vector<1x128xf32>
    %33 = vector.broadcast %29 : vector<1x128xf32> to vector<81x128xf32>
    %34 = arith.mulf %3, %33 : vector<81x128xf32>
    %35 = vector.broadcast %32 : vector<1x128xf32> to vector<81x128xf32>
    %36 = arith.addf %34, %35 : vector<81x128xf32>
    %cst_18 = arith.constant 0.000000e+00 : f32
    %37 = vector.broadcast %cst_18 : f32 to vector<81x128xf32>
    %38 = arith.maximumf %36, %37 : vector<81x128xf32>
    %39 = vector.broadcast %29 : vector<1x128xf32> to vector<81x128xf32>
    %40 = arith.mulf %6, %39 : vector<81x128xf32>
    %41 = vector.broadcast %32 : vector<1x128xf32> to vector<81x128xf32>
    %42 = arith.addf %40, %41 : vector<81x128xf32>
    %cst_19 = arith.constant 0.000000e+00 : f32
    %43 = vector.broadcast %cst_19 : f32 to vector<81x128xf32>
    %44 = arith.maximumf %42, %43 : vector<81x128xf32>
    %45 = tpu.concatenate %38, %44 in 1 : vector<81x128xf32>, vector<81x128xf32> -> vector<81x256xf32>
    %46 = arith.truncf %45 : vector<81x256xf32> to vector<81x256xbf16>
    %c0_20 = arith.constant 0 : index
    %c0_21 = arith.constant 0 : index
    %c0_22 = arith.constant 0 : index
    %47 = vector.load %arg3[%c0_20, %c0_21, %c0_22] : memref<4x25x81xbf16, #tpu.memory_space<vmem>>, vector<1x25x81xbf16>
    %48 = vector.shape_cast %47 : vector<1x25x81xbf16> to vector<25x81xbf16>
    %cst_23 = arith.constant dense<0.000000e+00> : vector<25x256xf32>
    %49 = tpu.matmul %48, %46, %cst_23 {dimension_numbers = #tpu.dot_dimension_numbers<[1], [0], [0], [1], [0, 0, 1, 1], [], []>} : vector<25x81xbf16>, vector<81x256xbf16>, vector<25x256xf32> -> vector<25x256xf32>
    %50 = arith.truncf %49 : vector<25x256xf32> to vector<25x256xbf16>
    %c1_24 = arith.constant 1 : index
    %c0_25 = arith.constant 0 : index
    %c0_26 = arith.constant 0 : index
    %51 = vector.load %arg3[%c1_24, %c0_25, %c0_26] : memref<4x25x81xbf16, #tpu.memory_space<vmem>>, vector<1x25x81xbf16>
    %52 = vector.shape_cast %51 : vector<1x25x81xbf16> to vector<25x81xbf16>
    %cst_27 = arith.constant dense<0.000000e+00> : vector<25x256xf32>
    %53 = tpu.matmul %52, %46, %cst_27 {dimension_numbers = #tpu.dot_dimension_numbers<[1], [0], [0], [1], [0, 0, 1, 1], [], []>} : vector<25x81xbf16>, vector<81x256xbf16>, vector<25x256xf32> -> vector<25x256xf32>
    %54 = arith.truncf %53 : vector<25x256xf32> to vector<25x256xbf16>
    %c2 = arith.constant 2 : index
    %c0_28 = arith.constant 0 : index
    %c0_29 = arith.constant 0 : index
    %55 = vector.load %arg3[%c2, %c0_28, %c0_29] : memref<4x25x81xbf16, #tpu.memory_space<vmem>>, vector<1x25x81xbf16>
    %56 = vector.shape_cast %55 : vector<1x25x81xbf16> to vector<25x81xbf16>
    %cst_30 = arith.constant dense<0.000000e+00> : vector<25x256xf32>
    %57 = tpu.matmul %56, %46, %cst_30 {dimension_numbers = #tpu.dot_dimension_numbers<[1], [0], [0], [1], [0, 0, 1, 1], [], []>} : vector<25x81xbf16>, vector<81x256xbf16>, vector<25x256xf32> -> vector<25x256xf32>
    %58 = arith.truncf %57 : vector<25x256xf32> to vector<25x256xbf16>
    %c3 = arith.constant 3 : index
    %c0_31 = arith.constant 0 : index
    %c0_32 = arith.constant 0 : index
    %59 = vector.load %arg3[%c3, %c0_31, %c0_32] : memref<4x25x81xbf16, #tpu.memory_space<vmem>>, vector<1x25x81xbf16>
    %60 = vector.shape_cast %59 : vector<1x25x81xbf16> to vector<25x81xbf16>
    %cst_33 = arith.constant dense<0.000000e+00> : vector<25x256xf32>
    %61 = tpu.matmul %60, %46, %cst_33 {dimension_numbers = #tpu.dot_dimension_numbers<[1], [0], [0], [1], [0, 0, 1, 1], [], []>} : vector<25x81xbf16>, vector<81x256xbf16>, vector<25x256xf32> -> vector<25x256xf32>
    %62 = arith.truncf %61 : vector<25x256xf32> to vector<25x256xbf16>
    %63 = vector.extract_strided_slice %50 {offsets = [0, 0], sizes = [25, 128], strides = [1, 1]} : vector<25x256xbf16> to vector<25x128xbf16>
    %c0_34 = arith.constant 0 : index
    %c0_35 = arith.constant 0 : index
    %64 = vector.load %arg4[%c0_34, %c0_35] : memref<512x256xbf16, #tpu.memory_space<vmem>>, vector<128x256xbf16>
    %cst_36 = arith.constant dense<0.000000e+00> : vector<25x256xf32>
    %65 = tpu.matmul %63, %64, %cst_36 {dimension_numbers = #tpu.dot_dimension_numbers<[1], [0], [0], [1], [0, 0, 1, 1], [], []>} : vector<25x128xbf16>, vector<128x256xbf16>, vector<25x256xf32> -> vector<25x256xf32>
    %66 = vector.extract_strided_slice %54 {offsets = [0, 0], sizes = [25, 128], strides = [1, 1]} : vector<25x256xbf16> to vector<25x128xbf16>
    %c128 = arith.constant 128 : index
    %c0_37 = arith.constant 0 : index
    %67 = vector.load %arg4[%c128, %c0_37] : memref<512x256xbf16, #tpu.memory_space<vmem>>, vector<128x256xbf16>
    %cst_38 = arith.constant dense<0.000000e+00> : vector<25x256xf32>
    %68 = tpu.matmul %66, %67, %cst_38 {dimension_numbers = #tpu.dot_dimension_numbers<[1], [0], [0], [1], [0, 0, 1, 1], [], []>} : vector<25x128xbf16>, vector<128x256xbf16>, vector<25x256xf32> -> vector<25x256xf32>
    %69 = arith.addf %65, %68 : vector<25x256xf32>
    %70 = vector.extract_strided_slice %58 {offsets = [0, 0], sizes = [25, 128], strides = [1, 1]} : vector<25x256xbf16> to vector<25x128xbf16>
    %c256 = arith.constant 256 : index
    %c0_39 = arith.constant 0 : index
    %71 = vector.load %arg4[%c256, %c0_39] : memref<512x256xbf16, #tpu.memory_space<vmem>>, vector<128x256xbf16>
    %cst_40 = arith.constant dense<0.000000e+00> : vector<25x256xf32>
    %72 = tpu.matmul %70, %71, %cst_40 {dimension_numbers = #tpu.dot_dimension_numbers<[1], [0], [0], [1], [0, 0, 1, 1], [], []>} : vector<25x128xbf16>, vector<128x256xbf16>, vector<25x256xf32> -> vector<25x256xf32>
    %73 = arith.addf %69, %72 : vector<25x256xf32>
    %74 = vector.extract_strided_slice %62 {offsets = [0, 0], sizes = [25, 128], strides = [1, 1]} : vector<25x256xbf16> to vector<25x128xbf16>
    %c384 = arith.constant 384 : index
    %c0_41 = arith.constant 0 : index
    %75 = vector.load %arg4[%c384, %c0_41] : memref<512x256xbf16, #tpu.memory_space<vmem>>, vector<128x256xbf16>
    %cst_42 = arith.constant dense<0.000000e+00> : vector<25x256xf32>
    %76 = tpu.matmul %74, %75, %cst_42 {dimension_numbers = #tpu.dot_dimension_numbers<[1], [0], [0], [1], [0, 0, 1, 1], [], []>} : vector<25x128xbf16>, vector<128x256xbf16>, vector<25x256xf32> -> vector<25x256xf32>
    %77 = arith.addf %73, %76 : vector<25x256xf32>
    %78 = vector.extract_strided_slice %50 {offsets = [0, 128], sizes = [25, 128], strides = [1, 1]} : vector<25x256xbf16> to vector<25x128xbf16>
    %c0_43 = arith.constant 0 : index
    %c0_44 = arith.constant 0 : index
    %79 = vector.load %arg4[%c0_43, %c0_44] : memref<512x256xbf16, #tpu.memory_space<vmem>>, vector<128x256xbf16>
    %cst_45 = arith.constant dense<0.000000e+00> : vector<25x256xf32>
    %80 = tpu.matmul %78, %79, %cst_45 {dimension_numbers = #tpu.dot_dimension_numbers<[1], [0], [0], [1], [0, 0, 1, 1], [], []>} : vector<25x128xbf16>, vector<128x256xbf16>, vector<25x256xf32> -> vector<25x256xf32>
    %81 = vector.extract_strided_slice %54 {offsets = [0, 128], sizes = [25, 128], strides = [1, 1]} : vector<25x256xbf16> to vector<25x128xbf16>
    %c128_46 = arith.constant 128 : index
    %c0_47 = arith.constant 0 : index
    %82 = vector.load %arg4[%c128_46, %c0_47] : memref<512x256xbf16, #tpu.memory_space<vmem>>, vector<128x256xbf16>
    %cst_48 = arith.constant dense<0.000000e+00> : vector<25x256xf32>
    %83 = tpu.matmul %81, %82, %cst_48 {dimension_numbers = #tpu.dot_dimension_numbers<[1], [0], [0], [1], [0, 0, 1, 1], [], []>} : vector<25x128xbf16>, vector<128x256xbf16>, vector<25x256xf32> -> vector<25x256xf32>
    %84 = arith.addf %80, %83 : vector<25x256xf32>
    %85 = vector.extract_strided_slice %58 {offsets = [0, 128], sizes = [25, 128], strides = [1, 1]} : vector<25x256xbf16> to vector<25x128xbf16>
    %c256_49 = arith.constant 256 : index
    %c0_50 = arith.constant 0 : index
    %86 = vector.load %arg4[%c256_49, %c0_50] : memref<512x256xbf16, #tpu.memory_space<vmem>>, vector<128x256xbf16>
    %cst_51 = arith.constant dense<0.000000e+00> : vector<25x256xf32>
    %87 = tpu.matmul %85, %86, %cst_51 {dimension_numbers = #tpu.dot_dimension_numbers<[1], [0], [0], [1], [0, 0, 1, 1], [], []>} : vector<25x128xbf16>, vector<128x256xbf16>, vector<25x256xf32> -> vector<25x256xf32>
    %88 = arith.addf %84, %87 : vector<25x256xf32>
    %89 = vector.extract_strided_slice %62 {offsets = [0, 128], sizes = [25, 128], strides = [1, 1]} : vector<25x256xbf16> to vector<25x128xbf16>
    %c384_52 = arith.constant 384 : index
    %c0_53 = arith.constant 0 : index
    %90 = vector.load %arg4[%c384_52, %c0_53] : memref<512x256xbf16, #tpu.memory_space<vmem>>, vector<128x256xbf16>
    %cst_54 = arith.constant dense<0.000000e+00> : vector<25x256xf32>
    %91 = tpu.matmul %89, %90, %cst_54 {dimension_numbers = #tpu.dot_dimension_numbers<[1], [0], [0], [1], [0, 0, 1, 1], [], []>} : vector<25x128xbf16>, vector<128x256xbf16>, vector<25x256xf32> -> vector<25x256xf32>
    %92 = arith.addf %88, %91 : vector<25x256xf32>
    %cst_55 = arith.constant dense<0.000000e+00> : vector<256xf32>
    %93 = vector.multi_reduction <add>, %77, %cst_55 [0] : vector<25x256xf32> to vector<256xf32>
    %94 = vector.shape_cast %93 : vector<256xf32> to vector<1x256xf32>
    %95 = arith.mulf %77, %77 : vector<25x256xf32>
    %cst_56 = arith.constant dense<0.000000e+00> : vector<256xf32>
    %96 = vector.multi_reduction <add>, %95, %cst_56 [0] : vector<25x256xf32> to vector<256xf32>
    %97 = vector.shape_cast %96 : vector<256xf32> to vector<1x256xf32>
    %cst_57 = arith.constant dense<0.000000e+00> : vector<256xf32>
    %98 = vector.multi_reduction <add>, %92, %cst_57 [0] : vector<25x256xf32> to vector<256xf32>
    %99 = vector.shape_cast %98 : vector<256xf32> to vector<1x256xf32>
    %100 = arith.addf %94, %99 : vector<1x256xf32>
    %101 = arith.mulf %92, %92 : vector<25x256xf32>
    %cst_58 = arith.constant dense<0.000000e+00> : vector<256xf32>
    %102 = vector.multi_reduction <add>, %101, %cst_58 [0] : vector<25x256xf32> to vector<256xf32>
    %103 = vector.shape_cast %102 : vector<256xf32> to vector<1x256xf32>
    %104 = arith.addf %97, %103 : vector<1x256xf32>
    %cst_59 = arith.constant 2.000000e-02 : f32
    %105 = vector.broadcast %cst_59 : f32 to vector<1x256xf32>
    %106 = arith.mulf %100, %105 : vector<1x256xf32>
    %cst_60 = arith.constant 2.000000e-02 : f32
    %107 = vector.broadcast %cst_60 : f32 to vector<1x256xf32>
    %108 = arith.mulf %104, %107 : vector<1x256xf32>
    %109 = arith.mulf %106, %106 : vector<1x256xf32>
    %110 = arith.subf %108, %109 : vector<1x256xf32>
    %c0_61 = arith.constant 0 : index
    %c0_62 = arith.constant 0 : index
    %111 = vector.load %arg5[%c0_61, %c0_62] : memref<2x256xf32, #tpu.memory_space<vmem>>, vector<1x256xf32>
    %cst_63 = arith.constant 9.99999974E-6 : f32
    %112 = vector.broadcast %cst_63 : f32 to vector<1x256xf32>
    %113 = arith.addf %110, %112 : vector<1x256xf32>
    %114 = math.rsqrt %113 : vector<1x256xf32>
    %115 = arith.mulf %111, %114 : vector<1x256xf32>
    %c1_64 = arith.constant 1 : index
    %c0_65 = arith.constant 0 : index
    %116 = vector.load %arg5[%c1_64, %c0_65] : memref<2x256xf32, #tpu.memory_space<vmem>>, vector<1x256xf32>
    %117 = arith.mulf %106, %115 : vector<1x256xf32>
    %118 = arith.subf %116, %117 : vector<1x256xf32>
    %119 = vector.broadcast %115 : vector<1x256xf32> to vector<25x256xf32>
    %120 = arith.mulf %77, %119 : vector<25x256xf32>
    %121 = vector.broadcast %118 : vector<1x256xf32> to vector<25x256xf32>
    %122 = arith.addf %120, %121 : vector<25x256xf32>
    %123 = vector.extract_strided_slice %122 {offsets = [0, 0], sizes = [25, 128], strides = [1, 1]} : vector<25x256xf32> to vector<25x128xf32>
    %124 = vector.extract_strided_slice %122 {offsets = [0, 128], sizes = [25, 128], strides = [1, 1]} : vector<25x256xf32> to vector<25x128xf32>
    %125 = arith.addf %123, %124 : vector<25x128xf32>
    %cst_66 = arith.constant 0.000000e+00 : f32
    %126 = vector.broadcast %cst_66 : f32 to vector<25x128xf32>
    %127 = arith.maximumf %125, %126 : vector<25x128xf32>
    %128 = vector.broadcast %115 : vector<1x256xf32> to vector<25x256xf32>
    %129 = arith.mulf %92, %128 : vector<25x256xf32>
    %130 = vector.broadcast %118 : vector<1x256xf32> to vector<25x256xf32>
    %131 = arith.addf %129, %130 : vector<25x256xf32>
    %132 = vector.extract_strided_slice %131 {offsets = [0, 0], sizes = [25, 128], strides = [1, 1]} : vector<25x256xf32> to vector<25x128xf32>
    %133 = vector.extract_strided_slice %131 {offsets = [0, 128], sizes = [25, 128], strides = [1, 1]} : vector<25x256xf32> to vector<25x128xf32>
    %134 = arith.addf %132, %133 : vector<25x128xf32>
    %cst_67 = arith.constant 0.000000e+00 : f32
    %135 = vector.broadcast %cst_67 : f32 to vector<25x128xf32>
    %136 = arith.maximumf %134, %135 : vector<25x128xf32>
    %137 = tpu.concatenate %127, %136 in 1 : vector<25x128xf32>, vector<25x128xf32> -> vector<25x256xf32>
    %138 = arith.truncf %137 : vector<25x256xf32> to vector<25x256xbf16>
    %c0_68 = arith.constant 0 : index
    %c0_69 = arith.constant 0 : index
    %c0_70 = arith.constant 0 : index
    %139 = vector.load %arg6[%c0_68, %c0_69, %c0_70] : memref<4x9x25xbf16, #tpu.memory_space<vmem>>, vector<1x9x25xbf16>
    %140 = vector.shape_cast %139 : vector<1x9x25xbf16> to vector<9x25xbf16>
    %cst_71 = arith.constant dense<0.000000e+00> : vector<9x256xf32>
    %141 = tpu.matmul %140, %138, %cst_71 {dimension_numbers = #tpu.dot_dimension_numbers<[1], [0], [0], [1], [0, 0, 1, 1], [], []>} : vector<9x25xbf16>, vector<25x256xbf16>, vector<9x256xf32> -> vector<9x256xf32>
    %142 = arith.truncf %141 : vector<9x256xf32> to vector<9x256xbf16>
    %c1_72 = arith.constant 1 : index
    %c0_73 = arith.constant 0 : index
    %c0_74 = arith.constant 0 : index
    %143 = vector.load %arg6[%c1_72, %c0_73, %c0_74] : memref<4x9x25xbf16, #tpu.memory_space<vmem>>, vector<1x9x25xbf16>
    %144 = vector.shape_cast %143 : vector<1x9x25xbf16> to vector<9x25xbf16>
    %cst_75 = arith.constant dense<0.000000e+00> : vector<9x256xf32>
    %145 = tpu.matmul %144, %138, %cst_75 {dimension_numbers = #tpu.dot_dimension_numbers<[1], [0], [0], [1], [0, 0, 1, 1], [], []>} : vector<9x25xbf16>, vector<25x256xbf16>, vector<9x256xf32> -> vector<9x256xf32>
    %146 = arith.truncf %145 : vector<9x256xf32> to vector<9x256xbf16>
    %c2_76 = arith.constant 2 : index
    %c0_77 = arith.constant 0 : index
    %c0_78 = arith.constant 0 : index
    %147 = vector.load %arg6[%c2_76, %c0_77, %c0_78] : memref<4x9x25xbf16, #tpu.memory_space<vmem>>, vector<1x9x25xbf16>
    %148 = vector.shape_cast %147 : vector<1x9x25xbf16> to vector<9x25xbf16>
    %cst_79 = arith.constant dense<0.000000e+00> : vector<9x256xf32>
    %149 = tpu.matmul %148, %138, %cst_79 {dimension_numbers = #tpu.dot_dimension_numbers<[1], [0], [0], [1], [0, 0, 1, 1], [], []>} : vector<9x25xbf16>, vector<25x256xbf16>, vector<9x256xf32> -> vector<9x256xf32>
    %150 = arith.truncf %149 : vector<9x256xf32> to vector<9x256xbf16>
    %c3_80 = arith.constant 3 : index
    %c0_81 = arith.constant 0 : index
    %c0_82 = arith.constant 0 : index
    %151 = vector.load %arg6[%c3_80, %c0_81, %c0_82] : memref<4x9x25xbf16, #tpu.memory_space<vmem>>, vector<1x9x25xbf16>
    %152 = vector.shape_cast %151 : vector<1x9x25xbf16> to vector<9x25xbf16>
    %cst_83 = arith.constant dense<0.000000e+00> : vector<9x256xf32>
    %153 = tpu.matmul %152, %138, %cst_83 {dimension_numbers = #tpu.dot_dimension_numbers<[1], [0], [0], [1], [0, 0, 1, 1], [], []>} : vector<9x25xbf16>, vector<25x256xbf16>, vector<9x256xf32> -> vector<9x256xf32>
    %154 = arith.truncf %153 : vector<9x256xf32> to vector<9x256xbf16>
    %155 = vector.extract_strided_slice %142 {offsets = [0, 0], sizes = [9, 128], strides = [1, 1]} : vector<9x256xbf16> to vector<9x128xbf16>
    %c0_84 = arith.constant 0 : index
    %c0_85 = arith.constant 0 : index
    %156 = vector.load %arg7[%c0_84, %c0_85] : memref<512x256xbf16, #tpu.memory_space<vmem>>, vector<128x256xbf16>
    %cst_86 = arith.constant dense<0.000000e+00> : vector<9x256xf32>
    %157 = tpu.matmul %155, %156, %cst_86 {dimension_numbers = #tpu.dot_dimension_numbers<[1], [0], [0], [1], [0, 0, 1, 1], [], []>} : vector<9x128xbf16>, vector<128x256xbf16>, vector<9x256xf32> -> vector<9x256xf32>
    %158 = vector.extract_strided_slice %146 {offsets = [0, 0], sizes = [9, 128], strides = [1, 1]} : vector<9x256xbf16> to vector<9x128xbf16>
    %c128_87 = arith.constant 128 : index
    %c0_88 = arith.constant 0 : index
    %159 = vector.load %arg7[%c128_87, %c0_88] : memref<512x256xbf16, #tpu.memory_space<vmem>>, vector<128x256xbf16>
    %cst_89 = arith.constant dense<0.000000e+00> : vector<9x256xf32>
    %160 = tpu.matmul %158, %159, %cst_89 {dimension_numbers = #tpu.dot_dimension_numbers<[1], [0], [0], [1], [0, 0, 1, 1], [], []>} : vector<9x128xbf16>, vector<128x256xbf16>, vector<9x256xf32> -> vector<9x256xf32>
    %161 = arith.addf %157, %160 : vector<9x256xf32>
    %162 = vector.extract_strided_slice %150 {offsets = [0, 0], sizes = [9, 128], strides = [1, 1]} : vector<9x256xbf16> to vector<9x128xbf16>
    %c256_90 = arith.constant 256 : index
    %c0_91 = arith.constant 0 : index
    %163 = vector.load %arg7[%c256_90, %c0_91] : memref<512x256xbf16, #tpu.memory_space<vmem>>, vector<128x256xbf16>
    %cst_92 = arith.constant dense<0.000000e+00> : vector<9x256xf32>
    %164 = tpu.matmul %162, %163, %cst_92 {dimension_numbers = #tpu.dot_dimension_numbers<[1], [0], [0], [1], [0, 0, 1, 1], [], []>} : vector<9x128xbf16>, vector<128x256xbf16>, vector<9x256xf32> -> vector<9x256xf32>
    %165 = arith.addf %161, %164 : vector<9x256xf32>
    %166 = vector.extract_strided_slice %154 {offsets = [0, 0], sizes = [9, 128], strides = [1, 1]} : vector<9x256xbf16> to vector<9x128xbf16>
    %c384_93 = arith.constant 384 : index
    %c0_94 = arith.constant 0 : index
    %167 = vector.load %arg7[%c384_93, %c0_94] : memref<512x256xbf16, #tpu.memory_space<vmem>>, vector<128x256xbf16>
    %cst_95 = arith.constant dense<0.000000e+00> : vector<9x256xf32>
    %168 = tpu.matmul %166, %167, %cst_95 {dimension_numbers = #tpu.dot_dimension_numbers<[1], [0], [0], [1], [0, 0, 1, 1], [], []>} : vector<9x128xbf16>, vector<128x256xbf16>, vector<9x256xf32> -> vector<9x256xf32>
    %169 = arith.addf %165, %168 : vector<9x256xf32>
    %170 = vector.extract_strided_slice %142 {offsets = [0, 128], sizes = [9, 128], strides = [1, 1]} : vector<9x256xbf16> to vector<9x128xbf16>
    %c0_96 = arith.constant 0 : index
    %c0_97 = arith.constant 0 : index
    %171 = vector.load %arg7[%c0_96, %c0_97] : memref<512x256xbf16, #tpu.memory_space<vmem>>, vector<128x256xbf16>
    %cst_98 = arith.constant dense<0.000000e+00> : vector<9x256xf32>
    %172 = tpu.matmul %170, %171, %cst_98 {dimension_numbers = #tpu.dot_dimension_numbers<[1], [0], [0], [1], [0, 0, 1, 1], [], []>} : vector<9x128xbf16>, vector<128x256xbf16>, vector<9x256xf32> -> vector<9x256xf32>
    %173 = vector.extract_strided_slice %146 {offsets = [0, 128], sizes = [9, 128], strides = [1, 1]} : vector<9x256xbf16> to vector<9x128xbf16>
    %c128_99 = arith.constant 128 : index
    %c0_100 = arith.constant 0 : index
    %174 = vector.load %arg7[%c128_99, %c0_100] : memref<512x256xbf16, #tpu.memory_space<vmem>>, vector<128x256xbf16>
    %cst_101 = arith.constant dense<0.000000e+00> : vector<9x256xf32>
    %175 = tpu.matmul %173, %174, %cst_101 {dimension_numbers = #tpu.dot_dimension_numbers<[1], [0], [0], [1], [0, 0, 1, 1], [], []>} : vector<9x128xbf16>, vector<128x256xbf16>, vector<9x256xf32> -> vector<9x256xf32>
    %176 = arith.addf %172, %175 : vector<9x256xf32>
    %177 = vector.extract_strided_slice %150 {offsets = [0, 128], sizes = [9, 128], strides = [1, 1]} : vector<9x256xbf16> to vector<9x128xbf16>
    %c256_102 = arith.constant 256 : index
    %c0_103 = arith.constant 0 : index
    %178 = vector.load %arg7[%c256_102, %c0_103] : memref<512x256xbf16, #tpu.memory_space<vmem>>, vector<128x256xbf16>
    %cst_104 = arith.constant dense<0.000000e+00> : vector<9x256xf32>
    %179 = tpu.matmul %177, %178, %cst_104 {dimension_numbers = #tpu.dot_dimension_numbers<[1], [0], [0], [1], [0, 0, 1, 1], [], []>} : vector<9x128xbf16>, vector<128x256xbf16>, vector<9x256xf32> -> vector<9x256xf32>
    %180 = arith.addf %176, %179 : vector<9x256xf32>
    %181 = vector.extract_strided_slice %154 {offsets = [0, 128], sizes = [9, 128], strides = [1, 1]} : vector<9x256xbf16> to vector<9x128xbf16>
    %c384_105 = arith.constant 384 : index
    %c0_106 = arith.constant 0 : index
    %182 = vector.load %arg7[%c384_105, %c0_106] : memref<512x256xbf16, #tpu.memory_space<vmem>>, vector<128x256xbf16>
    %cst_107 = arith.constant dense<0.000000e+00> : vector<9x256xf32>
    %183 = tpu.matmul %181, %182, %cst_107 {dimension_numbers = #tpu.dot_dimension_numbers<[1], [0], [0], [1], [0, 0, 1, 1], [], []>} : vector<9x128xbf16>, vector<128x256xbf16>, vector<9x256xf32> -> vector<9x256xf32>
    %184 = arith.addf %180, %183 : vector<9x256xf32>
    %cst_108 = arith.constant dense<0.000000e+00> : vector<256xf32>
    %185 = vector.multi_reduction <add>, %169, %cst_108 [0] : vector<9x256xf32> to vector<256xf32>
    %186 = vector.shape_cast %185 : vector<256xf32> to vector<1x256xf32>
    %187 = arith.mulf %169, %169 : vector<9x256xf32>
    %cst_109 = arith.constant dense<0.000000e+00> : vector<256xf32>
    %188 = vector.multi_reduction <add>, %187, %cst_109 [0] : vector<9x256xf32> to vector<256xf32>
    %189 = vector.shape_cast %188 : vector<256xf32> to vector<1x256xf32>
    %cst_110 = arith.constant dense<0.000000e+00> : vector<256xf32>
    %190 = vector.multi_reduction <add>, %184, %cst_110 [0] : vector<9x256xf32> to vector<256xf32>
    %191 = vector.shape_cast %190 : vector<256xf32> to vector<1x256xf32>
    %192 = arith.addf %186, %191 : vector<1x256xf32>
    %193 = arith.mulf %184, %184 : vector<9x256xf32>
    %cst_111 = arith.constant dense<0.000000e+00> : vector<256xf32>
    %194 = vector.multi_reduction <add>, %193, %cst_111 [0] : vector<9x256xf32> to vector<256xf32>
    %195 = vector.shape_cast %194 : vector<256xf32> to vector<1x256xf32>
    %196 = arith.addf %189, %195 : vector<1x256xf32>
    %cst_112 = arith.constant 0.055555556 : f32
    %197 = vector.broadcast %cst_112 : f32 to vector<1x256xf32>
    %198 = arith.mulf %192, %197 : vector<1x256xf32>
    %cst_113 = arith.constant 0.055555556 : f32
    %199 = vector.broadcast %cst_113 : f32 to vector<1x256xf32>
    %200 = arith.mulf %196, %199 : vector<1x256xf32>
    %201 = arith.mulf %198, %198 : vector<1x256xf32>
    %202 = arith.subf %200, %201 : vector<1x256xf32>
    %c0_114 = arith.constant 0 : index
    %c0_115 = arith.constant 0 : index
    %203 = vector.load %arg8[%c0_114, %c0_115] : memref<2x256xf32, #tpu.memory_space<vmem>>, vector<1x256xf32>
    %cst_116 = arith.constant 9.99999974E-6 : f32
    %204 = vector.broadcast %cst_116 : f32 to vector<1x256xf32>
    %205 = arith.addf %202, %204 : vector<1x256xf32>
    %206 = math.rsqrt %205 : vector<1x256xf32>
    %207 = arith.mulf %203, %206 : vector<1x256xf32>
    %c1_117 = arith.constant 1 : index
    %c0_118 = arith.constant 0 : index
    %208 = vector.load %arg8[%c1_117, %c0_118] : memref<2x256xf32, #tpu.memory_space<vmem>>, vector<1x256xf32>
    %209 = arith.mulf %198, %207 : vector<1x256xf32>
    %210 = arith.subf %208, %209 : vector<1x256xf32>
    %211 = vector.broadcast %207 : vector<1x256xf32> to vector<9x256xf32>
    %212 = arith.mulf %169, %211 : vector<9x256xf32>
    %213 = vector.broadcast %210 : vector<1x256xf32> to vector<9x256xf32>
    %214 = arith.addf %212, %213 : vector<9x256xf32>
    %215 = vector.extract_strided_slice %214 {offsets = [0, 0], sizes = [9, 128], strides = [1, 1]} : vector<9x256xf32> to vector<9x128xf32>
    %216 = vector.extract_strided_slice %214 {offsets = [0, 128], sizes = [9, 128], strides = [1, 1]} : vector<9x256xf32> to vector<9x128xf32>
    %217 = arith.addf %215, %216 : vector<9x128xf32>
    %cst_119 = arith.constant 0.000000e+00 : f32
    %218 = vector.broadcast %cst_119 : f32 to vector<9x128xf32>
    %219 = arith.maximumf %217, %218 : vector<9x128xf32>
    %220 = vector.broadcast %207 : vector<1x256xf32> to vector<9x256xf32>
    %221 = arith.mulf %184, %220 : vector<9x256xf32>
    %222 = vector.broadcast %210 : vector<1x256xf32> to vector<9x256xf32>
    %223 = arith.addf %221, %222 : vector<9x256xf32>
    %224 = vector.extract_strided_slice %223 {offsets = [0, 0], sizes = [9, 128], strides = [1, 1]} : vector<9x256xf32> to vector<9x128xf32>
    %225 = vector.extract_strided_slice %223 {offsets = [0, 128], sizes = [9, 128], strides = [1, 1]} : vector<9x256xf32> to vector<9x128xf32>
    %226 = arith.addf %224, %225 : vector<9x128xf32>
    %cst_120 = arith.constant 0.000000e+00 : f32
    %227 = vector.broadcast %cst_120 : f32 to vector<9x128xf32>
    %228 = arith.maximumf %226, %227 : vector<9x128xf32>
    %229 = tpu.concatenate %219, %228 in 1 : vector<9x128xf32>, vector<9x128xf32> -> vector<9x256xf32>
    %230 = arith.truncf %229 : vector<9x256xf32> to vector<9x256xbf16>
    %c0_121 = arith.constant 0 : index
    %c0_122 = arith.constant 0 : index
    %c0_123 = arith.constant 0 : index
    %231 = vector.load %arg9[%c0_121, %c0_122, %c0_123] : memref<4x4x9xbf16, #tpu.memory_space<vmem>>, vector<1x4x9xbf16>
    %232 = vector.shape_cast %231 : vector<1x4x9xbf16> to vector<4x9xbf16>
    %cst_124 = arith.constant dense<0.000000e+00> : vector<4x256xf32>
    %233 = tpu.matmul %232, %230, %cst_124 {dimension_numbers = #tpu.dot_dimension_numbers<[1], [0], [0], [1], [0, 0, 1, 1], [], []>} : vector<4x9xbf16>, vector<9x256xbf16>, vector<4x256xf32> -> vector<4x256xf32>
    %234 = arith.truncf %233 : vector<4x256xf32> to vector<4x256xbf16>
    %c1_125 = arith.constant 1 : index
    %c0_126 = arith.constant 0 : index
    %c0_127 = arith.constant 0 : index
    %235 = vector.load %arg9[%c1_125, %c0_126, %c0_127] : memref<4x4x9xbf16, #tpu.memory_space<vmem>>, vector<1x4x9xbf16>
    %236 = vector.shape_cast %235 : vector<1x4x9xbf16> to vector<4x9xbf16>
    %cst_128 = arith.constant dense<0.000000e+00> : vector<4x256xf32>
    %237 = tpu.matmul %236, %230, %cst_128 {dimension_numbers = #tpu.dot_dimension_numbers<[1], [0], [0], [1], [0, 0, 1, 1], [], []>} : vector<4x9xbf16>, vector<9x256xbf16>, vector<4x256xf32> -> vector<4x256xf32>
    %238 = arith.truncf %237 : vector<4x256xf32> to vector<4x256xbf16>
    %c2_129 = arith.constant 2 : index
    %c0_130 = arith.constant 0 : index
    %c0_131 = arith.constant 0 : index
    %239 = vector.load %arg9[%c2_129, %c0_130, %c0_131] : memref<4x4x9xbf16, #tpu.memory_space<vmem>>, vector<1x4x9xbf16>
    %240 = vector.shape_cast %239 : vector<1x4x9xbf16> to vector<4x9xbf16>
    %cst_132 = arith.constant dense<0.000000e+00> : vector<4x256xf32>
    %241 = tpu.matmul %240, %230, %cst_132 {dimension_numbers = #tpu.dot_dimension_numbers<[1], [0], [0], [1], [0, 0, 1, 1], [], []>} : vector<4x9xbf16>, vector<9x256xbf16>, vector<4x256xf32> -> vector<4x256xf32>
    %242 = arith.truncf %241 : vector<4x256xf32> to vector<4x256xbf16>
    %c3_133 = arith.constant 3 : index
    %c0_134 = arith.constant 0 : index
    %c0_135 = arith.constant 0 : index
    %243 = vector.load %arg9[%c3_133, %c0_134, %c0_135] : memref<4x4x9xbf16, #tpu.memory_space<vmem>>, vector<1x4x9xbf16>
    %244 = vector.shape_cast %243 : vector<1x4x9xbf16> to vector<4x9xbf16>
    %cst_136 = arith.constant dense<0.000000e+00> : vector<4x256xf32>
    %245 = tpu.matmul %244, %230, %cst_136 {dimension_numbers = #tpu.dot_dimension_numbers<[1], [0], [0], [1], [0, 0, 1, 1], [], []>} : vector<4x9xbf16>, vector<9x256xbf16>, vector<4x256xf32> -> vector<4x256xf32>
    %246 = arith.truncf %245 : vector<4x256xf32> to vector<4x256xbf16>
    %247 = vector.extract_strided_slice %234 {offsets = [0, 0], sizes = [4, 128], strides = [1, 1]} : vector<4x256xbf16> to vector<4x128xbf16>
    %c0_137 = arith.constant 0 : index
    %c0_138 = arith.constant 0 : index
    %248 = vector.load %arg10[%c0_137, %c0_138] : memref<512x256xbf16, #tpu.memory_space<vmem>>, vector<128x256xbf16>
    %cst_139 = arith.constant dense<0.000000e+00> : vector<4x256xf32>
    %249 = tpu.matmul %247, %248, %cst_139 {dimension_numbers = #tpu.dot_dimension_numbers<[1], [0], [0], [1], [0, 0, 1, 1], [], []>} : vector<4x128xbf16>, vector<128x256xbf16>, vector<4x256xf32> -> vector<4x256xf32>
    %250 = vector.extract_strided_slice %238 {offsets = [0, 0], sizes = [4, 128], strides = [1, 1]} : vector<4x256xbf16> to vector<4x128xbf16>
    %c128_140 = arith.constant 128 : index
    %c0_141 = arith.constant 0 : index
    %251 = vector.load %arg10[%c128_140, %c0_141] : memref<512x256xbf16, #tpu.memory_space<vmem>>, vector<128x256xbf16>
    %cst_142 = arith.constant dense<0.000000e+00> : vector<4x256xf32>
    %252 = tpu.matmul %250, %251, %cst_142 {dimension_numbers = #tpu.dot_dimension_numbers<[1], [0], [0], [1], [0, 0, 1, 1], [], []>} : vector<4x128xbf16>, vector<128x256xbf16>, vector<4x256xf32> -> vector<4x256xf32>
    %253 = arith.addf %249, %252 : vector<4x256xf32>
    %254 = vector.extract_strided_slice %242 {offsets = [0, 0], sizes = [4, 128], strides = [1, 1]} : vector<4x256xbf16> to vector<4x128xbf16>
    %c256_143 = arith.constant 256 : index
    %c0_144 = arith.constant 0 : index
    %255 = vector.load %arg10[%c256_143, %c0_144] : memref<512x256xbf16, #tpu.memory_space<vmem>>, vector<128x256xbf16>
    %cst_145 = arith.constant dense<0.000000e+00> : vector<4x256xf32>
    %256 = tpu.matmul %254, %255, %cst_145 {dimension_numbers = #tpu.dot_dimension_numbers<[1], [0], [0], [1], [0, 0, 1, 1], [], []>} : vector<4x128xbf16>, vector<128x256xbf16>, vector<4x256xf32> -> vector<4x256xf32>
    %257 = arith.addf %253, %256 : vector<4x256xf32>
    %258 = vector.extract_strided_slice %246 {offsets = [0, 0], sizes = [4, 128], strides = [1, 1]} : vector<4x256xbf16> to vector<4x128xbf16>
    %c384_146 = arith.constant 384 : index
    %c0_147 = arith.constant 0 : index
    %259 = vector.load %arg10[%c384_146, %c0_147] : memref<512x256xbf16, #tpu.memory_space<vmem>>, vector<128x256xbf16>
    %cst_148 = arith.constant dense<0.000000e+00> : vector<4x256xf32>
    %260 = tpu.matmul %258, %259, %cst_148 {dimension_numbers = #tpu.dot_dimension_numbers<[1], [0], [0], [1], [0, 0, 1, 1], [], []>} : vector<4x128xbf16>, vector<128x256xbf16>, vector<4x256xf32> -> vector<4x256xf32>
    %261 = arith.addf %257, %260 : vector<4x256xf32>
    %262 = vector.extract_strided_slice %234 {offsets = [0, 128], sizes = [4, 128], strides = [1, 1]} : vector<4x256xbf16> to vector<4x128xbf16>
    %c0_149 = arith.constant 0 : index
    %c0_150 = arith.constant 0 : index
    %263 = vector.load %arg10[%c0_149, %c0_150] : memref<512x256xbf16, #tpu.memory_space<vmem>>, vector<128x256xbf16>
    %cst_151 = arith.constant dense<0.000000e+00> : vector<4x256xf32>
    %264 = tpu.matmul %262, %263, %cst_151 {dimension_numbers = #tpu.dot_dimension_numbers<[1], [0], [0], [1], [0, 0, 1, 1], [], []>} : vector<4x128xbf16>, vector<128x256xbf16>, vector<4x256xf32> -> vector<4x256xf32>
    %265 = vector.extract_strided_slice %238 {offsets = [0, 128], sizes = [4, 128], strides = [1, 1]} : vector<4x256xbf16> to vector<4x128xbf16>
    %c128_152 = arith.constant 128 : index
    %c0_153 = arith.constant 0 : index
    %266 = vector.load %arg10[%c128_152, %c0_153] : memref<512x256xbf16, #tpu.memory_space<vmem>>, vector<128x256xbf16>
    %cst_154 = arith.constant dense<0.000000e+00> : vector<4x256xf32>
    %267 = tpu.matmul %265, %266, %cst_154 {dimension_numbers = #tpu.dot_dimension_numbers<[1], [0], [0], [1], [0, 0, 1, 1], [], []>} : vector<4x128xbf16>, vector<128x256xbf16>, vector<4x256xf32> -> vector<4x256xf32>
    %268 = arith.addf %264, %267 : vector<4x256xf32>
    %269 = vector.extract_strided_slice %242 {offsets = [0, 128], sizes = [4, 128], strides = [1, 1]} : vector<4x256xbf16> to vector<4x128xbf16>
    %c256_155 = arith.constant 256 : index
    %c0_156 = arith.constant 0 : index
    %270 = vector.load %arg10[%c256_155, %c0_156] : memref<512x256xbf16, #tpu.memory_space<vmem>>, vector<128x256xbf16>
    %cst_157 = arith.constant dense<0.000000e+00> : vector<4x256xf32>
    %271 = tpu.matmul %269, %270, %cst_157 {dimension_numbers = #tpu.dot_dimension_numbers<[1], [0], [0], [1], [0, 0, 1, 1], [], []>} : vector<4x128xbf16>, vector<128x256xbf16>, vector<4x256xf32> -> vector<4x256xf32>
    %272 = arith.addf %268, %271 : vector<4x256xf32>
    %273 = vector.extract_strided_slice %246 {offsets = [0, 128], sizes = [4, 128], strides = [1, 1]} : vector<4x256xbf16> to vector<4x128xbf16>
    %c384_158 = arith.constant 384 : index
    %c0_159 = arith.constant 0 : index
    %274 = vector.load %arg10[%c384_158, %c0_159] : memref<512x256xbf16, #tpu.memory_space<vmem>>, vector<128x256xbf16>
    %cst_160 = arith.constant dense<0.000000e+00> : vector<4x256xf32>
    %275 = tpu.matmul %273, %274, %cst_160 {dimension_numbers = #tpu.dot_dimension_numbers<[1], [0], [0], [1], [0, 0, 1, 1], [], []>} : vector<4x128xbf16>, vector<128x256xbf16>, vector<4x256xf32> -> vector<4x256xf32>
    %276 = arith.addf %272, %275 : vector<4x256xf32>
    %cst_161 = arith.constant dense<0.000000e+00> : vector<256xf32>
    %277 = vector.multi_reduction <add>, %261, %cst_161 [0] : vector<4x256xf32> to vector<256xf32>
    %278 = vector.shape_cast %277 : vector<256xf32> to vector<1x256xf32>
    %279 = arith.mulf %261, %261 : vector<4x256xf32>
    %cst_162 = arith.constant dense<0.000000e+00> : vector<256xf32>
    %280 = vector.multi_reduction <add>, %279, %cst_162 [0] : vector<4x256xf32> to vector<256xf32>
    %281 = vector.shape_cast %280 : vector<256xf32> to vector<1x256xf32>
    %cst_163 = arith.constant dense<0.000000e+00> : vector<256xf32>
    %282 = vector.multi_reduction <add>, %276, %cst_163 [0] : vector<4x256xf32> to vector<256xf32>
    %283 = vector.shape_cast %282 : vector<256xf32> to vector<1x256xf32>
    %284 = arith.addf %278, %283 : vector<1x256xf32>
    %285 = arith.mulf %276, %276 : vector<4x256xf32>
    %cst_164 = arith.constant dense<0.000000e+00> : vector<256xf32>
    %286 = vector.multi_reduction <add>, %285, %cst_164 [0] : vector<4x256xf32> to vector<256xf32>
    %287 = vector.shape_cast %286 : vector<256xf32> to vector<1x256xf32>
    %288 = arith.addf %281, %287 : vector<1x256xf32>
    %cst_165 = arith.constant 1.250000e-01 : f32
    %289 = vector.broadcast %cst_165 : f32 to vector<1x256xf32>
    %290 = arith.mulf %284, %289 : vector<1x256xf32>
    %cst_166 = arith.constant 1.250000e-01 : f32
    %291 = vector.broadcast %cst_166 : f32 to vector<1x256xf32>
    %292 = arith.mulf %288, %291 : vector<1x256xf32>
    %293 = arith.mulf %290, %290 : vector<1x256xf32>
    %294 = arith.subf %292, %293 : vector<1x256xf32>
    %c0_167 = arith.constant 0 : index
    %c0_168 = arith.constant 0 : index
    %295 = vector.load %arg11[%c0_167, %c0_168] : memref<2x256xf32, #tpu.memory_space<vmem>>, vector<1x256xf32>
    %cst_169 = arith.constant 9.99999974E-6 : f32
    %296 = vector.broadcast %cst_169 : f32 to vector<1x256xf32>
    %297 = arith.addf %294, %296 : vector<1x256xf32>
    %298 = math.rsqrt %297 : vector<1x256xf32>
    %299 = arith.mulf %295, %298 : vector<1x256xf32>
    %c1_170 = arith.constant 1 : index
    %c0_171 = arith.constant 0 : index
    %300 = vector.load %arg11[%c1_170, %c0_171] : memref<2x256xf32, #tpu.memory_space<vmem>>, vector<1x256xf32>
    %301 = arith.mulf %290, %299 : vector<1x256xf32>
    %302 = arith.subf %300, %301 : vector<1x256xf32>
    %303 = vector.broadcast %299 : vector<1x256xf32> to vector<4x256xf32>
    %304 = arith.mulf %261, %303 : vector<4x256xf32>
    %305 = vector.broadcast %302 : vector<1x256xf32> to vector<4x256xf32>
    %306 = arith.addf %304, %305 : vector<4x256xf32>
    %307 = vector.extract_strided_slice %306 {offsets = [0, 0], sizes = [4, 128], strides = [1, 1]} : vector<4x256xf32> to vector<4x128xf32>
    %308 = vector.extract_strided_slice %306 {offsets = [0, 128], sizes = [4, 128], strides = [1, 1]} : vector<4x256xf32> to vector<4x128xf32>
    %309 = arith.addf %307, %308 : vector<4x128xf32>
    %cst_172 = arith.constant 0.000000e+00 : f32
    %310 = vector.broadcast %cst_172 : f32 to vector<4x128xf32>
    %311 = arith.maximumf %309, %310 : vector<4x128xf32>
    %312 = vector.broadcast %299 : vector<1x256xf32> to vector<4x256xf32>
    %313 = arith.mulf %276, %312 : vector<4x256xf32>
    %314 = vector.broadcast %302 : vector<1x256xf32> to vector<4x256xf32>
    %315 = arith.addf %313, %314 : vector<4x256xf32>
    %316 = vector.extract_strided_slice %315 {offsets = [0, 0], sizes = [4, 128], strides = [1, 1]} : vector<4x256xf32> to vector<4x128xf32>
    %317 = vector.extract_strided_slice %315 {offsets = [0, 128], sizes = [4, 128], strides = [1, 1]} : vector<4x256xf32> to vector<4x128xf32>
    %318 = arith.addf %316, %317 : vector<4x128xf32>
    %cst_173 = arith.constant 0.000000e+00 : f32
    %319 = vector.broadcast %cst_173 : f32 to vector<4x128xf32>
    %320 = arith.maximumf %318, %319 : vector<4x128xf32>
    %c0_174 = arith.constant 0 : index
    %c0_175 = arith.constant 0 : index
    %321 = vector.load %arg12[%c0_174, %c0_175] : memref<128x512xbf16, #tpu.memory_space<vmem>>, vector<128x512xbf16>
    %322 = tpu.iota {dimensions = array<i32: 0>} : vector<4x1xi32>
    %323 = tpu.iota {dimensions = array<i32: 0>} : vector<8x1xi32>
    %cst_176 = arith.constant 0.000000e+00 : f32
    %324 = vector.broadcast %cst_176 : f32 to vector<8x128xf32>
    %325 = arith.truncf %311 : vector<4x128xf32> to vector<4x128xbf16>
    %cst_177 = arith.constant dense<0.000000e+00> : vector<4x512xf32>
    %326 = tpu.matmul %325, %321, %cst_177 {dimension_numbers = #tpu.dot_dimension_numbers<[1], [0], [0], [1], [0, 0, 1, 1], [], []>} : vector<4x128xbf16>, vector<128x512xbf16>, vector<4x512xf32> -> vector<4x512xf32>
    %cst_178 = arith.constant 0.000000e+00 : f32
    %327 = vector.broadcast %cst_178 : f32 to vector<4x128xf32>
    %328 = vector.extract_strided_slice %326 {offsets = [0, 0], sizes = [4, 128], strides = [1, 1]} : vector<4x512xf32> to vector<4x128xf32>
    %c0_i32 = arith.constant 0 : i32
    %329 = vector.broadcast %c0_i32 : i32 to vector<4x1xi32>
    %330 = arith.cmpi eq, %322, %329 : vector<4x1xi32>
    %cst_179 = arith.constant 0.000000e+00 : f32
    %331 = vector.shape_cast %330 : vector<4x1xi1> to vector<4x1xi1>
    %332 = vector.broadcast %331 : vector<4x1xi1> to vector<4x128xi1>
    %333 = vector.broadcast %cst_179 : f32 to vector<4x128xf32>
    %334 = arith.select %332, %328, %333 : vector<4x128xi1>, vector<4x128xf32>
    %335 = arith.addf %327, %334 : vector<4x128xf32>
    %336 = vector.extract_strided_slice %326 {offsets = [0, 128], sizes = [4, 128], strides = [1, 1]} : vector<4x512xf32> to vector<4x128xf32>
    %c1_i32 = arith.constant 1 : i32
    %337 = vector.broadcast %c1_i32 : i32 to vector<4x1xi32>
    %338 = arith.cmpi eq, %322, %337 : vector<4x1xi32>
    %cst_180 = arith.constant 0.000000e+00 : f32
    %339 = vector.shape_cast %338 : vector<4x1xi1> to vector<4x1xi1>
    %340 = vector.broadcast %339 : vector<4x1xi1> to vector<4x128xi1>
    %341 = vector.broadcast %cst_180 : f32 to vector<4x128xf32>
    %342 = arith.select %340, %336, %341 : vector<4x128xi1>, vector<4x128xf32>
    %343 = arith.addf %335, %342 : vector<4x128xf32>
    %344 = vector.extract_strided_slice %326 {offsets = [0, 256], sizes = [4, 128], strides = [1, 1]} : vector<4x512xf32> to vector<4x128xf32>
    %c2_i32 = arith.constant 2 : i32
    %345 = vector.broadcast %c2_i32 : i32 to vector<4x1xi32>
    %346 = arith.cmpi eq, %322, %345 : vector<4x1xi32>
    %cst_181 = arith.constant 0.000000e+00 : f32
    %347 = vector.shape_cast %346 : vector<4x1xi1> to vector<4x1xi1>
    %348 = vector.broadcast %347 : vector<4x1xi1> to vector<4x128xi1>
    %349 = vector.broadcast %cst_181 : f32 to vector<4x128xf32>
    %350 = arith.select %348, %344, %349 : vector<4x128xi1>, vector<4x128xf32>
    %351 = arith.addf %343, %350 : vector<4x128xf32>
    %352 = vector.extract_strided_slice %326 {offsets = [0, 384], sizes = [4, 128], strides = [1, 1]} : vector<4x512xf32> to vector<4x128xf32>
    %c3_i32 = arith.constant 3 : i32
    %353 = vector.broadcast %c3_i32 : i32 to vector<4x1xi32>
    %354 = arith.cmpi eq, %322, %353 : vector<4x1xi32>
    %cst_182 = arith.constant 0.000000e+00 : f32
    %355 = vector.shape_cast %354 : vector<4x1xi1> to vector<4x1xi1>
    %356 = vector.broadcast %355 : vector<4x1xi1> to vector<4x128xi1>
    %357 = vector.broadcast %cst_182 : f32 to vector<4x128xf32>
    %358 = arith.select %356, %352, %357 : vector<4x128xi1>, vector<4x128xf32>
    %359 = arith.addf %351, %358 : vector<4x128xf32>
    %cst_183 = arith.constant dense<0.000000e+00> : vector<128xf32>
    %360 = vector.multi_reduction <add>, %359, %cst_183 [0] : vector<4x128xf32> to vector<128xf32>
    %361 = vector.shape_cast %360 : vector<128xf32> to vector<1x128xf32>
    %c0_i32_184 = arith.constant 0 : i32
    %362 = vector.broadcast %c0_i32_184 : i32 to vector<8x1xi32>
    %363 = arith.cmpi eq, %323, %362 : vector<8x1xi32>
    %cst_185 = arith.constant 0.000000e+00 : f32
    %364 = vector.shape_cast %363 : vector<8x1xi1> to vector<8x1xi1>
    %365 = vector.broadcast %364 : vector<8x1xi1> to vector<8x128xi1>
    %366 = vector.shape_cast %361 : vector<1x128xf32> to vector<1x128xf32>
    %367 = vector.broadcast %366 : vector<1x128xf32> to vector<8x128xf32>
    %368 = vector.broadcast %cst_185 : f32 to vector<8x128xf32>
    %369 = arith.select %365, %367, %368 : vector<8x128xi1>, vector<8x128xf32>
    %370 = arith.addf %324, %369 : vector<8x128xf32>
    %371 = arith.truncf %320 : vector<4x128xf32> to vector<4x128xbf16>
    %cst_186 = arith.constant dense<0.000000e+00> : vector<4x512xf32>
    %372 = tpu.matmul %371, %321, %cst_186 {dimension_numbers = #tpu.dot_dimension_numbers<[1], [0], [0], [1], [0, 0, 1, 1], [], []>} : vector<4x128xbf16>, vector<128x512xbf16>, vector<4x512xf32> -> vector<4x512xf32>
    %cst_187 = arith.constant 0.000000e+00 : f32
    %373 = vector.broadcast %cst_187 : f32 to vector<4x128xf32>
    %374 = vector.extract_strided_slice %372 {offsets = [0, 0], sizes = [4, 128], strides = [1, 1]} : vector<4x512xf32> to vector<4x128xf32>
    %c0_i32_188 = arith.constant 0 : i32
    %375 = vector.broadcast %c0_i32_188 : i32 to vector<4x1xi32>
    %376 = arith.cmpi eq, %322, %375 : vector<4x1xi32>
    %cst_189 = arith.constant 0.000000e+00 : f32
    %377 = vector.shape_cast %376 : vector<4x1xi1> to vector<4x1xi1>
    %378 = vector.broadcast %377 : vector<4x1xi1> to vector<4x128xi1>
    %379 = vector.broadcast %cst_189 : f32 to vector<4x128xf32>
    %380 = arith.select %378, %374, %379 : vector<4x128xi1>, vector<4x128xf32>
    %381 = arith.addf %373, %380 : vector<4x128xf32>
    %382 = vector.extract_strided_slice %372 {offsets = [0, 128], sizes = [4, 128], strides = [1, 1]} : vector<4x512xf32> to vector<4x128xf32>
    %c1_i32_190 = arith.constant 1 : i32
    %383 = vector.broadcast %c1_i32_190 : i32 to vector<4x1xi32>
    %384 = arith.cmpi eq, %322, %383 : vector<4x1xi32>
    %cst_191 = arith.constant 0.000000e+00 : f32
    %385 = vector.shape_cast %384 : vector<4x1xi1> to vector<4x1xi1>
    %386 = vector.broadcast %385 : vector<4x1xi1> to vector<4x128xi1>
    %387 = vector.broadcast %cst_191 : f32 to vector<4x128xf32>
    %388 = arith.select %386, %382, %387 : vector<4x128xi1>, vector<4x128xf32>
    %389 = arith.addf %381, %388 : vector<4x128xf32>
    %390 = vector.extract_strided_slice %372 {offsets = [0, 256], sizes = [4, 128], strides = [1, 1]} : vector<4x512xf32> to vector<4x128xf32>
    %c2_i32_192 = arith.constant 2 : i32
    %391 = vector.broadcast %c2_i32_192 : i32 to vector<4x1xi32>
    %392 = arith.cmpi eq, %322, %391 : vector<4x1xi32>
    %cst_193 = arith.constant 0.000000e+00 : f32
    %393 = vector.shape_cast %392 : vector<4x1xi1> to vector<4x1xi1>
    %394 = vector.broadcast %393 : vector<4x1xi1> to vector<4x128xi1>
    %395 = vector.broadcast %cst_193 : f32 to vector<4x128xf32>
    %396 = arith.select %394, %390, %395 : vector<4x128xi1>, vector<4x128xf32>
    %397 = arith.addf %389, %396 : vector<4x128xf32>
    %398 = vector.extract_strided_slice %372 {offsets = [0, 384], sizes = [4, 128], strides = [1, 1]} : vector<4x512xf32> to vector<4x128xf32>
    %c3_i32_194 = arith.constant 3 : i32
    %399 = vector.broadcast %c3_i32_194 : i32 to vector<4x1xi32>
    %400 = arith.cmpi eq, %322, %399 : vector<4x1xi32>
    %cst_195 = arith.constant 0.000000e+00 : f32
    %401 = vector.shape_cast %400 : vector<4x1xi1> to vector<4x1xi1>
    %402 = vector.broadcast %401 : vector<4x1xi1> to vector<4x128xi1>
    %403 = vector.broadcast %cst_195 : f32 to vector<4x128xf32>
    %404 = arith.select %402, %398, %403 : vector<4x128xi1>, vector<4x128xf32>
    %405 = arith.addf %397, %404 : vector<4x128xf32>
    %cst_196 = arith.constant dense<0.000000e+00> : vector<128xf32>
    %406 = vector.multi_reduction <add>, %405, %cst_196 [0] : vector<4x128xf32> to vector<128xf32>
    %407 = vector.shape_cast %406 : vector<128xf32> to vector<1x128xf32>
    %c1_i32_197 = arith.constant 1 : i32
    %408 = vector.broadcast %c1_i32_197 : i32 to vector<8x1xi32>
    %409 = arith.cmpi eq, %323, %408 : vector<8x1xi32>
    %cst_198 = arith.constant 0.000000e+00 : f32
    %410 = vector.shape_cast %409 : vector<8x1xi1> to vector<8x1xi1>
    %411 = vector.broadcast %410 : vector<8x1xi1> to vector<8x128xi1>
    %412 = vector.shape_cast %407 : vector<1x128xf32> to vector<1x128xf32>
    %413 = vector.broadcast %412 : vector<1x128xf32> to vector<8x128xf32>
    %414 = vector.broadcast %cst_198 : f32 to vector<8x128xf32>
    %415 = arith.select %411, %413, %414 : vector<8x128xi1>, vector<8x128xf32>
    %416 = arith.addf %370, %415 : vector<8x128xf32>
    %c0_199 = arith.constant 0 : index
    %c0_200 = arith.constant 0 : index
    %417 = vector.load %arg13[%c0_199, %c0_200] : memref<1x128xf32, #tpu.memory_space<vmem>>, vector<1x128xf32>
    %418 = vector.broadcast %417 : vector<1x128xf32> to vector<8x128xf32>
    %419 = arith.addf %416, %418 : vector<8x128xf32>
    %c0_201 = arith.constant 0 : index
    %c0_202 = arith.constant 0 : index
    %420 = vector.load %arg14[%c0_201, %c0_202] : memref<8x128xf32, #tpu.memory_space<vmem>>, vector<8x128xf32>
    tpu.vector_store %arg14[%c0_201, %c0_202], %419 {strides = array<i32>} : memref<8x128xf32, #tpu.memory_space<vmem>>, vector<8x128xf32>,
    return
  }
}

</mosaic_0001>

<llo_original>
// kernel: resnet_forward.1
$region0: #{resnet_forward.1}
  #allocation0 [shape = 'u32[]', space=smem, size = 0x4, offset = 0x4, fixed_abs, tag = 'smem constant byte address 0x4 - core index']
  #allocation1 [shape = 'u32[144,128]{1,0:T(1,128)}', space=vmem, size = 0x12000, scoped, tag = 'internal scratch']
  %s0 = inlined_call_operand.vmem [shape: bf16[2,81,128], index: 0, kind: input, shape index: {}]
  %s1 = inlined_call_operand.vmem [shape: bf16[128,128], index: 1, kind: input, shape index: {}]
  %s2 = inlined_call_operand.vmem [shape: f32[2,128], index: 2, kind: input, shape index: {}]
  %s3 = inlined_call_operand.vmem [shape: bf16[4,25,81], index: 3, kind: input, shape index: {}]
  %s4 = inlined_call_operand.vmem [shape: bf16[512,256], index: 4, kind: input, shape index: {}]
  %s5 = inlined_call_operand.vmem [shape: f32[2,256], index: 5, kind: input, shape index: {}]
  %s6 = inlined_call_operand.vmem [shape: bf16[4,9,25], index: 6, kind: input, shape index: {}]
  %s7 = inlined_call_operand.vmem [shape: bf16[512,256], index: 7, kind: input, shape index: {}]
  %s8 = inlined_call_operand.vmem [shape: f32[2,256], index: 8, kind: input, shape index: {}]
  %s9 = inlined_call_operand.vmem [shape: bf16[4,4,9], index: 9, kind: input, shape index: {}]
  %s10 = inlined_call_operand.hbm [shape: bf16[512,256], index: 10, kind: input, shape index: {}]
  %s11 = inlined_call_operand.vmem [shape: f32[2,256], index: 11, kind: input, shape index: {}]
  %s12 = inlined_call_operand.hbm [shape: bf16[128,512], index: 12, kind: input, shape index: {}]
  %s13 = inlined_call_operand.vmem [shape: f32[1,128], index: 13, kind: input, shape index: {}]
  %s14 = inlined_call_operand.vmem [shape: f32[8,128], index: 14, kind: output, shape index: {}]
  %s15 = sld [smem:[#allocation0]]
  $region74: #{resnet_forward.1} parent=0
    _
  %s17 = ssub.s32 1, %s15
  %s18 = scalar_select 0, %s17, %s15
  $region1: #{resnet_forward.1} parent=0
    #allocation2 [shape = 'u8[262144]{0}', space=vmem, size = 0x40000, scoped, tag = 'input window, operand 10, single buffered']
    #allocation3 [shape = 's32[1]{0}', space=sflag, size = 0x4, scoped, tag = 'scoped memory for resnet_forward.1']
    #allocation4 [shape = 'u8[131072]{0}', space=vmem, size = 0x20000, scoped, tag = 'input window, operand 12, single buffered']
    #allocation5 [shape = 's32[1]{0}', space=sflag, size = 0x4, scoped, tag = 'scoped memory for resnet_forward.1']
    %19 = vsyncpa [#allocation3], 0
    %20 = vsyncpa [#allocation5], 0
    // Predicated region
    $region2: #{resnet_forward.1} parent=1 // pred_check
      _
    $region3: #{resnet_forward.1} parent=1 // pred_check_branch
      %22 = sbr.rel (0) target = $region5
    $region4: #{resnet_forward.1} parent=1 // pred_region
      _
    $region5: #{resnet_forward.1} parent=1 // pred_fallthru
      _
    // Predicated region
    $region6: #{resnet_forward.1} parent=1 // pred_check
      _
    $region7: #{resnet_forward.1} parent=1 // pred_check_branch
      %24 = sbr.rel (0) target = $region9
    $region8: #{resnet_forward.1} parent=1 // pred_region
      _
    $region9: #{resnet_forward.1} parent=1 // pred_fallthru
      _
    // Predicated region
    $region10: #{resnet_forward.1} parent=1 // pred_check
      _
    $region11: #{resnet_forward.1} parent=1 // pred_check_branch
      %26 = sbr.rel (0) target = $region13
    $region12: #{resnet_forward.1} parent=1 // pred_region
      _
    $region13: #{resnet_forward.1} parent=1 // pred_fallthru
      _
    // Predicated region
    $region14: #{resnet_forward.1} parent=1 // pred_check
      _
    $region15: #{resnet_forward.1} parent=1 // pred_check_branch
      %28 = sbr.rel (0) target = $region17
    $region16: #{resnet_forward.1} parent=1 // pred_region
      _
    $region17: #{resnet_forward.1} parent=1 // pred_fallthru
      _
    // Predicated region
    $region18: #{resnet_forward.1} parent=1 // pred_check
      _
    $region19: #{resnet_forward.1} parent=1 // pred_check_branch
      %30 = sbr.rel (0) target = $region21
    $region20: #{resnet_forward.1} parent=1 // pred_region
      _
    $region21: #{resnet_forward.1} parent=1 // pred_fallthru
      _
    // Predicated region
    $region22: #{resnet_forward.1} parent=1 // pred_check
      _
    $region23: #{resnet_forward.1} parent=1 // pred_check_branch
      %32 = sbr.rel (0) target = $region25
    $region24: #{resnet_forward.1} parent=1 // pred_region
      _
    $region25: #{resnet_forward.1} parent=1 // pred_fallthru
      _
    // Predicated region
    $region26: #{resnet_forward.1} parent=1 // pred_check
      _
    $region27: #{resnet_forward.1} parent=1 // pred_check_branch
      %34 = sbr.rel (0) target = $region29
    $region28: #{resnet_forward.1} parent=1 // pred_region
      _
    $region29: #{resnet_forward.1} parent=1 // pred_fallthru
      _
    // Predicated region
    $region30: #{resnet_forward.1} parent=1 // pred_check
      _
    $region31: #{resnet_forward.1} parent=1 // pred_check_branch
      %36 = sbr.rel (0) target = $region33
    $region32: #{resnet_forward.1} parent=1 // pred_region
      _
    $region33: #{resnet_forward.1} parent=1 // pred_fallthru
      _
    // Predicated region
    $region34: #{resnet_forward.1} parent=1 // pred_check
      _
    $region35: #{resnet_forward.1} parent=1 // pred_check_branch
      %38 = sbr.rel (0) target = $region37
    $region36: #{resnet_forward.1} parent=1 // pred_region
      _
    $region37: #{resnet_forward.1} parent=1 // pred_fallthru
      _
    // Predicated region
    $region38: #{resnet_forward.1} parent=1 // pred_check
      _
    $region39: #{resnet_forward.1} parent=1 // pred_check_branch
      %40 = sbr.rel (0) target = $region41
    $region40: #{resnet_forward.1} parent=1 // pred_region
      _
    $region41: #{resnet_forward.1} parent=1 // pred_fallthru
      _
    // Predicated region
    $region42: #{resnet_forward.1} parent=1 // pred_check
      _
    $region43: #{resnet_forward.1} parent=1 // pred_check_branch
      %42 = sbr.rel (0) target = $region45
    $region44: #{resnet_forward.1} parent=1 // pred_region
      %s44 = ssub.s32 8192, 8192
      %45 = vsyncadd [#allocation3], %s44
      %s46 = sshll.u32 [#allocation2], 4
      %s47 = int_to_ptr.vmem [resolvable:$true] %s46
      %52 = dma.hbm_to_vmem [thread:$0]  %s10, 8192, %s47, [#allocation3], 128, 128, 8
    $region45: #{resnet_forward.1} parent=1 // pred_fallthru
      _
    // Predicated region
    $region46: #{resnet_forward.1} parent=1 // pred_check
      _
    $region47: #{resnet_forward.1} parent=1 // pred_check_branch
      %54 = sbr.rel (0) target = $region49
    $region48: #{resnet_forward.1} parent=1 // pred_region
      _
    $region49: #{resnet_forward.1} parent=1 // pred_fallthru
      _
    // Predicated region
    $region50: #{resnet_forward.1} parent=1 // pred_check
      _
    $region51: #{resnet_forward.1} parent=1 // pred_check_branch
      %56 = sbr.rel (0) target = $region53
    $region52: #{resnet_forward.1} parent=1 // pred_region
      %s58 = ssub.s32 4096, 4096
      %59 = vsyncadd [#allocation5], %s58
      %s60 = sshll.u32 [#allocation4], 4
      %s61 = int_to_ptr.vmem [resolvable:$true] %s60
      %66 = dma.hbm_to_vmem [thread:$0]  %s12, 4096, %s61, [#allocation5], 256, 256, 16
    $region53: #{resnet_forward.1} parent=1 // pred_fallthru
      _
    // Predicated region
    $region54: #{resnet_forward.1} parent=1 // pred_check
      _
    $region55: #{resnet_forward.1} parent=1 // pred_check_branch
      %68 = sbr.rel (0) target = $region57
    $region56: #{resnet_forward.1} parent=1 // pred_region
      _
    $region57: #{resnet_forward.1} parent=1 // pred_fallthru
      _
    // Predicated region
    $region58: #{resnet_forward.1} parent=1 // pred_check
      _
    $region59: #{resnet_forward.1} parent=1 // pred_check_branch
      %70 = sbr.rel (0) target = $region61
    $region60: #{resnet_forward.1} parent=1 // pred_region
      %71 = dma.done [#allocation3], 8192
    $region61: #{resnet_forward.1} parent=1 // pred_fallthru
      _
    // Predicated region
    $region62: #{resnet_forward.1} parent=1 // pred_check
      _
    $region63: #{resnet_forward.1} parent=1 // pred_check_branch
      %73 = sbr.rel (0) target = $region65
    $region64: #{resnet_forward.1} parent=1 // pred_region
      %74 = dma.done [#allocation5], 4096
    $region65: #{resnet_forward.1} parent=1 // pred_fallthru
      _
    %v76 = vld [vmem:[%s1] sm:$0xf]
    %v77 = vld [vmem:[%s1 + $0x4] sm:$0xf]
    %v78 = vld [vmem:[%s1 + $0x8] sm:$0xf]
    %v79 = vld [vmem:[%s1 + $0xc] sm:$0xf]
    %v80 = vld [vmem:[%s1 + $0x10] sm:$0xf]
    %v81 = vld [vmem:[%s1 + $0x14] sm:$0xf]
    %v82 = vld [vmem:[%s1 + $0x18] sm:$0xf]
    %v83 = vld [vmem:[%s1 + $0x1c] sm:$0xf]
    %v84 = vld [vmem:[%s1 + $0x20] sm:$0xf]
    %v85 = vld [vmem:[%s1 + $0x24] sm:$0xf]
    %v86 = vld [vmem:[%s1 + $0x28] sm:$0xf]
    %v87 = vld [vmem:[%s1 + $0x2c] sm:$0xf]
    %v88 = vld [vmem:[%s1 + $0x30] sm:$0xf]
    %v89 = vld [vmem:[%s1 + $0x34] sm:$0xf]
    %v90 = vld [vmem:[%s1 + $0x38] sm:$0xf]
    %v91 = vld [vmem:[%s1 + $0x3c] sm:$0xf]
    %v92 = vld [vmem:[%s0] sm:$0xf]
    %v93 = vld [vmem:[%s0 + $0x4] sm:$0xf]
    %v94 = vld [vmem:[%s0 + $0x8] sm:$0xf]
    %v95 = vld [vmem:[%s0 + $0xc] sm:$0xf]
    %v96 = vld [vmem:[%s0 + $0x10] sm:$0xf]
    %v97 = vld [vmem:[%s0 + $0x14] sm:$0xf]
    %v98 = vld [vmem:[%s0 + $0x18] sm:$0xf]
    %v99 = vld [vmem:[%s0 + $0x1c] sm:$0xf]
    %v100 = vld [vmem:[%s0 + $0x20] sm:$0xf]
    %v101 = vld [vmem:[%s0 + $0x24] sm:$0xf]
    %v102 = vld [vmem:[%s0 + $0x28] sm:$0x1]
    %v114 = vunpack.c.l.b16 %v92
    %v115 = vunpack.c.l.b16 %v93
    %v116 = vunpack.c.l.b16 %v94
    %v117 = vunpack.c.l.b16 %v95
    %v118 = vunpack.c.l.b16 %v96
    %v119 = vunpack.c.l.b16 %v97
    %v120 = vunpack.c.l.b16 %v98
    %v121 = vunpack.c.l.b16 %v99
    %v122 = vunpack.c.l.b16 %v100
    %v123 = vunpack.c.l.b16 %v101
    %v124 = vunpack.c.l.b16 %v102
    %v125 = vpack.c.b16 %v115, %v114
    %v126 = vpack.c.b16 %v117, %v116
    %v127 = vpack.c.b16 %v119, %v118
    %v128 = vpack.c.b16 %v121, %v120
    %v129 = vpack.c.b16 %v123, %v122
    %v130 = vpack.c.b16 %v124, %v124
    %v153 = vunpack.c.l.b16 %v76
    %v154 = vunpack.c.l.b16 %v77
    %v155 = vunpack.c.l.b16 %v78
    %v156 = vunpack.c.l.b16 %v79
    %v157 = vunpack.c.l.b16 %v80
    %v158 = vunpack.c.l.b16 %v81
    %v159 = vunpack.c.l.b16 %v82
    %v160 = vunpack.c.l.b16 %v83
    %v161 = vunpack.c.l.b16 %v84
    %v162 = vunpack.c.l.b16 %v85
    %v163 = vunpack.c.l.b16 %v86
    %v164 = vunpack.c.l.b16 %v87
    %v165 = vunpack.c.l.b16 %v88
    %v166 = vunpack.c.l.b16 %v89
    %v167 = vunpack.c.l.b16 %v90
    %v168 = vunpack.c.l.b16 %v91
    %v169 = vpack.c.b16 %v154, %v153
    %v170 = vpack.c.b16 %v156, %v155
    %v171 = vpack.c.b16 %v158, %v157
    %v172 = vpack.c.b16 %v160, %v159
    %v173 = vpack.c.b16 %v162, %v161
    %v174 = vpack.c.b16 %v164, %v163
    %v175 = vpack.c.b16 %v166, %v165
    %v176 = vpack.c.b16 %v168, %v167
    %185 = vmatprep.subr.bf16.mxu0 0
    %186 = vmatpush1.bf16.msra.mxu0 %v169
    %187 = vmatprep.subr.bf16.mxu0 0
    %188 = vmatpush1.bf16.msra.mxu0 %v170
    %189 = vmatprep.subr.bf16.mxu0 0
    %190 = vmatpush1.bf16.msra.mxu0 %v171
    %191 = vmatprep.subr.bf16.mxu0 0
    %192 = vmatpush1.bf16.msra.mxu0 %v172
    %193 = vmatprep.subr.bf16.mxu0 0
    %194 = vmatpush1.bf16.msra.mxu0 %v173
    %195 = vmatprep.subr.bf16.mxu0 0
    %196 = vmatpush1.bf16.msra.mxu0 %v174
    %197 = vmatprep.subr.bf16.mxu0 0
    %198 = vmatpush1.bf16.msra.mxu0 %v175
    %199 = vmatprep.subr.bf16.mxu0 0
    %200 = vmatpush1.bf16.msra.mxu0 %v176
    %201 = vmatprep.subr.bf16.mxu0 0
    %202 = vmatpush1.bf16.msra.mxu0 0
    %203 = vmatprep.subr.bf16.mxu0 0
    %204 = vmatpush1.bf16.msra.mxu0 0
    %205 = vmatprep.subr.bf16.mxu0 0
    %206 = vmatpush1.bf16.msra.mxu0 0
    %207 = vmatprep.subr.bf16.mxu0 0
    %208 = vmatpush1.bf16.msra.mxu0 0
    %209 = vmatprep.subr.bf16.mxu0 0
    %210 = vmatpush1.bf16.msra.mxu0 0
    %211 = vmatprep.subr.bf16.mxu0 0
    %212 = vmatpush1.bf16.msra.mxu0 0
    %213 = vmatprep.subr.bf16.mxu0 0
    %214 = vmatpush1.bf16.msra.mxu0 0
    %215 = vmatprep.subr.bf16.mxu0 0
    %216 = vmatpush1.bf16.msra.mxu0 0
    %217 = vmatprep.mubr.bf16.mxu0 0
    %218 = vmatmul.mubr.bf16.gmra.mrb[0].mxu0 %v125
    %v219 = vpop.f32.mrb[0].mxu0
    %v220 = vadd.f32 0.0, %v219
    %v221 = vpop.f32.mrb[0].mxu0
    %v222 = vpop.f32.mrb[0].mxu0
    %v223 = vadd.f32 0.0, %v222
    %v224 = vpop.f32.mrb[0].mxu0
    %225 = vmatprep.mubr.bf16.mxu0 0
    %226 = vmatmul.mubr.bf16.gmra.mrb[0].mxu0 %v126
    %v227 = vpop.f32.mrb[0].mxu0
    %v228 = vadd.f32 0.0, %v227
    %v229 = vpop.f32.mrb[0].mxu0
    %v230 = vpop.f32.mrb[0].mxu0
    %v231 = vadd.f32 0.0, %v230
    %v232 = vpop.f32.mrb[0].mxu0
    %233 = vmatprep.mubr.bf16.mxu0 0
    %234 = vmatmul.mubr.bf16.gmra.mrb[0].mxu0 %v127
    %v235 = vpop.f32.mrb[0].mxu0
    %v236 = vadd.f32 0.0, %v235
    %v237 = vpop.f32.mrb[0].mxu0
    %v238 = vpop.f32.mrb[0].mxu0
    %v239 = vadd.f32 0.0, %v238
    %v240 = vpop.f32.mrb[0].mxu0
    %241 = vmatprep.mubr.bf16.mxu0 0
    %242 = vmatmul.mubr.bf16.gmra.mrb[0].mxu0 %v128
    %v243 = vpop.f32.mrb[0].mxu0
    %v244 = vadd.f32 0.0, %v243
    %v245 = vpop.f32.mrb[0].mxu0
    %v246 = vpop.f32.mrb[0].mxu0
    %v247 = vadd.f32 0.0, %v246
    %v248 = vpop.f32.mrb[0].mxu0
    %249 = vmatprep.mubr.bf16.mxu0 0
    %250 = vmatmul.mubr.bf16.gmra.mrb[0].mxu0 %v129
    %v251 = vpop.f32.mrb[0].mxu0
    %v252 = vadd.f32 0.0, %v251
    %v253 = vpop.f32.mrb[0].mxu0
    %v254 = vpop.f32.mrb[0].mxu0
    %v255 = vadd.f32 0.0, %v254
    %v256 = vpop.f32.mrb[0].mxu0
    %257 = vmatprep.mubr.bf16.mxu0 0
    %258 = vmatmul.mubr.bf16.gmra.mrb[0].mxu0 %v130
    %v259 = vpop.f32.mrb[0].mxu0
    %v260 = vadd.f32 0.0, %v259
    %v261 = vpop.f32.mrb[0].mxu0
    %v262 = vpop.f32.mrb[0].mxu0
    %v263 = vpop.f32.mrb[0].mxu0
    %264 = vdwg.mxu0
    %s265 = scalar_lea.vmem %s0, 44
    %v266 = vld [vmem:[%s265] sm:$0xf]
    %v267 = vld [vmem:[%s265 + $0x4] sm:$0xf]
    %v268 = vld [vmem:[%s265 + $0x8] sm:$0xf]
    %v269 = vld [vmem:[%s265 + $0xc] sm:$0xf]
    %v270 = vld [vmem:[%s265 + $0x10] sm:$0xf]
    %v271 = vld [vmem:[%s265 + $0x14] sm:$0xf]
    %v272 = vld [vmem:[%s265 + $0x18] sm:$0xf]
    %v273 = vld [vmem:[%s265 + $0x1c] sm:$0xf]
    %v274 = vld [vmem:[%s265 + $0x20] sm:$0xf]
    %v275 = vld [vmem:[%s265 + $0x24] sm:$0xf]
    %v276 = vld [vmem:[%s265 + $0x28] sm:$0x1]
    %v288 = vunpack.c.l.b16 %v266
    %v289 = vunpack.c.l.b16 %v267
    %v290 = vunpack.c.l.b16 %v268
    %v291 = vunpack.c.l.b16 %v269
    %v292 = vunpack.c.l.b16 %v270
    %v293 = vunpack.c.l.b16 %v271
    %v294 = vunpack.c.l.b16 %v272
    %v295 = vunpack.c.l.b16 %v273
    %v296 = vunpack.c.l.b16 %v274
    %v297 = vunpack.c.l.b16 %v275
    %v298 = vunpack.c.l.b16 %v276
    %v299 = vpack.c.b16 %v289, %v288
    %v300 = vpack.c.b16 %v291, %v290
    %v301 = vpack.c.b16 %v293, %v292
    %v302 = vpack.c.b16 %v295, %v294
    %v303 = vpack.c.b16 %v297, %v296
    %v304 = vpack.c.b16 %v298, %v298
    %311 = vmatprep.subr.bf16.mxu0 0
    %312 = vmatpush1.bf16.msra.mxu0 %v169
    %313 = vmatprep.subr.bf16.mxu0 0
    %314 = vmatpush1.bf16.msra.mxu0 %v170
    %315 = vmatprep.subr.bf16.mxu0 0
    %316 = vmatpush1.bf16.msra.mxu0 %v171
    %317 = vmatprep.subr.bf16.mxu0 0
    %318 = vmatpush1.bf16.msra.mxu0 %v172
    %319 = vmatprep.subr.bf16.mxu0 0
    %320 = vmatpush1.bf16.msra.mxu0 %v173
    %321 = vmatprep.subr.bf16.mxu0 0
    %322 = vmatpush1.bf16.msra.mxu0 %v174
    %323 = vmatprep.subr.bf16.mxu0 0
    %324 = vmatpush1.bf16.msra.mxu0 %v175
    %325 = vmatprep.subr.bf16.mxu0 0
    %326 = vmatpush1.bf16.msra.mxu0 %v176
    %327 = vmatprep.subr.bf16.mxu0 0
    %328 = vmatpush1.bf16.msra.mxu0 0
    %329 = vmatprep.subr.bf16.mxu0 0
    %330 = vmatpush1.bf16.msra.mxu0 0
    %331 = vmatprep.subr.bf16.mxu0 0
    %332 = vmatpush1.bf16.msra.mxu0 0
    %333 = vmatprep.subr.bf16.mxu0 0
    %334 = vmatpush1.bf16.msra.mxu0 0
    %335 = vmatprep.subr.bf16.mxu0 0
    %336 = vmatpush1.bf16.msra.mxu0 0
    %337 = vmatprep.subr.bf16.mxu0 0
    %338 = vmatpush1.bf16.msra.mxu0 0
    %339 = vmatprep.subr.bf16.mxu0 0
    %340 = vmatpush1.bf16.msra.mxu0 0
    %341 = vmatprep.subr.bf16.mxu0 0
    %342 = vmatpush1.bf16.msra.mxu0 0
    %343 = vmatprep.mubr.bf16.mxu0 0
    %344 = vmatmul.mubr.bf16.gmra.mrb[0].mxu0 %v299
    %v345 = vpop.f32.mrb[0].mxu0
    %v346 = vadd.f32 0.0, %v345
    %v347 = vpop.f32.mrb[0].mxu0
    %v348 = vpop.f32.mrb[0].mxu0
    %v349 = vadd.f32 0.0, %v348
    %v350 = vpop.f32.mrb[0].mxu0
    %351 = vmatprep.mubr.bf16.mxu0 0
    %352 = vmatmul.mubr.bf16.gmra.mrb[0].mxu0 %v300
    %v353 = vpop.f32.mrb[0].mxu0
    %v354 = vadd.f32 0.0, %v353
    %v355 = vpop.f32.mrb[0].mxu0
    %v356 = vpop.f32.mrb[0].mxu0
    %v357 = vadd.f32 0.0, %v356
    %v358 = vpop.f32.mrb[0].mxu0
    %359 = vmatprep.mubr.bf16.mxu0 0
    %360 = vmatmul.mubr.bf16.gmra.mrb[0].mxu0 %v301
    %v361 = vpop.f32.mrb[0].mxu0
    %v362 = vadd.f32 0.0, %v361
    %v363 = vpop.f32.mrb[0].mxu0
    %v364 = vpop.f32.mrb[0].mxu0
    %v365 = vadd.f32 0.0, %v364
    %v366 = vpop.f32.mrb[0].mxu0
    %367 = vmatprep.mubr.bf16.mxu0 0
    %368 = vmatmul.mubr.bf16.gmra.mrb[0].mxu0 %v302
    %v369 = vpop.f32.mrb[0].mxu0
    %v370 = vadd.f32 0.0, %v369
    %v371 = vpop.f32.mrb[0].mxu0
    %v372 = vpop.f32.mrb[0].mxu0
    %v373 = vadd.f32 0.0, %v372
    %v374 = vpop.f32.mrb[0].mxu0
    %375 = vmatprep.mubr.bf16.mxu0 0
    %376 = vmatmul.mubr.bf16.gmra.mrb[0].mxu0 %v303
    %v377 = vpop.f32.mrb[0].mxu0
    %v378 = vadd.f32 0.0, %v377
    %v379 = vpop.f32.mrb[0].mxu0
    %v380 = vpop.f32.mrb[0].mxu0
    %v381 = vadd.f32 0.0, %v380
    %v382 = vpop.f32.mrb[0].mxu0
    %383 = vmatprep.mubr.bf16.mxu0 0
    %384 = vmatmul.mubr.bf16.gmra.mrb[0].mxu0 %v304
    %v385 = vpop.f32.mrb[0].mxu0
    %v386 = vadd.f32 0.0, %v385
    %v387 = vpop.f32.mrb[0].mxu0
    %v388 = vpop.f32.mrb[0].mxu0
    %v389 = vpop.f32.mrb[0].mxu0
    %390 = vdwg.mxu0
    %v391 = vadd.f32 %v220, %v223
    %v392 = vadd.f32 %v391, %v228
    %v393 = vadd.f32 %v392, %v231
    %v394 = vadd.f32 %v393, %v236
    %v395 = vadd.f32 %v394, %v239
    %v396 = vadd.f32 %v395, %v244
    %v397 = vadd.f32 %v396, %v247
    %v398 = vadd.f32 %v397, %v252
    %v399 = vadd.f32 %v398, %v255
    %vm400 = vcmask 1040384
    %v401 = vsel %vm400, %v260, 0.0
    %v402 = vadd.f32 %v399, %v401
    %v403 = vrot.slane %v402, 4
    %v404 = vadd.f32 %v402, %v403
    %v405 = vrot.slane %v404, 2
    %v406 = vadd.f32 %v404, %v405
    %v407 = vrot.slane %v406, 1
    %v408 = vadd.f32 %v406, %v407
    %v409 = vmul.f32 %v220, %v220
    %v410 = vmul.f32 %v223, %v223
    %v411 = vmul.f32 %v228, %v228
    %v412 = vmul.f32 %v231, %v231
    %v413 = vmul.f32 %v236, %v236
    %v414 = vmul.f32 %v239, %v239
    %v415 = vmul.f32 %v244, %v244
    %v416 = vmul.f32 %v247, %v247
    %v417 = vmul.f32 %v252, %v252
    %v418 = vmul.f32 %v255, %v255
    %v419 = vmul.f32 %v260, %v260
    %v420 = vadd.f32 %v409, %v410
    %v421 = vadd.f32 %v420, %v411
    %v422 = vadd.f32 %v421, %v412
    %v423 = vadd.f32 %v422, %v413
    %v424 = vadd.f32 %v423, %v414
    %v425 = vadd.f32 %v424, %v415
    %v426 = vadd.f32 %v425, %v416
    %v427 = vadd.f32 %v426, %v417
    %v428 = vadd.f32 %v427, %v418
    %v429 = vsel %vm400, %v419, 0.0
    %v430 = vadd.f32 %v428, %v429
    %v431 = vrot.slane %v430, 4
    %v432 = vadd.f32 %v430, %v431
    %v433 = vrot.slane %v432, 2
    %v434 = vadd.f32 %v432, %v433
    %v435 = vrot.slane %v434, 1
    %v436 = vadd.f32 %v434, %v435
    %v437 = vadd.f32 %v346, %v349
    %v438 = vadd.f32 %v437, %v354
    %v439 = vadd.f32 %v438, %v357
    %v440 = vadd.f32 %v439, %v362
    %v441 = vadd.f32 %v440, %v365
    %v442 = vadd.f32 %v441, %v370
    %v443 = vadd.f32 %v442, %v373
    %v444 = vadd.f32 %v443, %v378
    %v445 = vadd.f32 %v444, %v381
    %v446 = vsel %vm400, %v386, 0.0
    %v447 = vadd.f32 %v445, %v446
    %v448 = vrot.slane %v447, 4
    %v449 = vadd.f32 %v447, %v448
    %v450 = vrot.slane %v449, 2
    %v451 = vadd.f32 %v449, %v450
    %v452 = vrot.slane %v451, 1
    %v453 = vadd.f32 %v451, %v452
    %v454 = vadd.f32 %v408, %v453
    %v455 = vmul.f32 %v346, %v346
    %v456 = vmul.f32 %v349, %v349
    %v457 = vmul.f32 %v354, %v354
    %v458 = vmul.f32 %v357, %v357
    %v459 = vmul.f32 %v362, %v362
    %v460 = vmul.f32 %v365, %v365
    %v461 = vmul.f32 %v370, %v370
    %v462 = vmul.f32 %v373, %v373
    %v463 = vmul.f32 %v378, %v378
    %v464 = vmul.f32 %v381, %v381
    %v465 = vmul.f32 %v386, %v386
    %v466 = vadd.f32 %v455, %v456
    %v467 = vadd.f32 %v466, %v457
    %v468 = vadd.f32 %v467, %v458
    %v469 = vadd.f32 %v468, %v459
    %v470 = vadd.f32 %v469, %v460
    %v471 = vadd.f32 %v470, %v461
    %v472 = vadd.f32 %v471, %v462
    %v473 = vadd.f32 %v472, %v463
    %v474 = vadd.f32 %v473, %v464
    %v475 = vsel %vm400, %v465, 0.0
    %v476 = vadd.f32 %v474, %v475
    %v477 = vrot.slane %v476, 4
    %v478 = vadd.f32 %v476, %v477
    %v479 = vrot.slane %v478, 2
    %v480 = vadd.f32 %v478, %v479
    %v481 = vrot.slane %v480, 1
    %v482 = vadd.f32 %v480, %v481
    %v483 = vadd.f32 %v436, %v482
    %v484 = vmul.f32 %v454, 0.0061728396
    %v485 = vmul.f32 %v483, 0.0061728396
    %v486 = vmul.f32 %v484, %v484
    %v487 = vsub.f32 %v485, %v486
    %v488 = vld [vmem:[%s2] sm:$0x1]
    %v489 = vadd.f32 %v487, 1e-05
    %v490 = vrsqrt.pop %v489
    %v491 = vmul.f32 %v488, %v490
    %v492 = vld [vmem:[%s2 + $0x1] sm:$0x1]
    %v493 = vmul.f32 %v484, %v491
    %v494 = vsub.f32 %v492, %v493
    %v495 = vlaneseq
    %v496 = vshrl.u32 %v495, 7
    %v497 = vsub.s32 0, %v496
    %v498 = vrot.slane %v491, %v497
    %v499 = vmul.f32 %v220, %v498
    %v500 = vmul.f32 %v223, %v498
    %v501 = vmul.f32 %v228, %v498
    %v502 = vmul.f32 %v231, %v498
    %v503 = vmul.f32 %v236, %v498
    %v504 = vmul.f32 %v239, %v498
    %v505 = vmul.f32 %v244, %v498
    %v506 = vmul.f32 %v247, %v498
    %v507 = vmul.f32 %v252, %v498
    %v508 = vmul.f32 %v255, %v498
    %v509 = vmul.f32 %v260, %v498
    %v510 = vlaneseq
    %v511 = vshrl.u32 %v510, 7
    %v512 = vsub.s32 0, %v511
    %v513 = vrot.slane %v494, %v512
    %v514 = vadd.f32 %v499, %v513
    %v515 = vadd.f32 %v500, %v513
    %v516 = vadd.f32 %v501, %v513
    %v517 = vadd.f32 %v502, %v513
    %v518 = vadd.f32 %v503, %v513
    %v519 = vadd.f32 %v504, %v513
    %v520 = vadd.f32 %v505, %v513
    %v521 = vadd.f32 %v506, %v513
    %v522 = vadd.f32 %v507, %v513
    %v523 = vadd.f32 %v508, %v513
    %v524 = vadd.f32 %v509, %v513
    %v525 = vmax.f32 %v514, 0.0
    %v526 = vmax.f32 %v515, 0.0
    %v527 = vmax.f32 %v516, 0.0
    %v528 = vmax.f32 %v517, 0.0
    %v529 = vmax.f32 %v518, 0.0
    %v530 = vmax.f32 %v519, 0.0
    %v531 = vmax.f32 %v520, 0.0
    %v532 = vmax.f32 %v521, 0.0
    %v533 = vmax.f32 %v522, 0.0
    %v534 = vmax.f32 %v523, 0.0
    %v535 = vmax.f32 %v524, 0.0
    %v536 = vmul.f32 %v346, %v498
    %v537 = vmul.f32 %v349, %v498
    %v538 = vmul.f32 %v354, %v498
    %v539 = vmul.f32 %v357, %v498
    %v540 = vmul.f32 %v362, %v498
    %v541 = vmul.f32 %v365, %v498
    %v542 = vmul.f32 %v370, %v498
    %v543 = vmul.f32 %v373, %v498
    %v544 = vmul.f32 %v378, %v498
    %v545 = vmul.f32 %v381, %v498
    %v546 = vmul.f32 %v386, %v498
    %v547 = vadd.f32 %v536, %v513
    %v548 = vadd.f32 %v537, %v513
    %v549 = vadd.f32 %v538, %v513
    %v550 = vadd.f32 %v539, %v513
    %v551 = vadd.f32 %v540, %v513
    %v552 = vadd.f32 %v541, %v513
    %v553 = vadd.f32 %v542, %v513
    %v554 = vadd.f32 %v543, %v513
    %v555 = vadd.f32 %v544, %v513
    %v556 = vadd.f32 %v545, %v513
    %v557 = vadd.f32 %v546, %v513
    %v558 = vmax.f32 %v547, 0.0
    %v559 = vmax.f32 %v548, 0.0
    %v560 = vmax.f32 %v549, 0.0
    %v561 = vmax.f32 %v550, 0.0
    %v562 = vmax.f32 %v551, 0.0
    %v563 = vmax.f32 %v552, 0.0
    %v564 = vmax.f32 %v553, 0.0
    %v565 = vmax.f32 %v554, 0.0
    %v566 = vmax.f32 %v555, 0.0
    %v567 = vmax.f32 %v556, 0.0
    %v568 = vmax.f32 %v557, 0.0
    %v569 = vpack.c.bf16 %v526, %v525
    %v570 = vpack.c.bf16 %v559, %v558
    %v571 = vpack.c.bf16 %v528, %v527
    %v572 = vpack.c.bf16 %v561, %v560
    %v573 = vpack.c.bf16 %v530, %v529
    %v574 = vpack.c.bf16 %v563, %v562
    %v575 = vpack.c.bf16 %v532, %v531
    %v576 = vpack.c.bf16 %v565, %v564
    %v577 = vpack.c.bf16 %v534, %v533
    %v578 = vpack.c.bf16 %v567, %v566
    %v579 = vpack.c.bf16 %v535, %v535
    %v580 = vpack.c.bf16 %v568, %v568
    %v581 = vld [vmem:[%s3] sm:$0xf]
    %v582 = vld [vmem:[%s3 + $0x4] sm:$0xf]
    %v583 = vld [vmem:[%s3 + $0x8] sm:$0xf]
    %v584 = vld [vmem:[%s3 + $0xc] sm:$0x1]
    %v589 = vunpack.c.l.b16 %v581
    %v590 = vunpack.c.l.b16 %v582
    %v591 = vunpack.c.l.b16 %v583
    %v592 = vunpack.c.l.b16 %v584
    %v593 = vpack.c.b16 %v590, %v589
    %v594 = vpack.c.b16 %v592, %v591
    %vm595 = vcmask 662528
    %v597 = vsel %vm595, %v593, 0
    %v600 = vsel %vm595, %v594, 0
    %v602 = vsel 0, 4294967295, 65535
    %v603 = vsel %vm400, %v602, 0
    %v605 = vand.u32 %v579, %v603
    %v608 = vand.u32 %v580, %v603
    %610 = vmatprep.subr.bf16.mxu0 %v570
    %611 = vmatpush1.bf16.msra.mxu0 %v569
    %612 = vmatprep.subr.bf16.mxu0 %v572
    %613 = vmatpush1.bf16.msra.mxu0 %v571
    %614 = vmatprep.subr.bf16.mxu0 %v574
    %615 = vmatpush1.bf16.msra.mxu0 %v573
    %616 = vmatprep.subr.bf16.mxu0 %v576
    %617 = vmatpush1.bf16.msra.mxu0 %v575
    %618 = vmatprep.subr.bf16.mxu0 %v578
    %619 = vmatpush1.bf16.msra.mxu0 %v577
    %620 = vmatprep.subr.bf16.mxu0 %v608
    %621 = vmatpush1.bf16.msra.mxu0 %v605
    %622 = vmatprep.subr.bf16.mxu0 0
    %623 = vmatpush1.bf16.msra.mxu0 0
    %624 = vmatprep.subr.bf16.mxu0 0
    %625 = vmatpush1.bf16.msra.mxu0 0
    %626 = vmatprep.subr.bf16.mxu0 0
    %627 = vmatpush1.bf16.msra.mxu0 0
    %628 = vmatprep.subr.bf16.mxu0 0
    %629 = vmatpush1.bf16.msra.mxu0 0
    %630 = vmatprep.subr.bf16.mxu0 0
    %631 = vmatpush1.bf16.msra.mxu0 0
    %632 = vmatprep.subr.bf16.mxu0 0
    %633 = vmatpush1.bf16.msra.mxu0 0
    %634 = vmatprep.subr.bf16.mxu0 0
    %635 = vmatpush1.bf16.msra.mxu0 0
    %636 = vmatprep.subr.bf16.mxu0 0
    %637 = vmatpush1.bf16.msra.mxu0 0
    %638 = vmatprep.subr.bf16.mxu0 0
    %639 = vmatpush1.bf16.msra.mxu0 0
    %640 = vmatprep.subr.bf16.mxu0 0
    %641 = vmatpush1.bf16.msra.mxu0 0
    %642 = vmatprep.mubr.bf16.mxu0 0
    %643 = vmatmul.mubr.bf16.gmra.mrb[0].mxu0 %v597
    %v644 = vpop.f32.mrb[0].mxu0
    %v645 = vadd.f32 0.0, %v644
    %v646 = vpop.f32.mrb[0].mxu0
    %v647 = vadd.f32 0.0, %v646
    %v648 = vpop.f32.mrb[0].mxu0
    %v649 = vadd.f32 0.0, %v648
    %v650 = vpop.f32.mrb[0].mxu0
    %v651 = vadd.f32 0.0, %v650
    %652 = vmatprep.mubr.bf16.mxu0 0
    %653 = vmatmul.mubr.bf16.gmra.mrb[0].mxu0 %v600
    %v654 = vpop.f32.mrb[0].mxu0
    %v655 = vadd.f32 0.0, %v654
    %v656 = vpop.f32.mrb[0].mxu0
    %v657 = vadd.f32 0.0, %v656
    %v658 = vpop.f32.mrb[0].mxu0
    %v659 = vadd.f32 0.0, %v658
    %v660 = vpop.f32.mrb[0].mxu0
    %v661 = vadd.f32 0.0, %v660
    %662 = vdwg.mxu0
    %v663 = vpack.c.bf16 %v649, %v645
    %v664 = vpack.c.bf16 %v651, %v647
    %v665 = vpack.c.bf16 %v659, %v655
    %v666 = vpack.c.bf16 %v661, %v657
    %s667 = scalar_lea.vmem %s3, 16
    %v668 = vld [vmem:[%s667] sm:$0xf]
    %v669 = vld [vmem:[%s667 + $0x4] sm:$0xf]
    %v670 = vld [vmem:[%s667 + $0x8] sm:$0xf]
    %v671 = vld [vmem:[%s667 + $0xc] sm:$0x1]
    %v676 = vunpack.c.l.b16 %v668
    %v677 = vunpack.c.l.b16 %v669
    %v678 = vunpack.c.l.b16 %v670
    %v679 = vunpack.c.l.b16 %v671
    %v680 = vpack.c.b16 %v677, %v676
    %v681 = vpack.c.b16 %v679, %v678
    %v683 = vsel %vm595, %v680, 0
    %v686 = vsel %vm595, %v681, 0
    %688 = vmatprep.subr.bf16.mxu0 %v570
    %689 = vmatpush1.bf16.msra.mxu0 %v569
    %690 = vmatprep.subr.bf16.mxu0 %v572
    %691 = vmatpush1.bf16.msra.mxu0 %v571
    %692 = vmatprep.subr.bf16.mxu0 %v574
    %693 = vmatpush1.bf16.msra.mxu0 %v573
    %694 = vmatprep.subr.bf16.mxu0 %v576
    %695 = vmatpush1.bf16.msra.mxu0 %v575
    %696 = vmatprep.subr.bf16.mxu0 %v578
    %697 = vmatpush1.bf16.msra.mxu0 %v577
    %698 = vmatprep.subr.bf16.mxu0 %v608
    %699 = vmatpush1.bf16.msra.mxu0 %v605
    %700 = vmatprep.subr.bf16.mxu0 0
    %701 = vmatpush1.bf16.msra.mxu0 0
    %702 = vmatprep.subr.bf16.mxu0 0
    %703 = vmatpush1.bf16.msra.mxu0 0
    %704 = vmatprep.subr.bf16.mxu0 0
    %705 = vmatpush1.bf16.msra.mxu0 0
    %706 = vmatprep.subr.bf16.mxu0 0
    %707 = vmatpush1.bf16.msra.mxu0 0
    %708 = vmatprep.subr.bf16.mxu0 0
    %709 = vmatpush1.bf16.msra.mxu0 0
    %710 = vmatprep.subr.bf16.mxu0 0
    %711 = vmatpush1.bf16.msra.mxu0 0
    %712 = vmatprep.subr.bf16.mxu0 0
    %713 = vmatpush1.bf16.msra.mxu0 0
    %714 = vmatprep.subr.bf16.mxu0 0
    %715 = vmatpush1.bf16.msra.mxu0 0
    %716 = vmatprep.subr.bf16.mxu0 0
    %717 = vmatpush1.bf16.msra.mxu0 0
    %718 = vmatprep.subr.bf16.mxu0 0
    %719 = vmatpush1.bf16.msra.mxu0 0
    %720 = vmatprep.mubr.bf16.mxu0 0
    %721 = vmatmul.mubr.bf16.gmra.mrb[0].mxu0 %v683
    %v722 = vpop.f32.mrb[0].mxu0
    %v723 = vadd.f32 0.0, %v722
    %v724 = vpop.f32.mrb[0].mxu0
    %v725 = vadd.f32 0.0, %v724
    %v726 = vpop.f32.mrb[0].mxu0
    %v727 = vadd.f32 0.0, %v726
    %v728 = vpop.f32.mrb[0].mxu0
    %v729 = vadd.f32 0.0, %v728
    %730 = vmatprep.mubr.bf16.mxu0 0
    %731 = vmatmul.mubr.bf16.gmra.mrb[0].mxu0 %v686
    %v732 = vpop.f32.mrb[0].mxu0
    %v733 = vadd.f32 0.0, %v732
    %v734 = vpop.f32.mrb[0].mxu0
    %v735 = vadd.f32 0.0, %v734
    %v736 = vpop.f32.mrb[0].mxu0
    %v737 = vadd.f32 0.0, %v736
    %v738 = vpop.f32.mrb[0].mxu0
    %v739 = vadd.f32 0.0, %v738
    %740 = vdwg.mxu0
    %v741 = vpack.c.bf16 %v727, %v723
    %v742 = vpack.c.bf16 %v729, %v725
    %v743 = vpack.c.bf16 %v737, %v733
    %v744 = vpack.c.bf16 %v739, %v735
    %s745 = scalar_lea.vmem %s3, 32
    %v746 = vld [vmem:[%s745] sm:$0xf]
    %v747 = vld [vmem:[%s745 + $0x4] sm:$0xf]
    %v748 = vld [vmem:[%s745 + $0x8] sm:$0xf]
    %v749 = vld [vmem:[%s745 + $0xc] sm:$0x1]
    %v754 = vunpack.c.l.b16 %v746
    %v755 = vunpack.c.l.b16 %v747
    %v756 = vunpack.c.l.b16 %v748
    %v757 = vunpack.c.l.b16 %v749
    %v758 = vpack.c.b16 %v755, %v754
    %v759 = vpack.c.b16 %v757, %v756
    %v761 = vsel %vm595, %v758, 0
    %v764 = vsel %vm595, %v759, 0
    %766 = vmatprep.subr.bf16.mxu0 %v570
    %767 = vmatpush1.bf16.msra.mxu0 %v569
    %768 = vmatprep.subr.bf16.mxu0 %v572
    %769 = vmatpush1.bf16.msra.mxu0 %v571
    %770 = vmatprep.subr.bf16.mxu0 %v574
    %771 = vmatpush1.bf16.msra.mxu0 %v573
    %772 = vmatprep.subr.bf16.mxu0 %v576
    %773 = vmatpush1.bf16.msra.mxu0 %v575
    %774 = vmatprep.subr.bf16.mxu0 %v578
    %775 = vmatpush1.bf16.msra.mxu0 %v577
    %776 = vmatprep.subr.bf16.mxu0 %v608
    %777 = vmatpush1.bf16.msra.mxu0 %v605
    %778 = vmatprep.subr.bf16.mxu0 0
    %779 = vmatpush1.bf16.msra.mxu0 0
    %780 = vmatprep.subr.bf16.mxu0 0
    %781 = vmatpush1.bf16.msra.mxu0 0
    %782 = vmatprep.subr.bf16.mxu0 0
    %783 = vmatpush1.bf16.msra.mxu0 0
    %784 = vmatprep.subr.bf16.mxu0 0
    %785 = vmatpush1.bf16.msra.mxu0 0
    %786 = vmatprep.subr.bf16.mxu0 0
    %787 = vmatpush1.bf16.msra.mxu0 0
    %788 = vmatprep.subr.bf16.mxu0 0
    %789 = vmatpush1.bf16.msra.mxu0 0
    %790 = vmatprep.subr.bf16.mxu0 0
    %791 = vmatpush1.bf16.msra.mxu0 0
    %792 = vmatprep.subr.bf16.mxu0 0
    %793 = vmatpush1.bf16.msra.mxu0 0
    %794 = vmatprep.subr.bf16.mxu0 0
    %795 = vmatpush1.bf16.msra.mxu0 0
    %796 = vmatprep.subr.bf16.mxu0 0
    %797 = vmatpush1.bf16.msra.mxu0 0
    %798 = vmatprep.mubr.bf16.mxu0 0
    %799 = vmatmul.mubr.bf16.gmra.mrb[0].mxu0 %v761
    %v800 = vpop.f32.mrb[0].mxu0
    %v801 = vadd.f32 0.0, %v800
    %v802 = vpop.f32.mrb[0].mxu0
    %v803 = vadd.f32 0.0, %v802
    %v804 = vpop.f32.mrb[0].mxu0
    %v805 = vadd.f32 0.0, %v804
    %v806 = vpop.f32.mrb[0].mxu0
    %v807 = vadd.f32 0.0, %v806
    %808 = vmatprep.mubr.bf16.mxu0 0
    %809 = vmatmul.mubr.bf16.gmra.mrb[0].mxu0 %v764
    %v810 = vpop.f32.mrb[0].mxu0
    %v811 = vadd.f32 0.0, %v810
    %v812 = vpop.f32.mrb[0].mxu0
    %v813 = vadd.f32 0.0, %v812
    %v814 = vpop.f32.mrb[0].mxu0
    %v815 = vadd.f32 0.0, %v814
    %v816 = vpop.f32.mrb[0].mxu0
    %v817 = vadd.f32 0.0, %v816
    %818 = vdwg.mxu0
    %v819 = vpack.c.bf16 %v805, %v801
    %v820 = vpack.c.bf16 %v807, %v803
    %v821 = vpack.c.bf16 %v815, %v811
    %v822 = vpack.c.bf16 %v817, %v813
    %s823 = scalar_lea.vmem %s3, 48
    %v824 = vld [vmem:[%s823] sm:$0xf]
    %v825 = vld [vmem:[%s823 + $0x4] sm:$0xf]
    %v826 = vld [vmem:[%s823 + $0x8] sm:$0xf]
    %v827 = vld [vmem:[%s823 + $0xc] sm:$0x1]
    %v832 = vunpack.c.l.b16 %v824
    %v833 = vunpack.c.l.b16 %v825
    %v834 = vunpack.c.l.b16 %v826
    %v835 = vunpack.c.l.b16 %v827
    %v836 = vpack.c.b16 %v833, %v832
    %v837 = vpack.c.b16 %v835, %v834
    %v839 = vsel %vm595, %v836, 0
    %v842 = vsel %vm595, %v837, 0
    %844 = vmatprep.subr.bf16.mxu0 %v570
    %845 = vmatpush1.bf16.msra.mxu0 %v569
    %846 = vmatprep.subr.bf16.mxu0 %v572
    %847 = vmatpush1.bf16.msra.mxu0 %v571
    %848 = vmatprep.subr.bf16.mxu0 %v574
    %849 = vmatpush1.bf16.msra.mxu0 %v573
    %850 = vmatprep.subr.bf16.mxu0 %v576
    %851 = vmatpush1.bf16.msra.mxu0 %v575
    %852 = vmatprep.subr.bf16.mxu0 %v578
    %853 = vmatpush1.bf16.msra.mxu0 %v577
    %854 = vmatprep.subr.bf16.mxu0 %v608
    %855 = vmatpush1.bf16.msra.mxu0 %v605
    %856 = vmatprep.subr.bf16.mxu0 0
    %857 = vmatpush1.bf16.msra.mxu0 0
    %858 = vmatprep.subr.bf16.mxu0 0
    %859 = vmatpush1.bf16.msra.mxu0 0
    %860 = vmatprep.subr.bf16.mxu0 0
    %861 = vmatpush1.bf16.msra.mxu0 0
    %862 = vmatprep.subr.bf16.mxu0 0
    %863 = vmatpush1.bf16.msra.mxu0 0
    %864 = vmatprep.subr.bf16.mxu0 0
    %865 = vmatpush1.bf16.msra.mxu0 0
    %866 = vmatprep.subr.bf16.mxu0 0
    %867 = vmatpush1.bf16.msra.mxu0 0
    %868 = vmatprep.subr.bf16.mxu0 0
    %869 = vmatpush1.bf16.msra.mxu0 0
    %870 = vmatprep.subr.bf16.mxu0 0
    %871 = vmatpush1.bf16.msra.mxu0 0
    %872 = vmatprep.subr.bf16.mxu0 0
    %873 = vmatpush1.bf16.msra.mxu0 0
    %874 = vmatprep.subr.bf16.mxu0 0
    %875 = vmatpush1.bf16.msra.mxu0 0
    %876 = vmatprep.mubr.bf16.mxu0 0
    %877 = vmatmul.mubr.bf16.gmra.mrb[0].mxu0 %v839
    %v878 = vpop.f32.mrb[0].mxu0
    %v879 = vadd.f32 0.0, %v878
    %v880 = vpop.f32.mrb[0].mxu0
    %v881 = vadd.f32 0.0, %v880
    %v882 = vpop.f32.mrb[0].mxu0
    %v883 = vadd.f32 0.0, %v882
    %v884 = vpop.f32.mrb[0].mxu0
    %v885 = vadd.f32 0.0, %v884
    %886 = vmatprep.mubr.bf16.mxu0 0
    %887 = vmatmul.mubr.bf16.gmra.mrb[0].mxu0 %v842
    %v888 = vpop.f32.mrb[0].mxu0
    %v889 = vadd.f32 0.0, %v888
    %v890 = vpop.f32.mrb[0].mxu0
    %v891 = vadd.f32 0.0, %v890
    %v892 = vpop.f32.mrb[0].mxu0
    %v893 = vadd.f32 0.0, %v892
    %v894 = vpop.f32.mrb[0].mxu0
    %v895 = vadd.f32 0.0, %v894
    %896 = vdwg.mxu0
    %v897 = vpack.c.bf16 %v883, %v879
    %v898 = vpack.c.bf16 %v885, %v881
    %v899 = vpack.c.bf16 %v893, %v889
    %v900 = vpack.c.bf16 %v895, %v891
    %v901 = vld [vmem:[%s4] sm:$0xff]
    %v902 = vld [vmem:[%s4 + $0x8] sm:$0xff]
    %v903 = vld [vmem:[%s4 + $0x10] sm:$0xff]
    %v904 = vld [vmem:[%s4 + $0x18] sm:$0xff]
    %v905 = vld [vmem:[%s4 + $0x20] sm:$0xff]
    %v906 = vld [vmem:[%s4 + $0x28] sm:$0xff]
    %v907 = vld [vmem:[%s4 + $0x30] sm:$0xff]
    %v908 = vld [vmem:[%s4 + $0x38] sm:$0xff]
    %v909 = vld [vmem:[%s4 + $0x40] sm:$0xff]
    %v910 = vld [vmem:[%s4 + $0x48] sm:$0xff]
    %v911 = vld [vmem:[%s4 + $0x50] sm:$0xff]
    %v912 = vld [vmem:[%s4 + $0x58] sm:$0xff]
    %v913 = vld [vmem:[%s4 + $0x60] sm:$0xff]
    %v914 = vld [vmem:[%s4 + $0x68] sm:$0xff]
    %v915 = vld [vmem:[%s4 + $0x70] sm:$0xff]
    %v916 = vld [vmem:[%s4 + $0x78] sm:$0xff]
    %v917 = vld [vmem:[%s4 + $0x80] sm:$0xff]
    %v918 = vld [vmem:[%s4 + $0x88] sm:$0xff]
    %v919 = vld [vmem:[%s4 + $0x90] sm:$0xff]
    %v920 = vld [vmem:[%s4 + $0x98] sm:$0xff]
    %v921 = vld [vmem:[%s4 + $0xa0] sm:$0xff]
    %v922 = vld [vmem:[%s4 + $0xa8] sm:$0xff]
    %v923 = vld [vmem:[%s4 + $0xb0] sm:$0xff]
    %v924 = vld [vmem:[%s4 + $0xb8] sm:$0xff]
    %v925 = vld [vmem:[%s4 + $0xc0] sm:$0xff]
    %v926 = vld [vmem:[%s4 + $0xc8] sm:$0xff]
    %v927 = vld [vmem:[%s4 + $0xd0] sm:$0xff]
    %v928 = vld [vmem:[%s4 + $0xd8] sm:$0xff]
    %v929 = vld [vmem:[%s4 + $0xe0] sm:$0xff]
    %v930 = vld [vmem:[%s4 + $0xe8] sm:$0xff]
    %v931 = vld [vmem:[%s4 + $0xf0] sm:$0xff]
    %v932 = vld [vmem:[%s4 + $0xf8] sm:$0xff]
    %v949 = vunpack.c.l.b16 %v917
    %v950 = vunpack.c.h.b16 %v917
    %v951 = vunpack.c.l.b16 %v918
    %v952 = vunpack.c.h.b16 %v918
    %v953 = vunpack.c.l.b16 %v919
    %v954 = vunpack.c.h.b16 %v919
    %v955 = vunpack.c.l.b16 %v920
    %v956 = vunpack.c.h.b16 %v920
    %v957 = vunpack.c.l.b16 %v921
    %v958 = vunpack.c.h.b16 %v921
    %v959 = vunpack.c.l.b16 %v922
    %v960 = vunpack.c.h.b16 %v922
    %v961 = vunpack.c.l.b16 %v923
    %v962 = vunpack.c.h.b16 %v923
    %v963 = vunpack.c.l.b16 %v924
    %v964 = vunpack.c.h.b16 %v924
    %v965 = vunpack.c.l.b16 %v925
    %v966 = vunpack.c.h.b16 %v925
    %v967 = vunpack.c.l.b16 %v926
    %v968 = vunpack.c.h.b16 %v926
    %v969 = vunpack.c.l.b16 %v927
    %v970 = vunpack.c.h.b16 %v927
    %v971 = vunpack.c.l.b16 %v928
    %v972 = vunpack.c.h.b16 %v928
    %v973 = vunpack.c.l.b16 %v929
    %v974 = vunpack.c.h.b16 %v929
    %v975 = vunpack.c.l.b16 %v930
    %v976 = vunpack.c.h.b16 %v930
    %v977 = vunpack.c.l.b16 %v931
    %v978 = vunpack.c.h.b16 %v931
    %v979 = vunpack.c.l.b16 %v932
    %v980 = vunpack.c.h.b16 %v932
    %v981 = vpack.c.b16 %v951, %v949
    %v982 = vpack.c.b16 %v952, %v950
    %v983 = vpack.c.b16 %v955, %v953
    %v984 = vpack.c.b16 %v956, %v954
    %v985 = vpack.c.b16 %v959, %v957
    %v986 = vpack.c.b16 %v960, %v958
    %v987 = vpack.c.b16 %v963, %v961
    %v988 = vpack.c.b16 %v964, %v962
    %v989 = vpack.c.b16 %v967, %v965
    %v990 = vpack.c.b16 %v968, %v966
    %v991 = vpack.c.b16 %v971, %v969
    %v992 = vpack.c.b16 %v972, %v970
    %v993 = vpack.c.b16 %v975, %v973
    %v994 = vpack.c.b16 %v976, %v974
    %v995 = vpack.c.b16 %v979, %v977
    %v996 = vpack.c.b16 %v980, %v978
    %1013 = vmatprep.subr.bf16.mxu0 %v982
    %1014 = vmatpush1.bf16.msra.mxu0 %v981
    %1015 = vmatprep.subr.bf16.mxu0 %v984
    %1016 = vmatpush1.bf16.msra.mxu0 %v983
    %1017 = vmatprep.subr.bf16.mxu0 %v986
    %1018 = vmatpush1.bf16.msra.mxu0 %v985
    %1019 = vmatprep.subr.bf16.mxu0 %v988
    %1020 = vmatpush1.bf16.msra.mxu0 %v987
    %1021 = vmatprep.subr.bf16.mxu0 %v990
    %1022 = vmatpush1.bf16.msra.mxu0 %v989
    %1023 = vmatprep.subr.bf16.mxu0 %v992
    %1024 = vmatpush1.bf16.msra.mxu0 %v991
    %1025 = vmatprep.subr.bf16.mxu0 %v994
    %1026 = vmatpush1.bf16.msra.mxu0 %v993
    %1027 = vmatprep.subr.bf16.mxu0 %v996
    %1028 = vmatpush1.bf16.msra.mxu0 %v995
    %1029 = vmatprep.subr.bf16.mxu0 0
    %1030 = vmatpush1.bf16.msra.mxu0 0
    %1031 = vmatprep.subr.bf16.mxu0 0
    %1032 = vmatpush1.bf16.msra.mxu0 0
    %1033 = vmatprep.subr.bf16.mxu0 0
    %1034 = vmatpush1.bf16.msra.mxu0 0
    %1035 = vmatprep.subr.bf16.mxu0 0
    %1036 = vmatpush1.bf16.msra.mxu0 0
    %1037 = vmatprep.subr.bf16.mxu0 0
    %1038 = vmatpush1.bf16.msra.mxu0 0
    %1039 = vmatprep.subr.bf16.mxu0 0
    %1040 = vmatpush1.bf16.msra.mxu0 0
    %1041 = vmatprep.subr.bf16.mxu0 0
    %1042 = vmatpush1.bf16.msra.mxu0 0
    %1043 = vmatprep.subr.bf16.mxu0 0
    %1044 = vmatpush1.bf16.msra.mxu0 0
    %1045 = vmatprep.mubr.bf16.mxu0 0
    %1046 = vmatmul.mubr.bf16.gmra.mrb[0].mxu0 %v741
    %v1047 = vpop.f32.mrb[0].mxu0
    %v1048 = vadd.f32 0.0, %v1047
    %v1049 = vpop.f32.mrb[0].mxu0
    %v1050 = vadd.f32 0.0, %v1049
    %v1051 = vpop.f32.mrb[0].mxu0
    %v1052 = vadd.f32 0.0, %v1051
    %v1053 = vpop.f32.mrb[0].mxu0
    %v1054 = vadd.f32 0.0, %v1053
    %1055 = vmatprep.mubr.bf16.mxu0 0
    %1056 = vmatmul.mubr.bf16.gmra.mrb[0].mxu0 %v743
    %v1057 = vpop.f32.mrb[0].mxu0
    %v1058 = vadd.f32 0.0, %v1057
    %v1059 = vpop.f32.mrb[0].mxu0
    %v1060 = vadd.f32 0.0, %v1059
    %v1061 = vpop.f32.mrb[0].mxu0
    %v1062 = vadd.f32 0.0, %v1061
    %v1063 = vpop.f32.mrb[0].mxu0
    %v1064 = vadd.f32 0.0, %v1063
    %1065 = vdwg.mxu0
    %v1082 = vunpack.c.l.b16 %v901
    %v1083 = vunpack.c.h.b16 %v901
    %v1084 = vunpack.c.l.b16 %v902
    %v1085 = vunpack.c.h.b16 %v902
    %v1086 = vunpack.c.l.b16 %v903
    %v1087 = vunpack.c.h.b16 %v903
    %v1088 = vunpack.c.l.b16 %v904
    %v1089 = vunpack.c.h.b16 %v904
    %v1090 = vunpack.c.l.b16 %v905
    %v1091 = vunpack.c.h.b16 %v905
    %v1092 = vunpack.c.l.b16 %v906
    %v1093 = vunpack.c.h.b16 %v906
    %v1094 = vunpack.c.l.b16 %v907
    %v1095 = vunpack.c.h.b16 %v907
    %v1096 = vunpack.c.l.b16 %v908
    %v1097 = vunpack.c.h.b16 %v908
    %v1098 = vunpack.c.l.b16 %v909
    %v1099 = vunpack.c.h.b16 %v909
    %v1100 = vunpack.c.l.b16 %v910
    %v1101 = vunpack.c.h.b16 %v910
    %v1102 = vunpack.c.l.b16 %v911
    %v1103 = vunpack.c.h.b16 %v911
    %v1104 = vunpack.c.l.b16 %v912
    %v1105 = vunpack.c.h.b16 %v912
    %v1106 = vunpack.c.l.b16 %v913
    %v1107 = vunpack.c.h.b16 %v913
    %v1108 = vunpack.c.l.b16 %v914
    %v1109 = vunpack.c.h.b16 %v914
    %v1110 = vunpack.c.l.b16 %v915
    %v1111 = vunpack.c.h.b16 %v915
    %v1112 = vunpack.c.l.b16 %v916
    %v1113 = vunpack.c.h.b16 %v916
    %v1114 = vpack.c.b16 %v1084, %v1082
    %v1115 = vpack.c.b16 %v1085, %v1083
    %v1116 = vpack.c.b16 %v1088, %v1086
    %v1117 = vpack.c.b16 %v1089, %v1087
    %v1118 = vpack.c.b16 %v1092, %v1090
    %v1119 = vpack.c.b16 %v1093, %v1091
    %v1120 = vpack.c.b16 %v1096, %v1094
    %v1121 = vpack.c.b16 %v1097, %v1095
    %v1122 = vpack.c.b16 %v1100, %v1098
    %v1123 = vpack.c.b16 %v1101, %v1099
    %v1124 = vpack.c.b16 %v1104, %v1102
    %v1125 = vpack.c.b16 %v1105, %v1103
    %v1126 = vpack.c.b16 %v1108, %v1106
    %v1127 = vpack.c.b16 %v1109, %v1107
    %v1128 = vpack.c.b16 %v1112, %v1110
    %v1129 = vpack.c.b16 %v1113, %v1111
    %1146 = vmatprep.subr.bf16.mxu0 %v1115
    %1147 = vmatpush1.bf16.msra.mxu0 %v1114
    %1148 = vmatprep.subr.bf16.mxu0 %v1117
    %1149 = vmatpush1.bf16.msra.mxu0 %v1116
    %1150 = vmatprep.subr.bf16.mxu0 %v1119
    %1151 = vmatpush1.bf16.msra.mxu0 %v1118
    %1152 = vmatprep.subr.bf16.mxu0 %v1121
    %1153 = vmatpush1.bf16.msra.mxu0 %v1120
    %1154 = vmatprep.subr.bf16.mxu0 %v1123
    %1155 = vmatpush1.bf16.msra.mxu0 %v1122
    %1156 = vmatprep.subr.bf16.mxu0 %v1125
    %1157 = vmatpush1.bf16.msra.mxu0 %v1124
    %1158 = vmatprep.subr.bf16.mxu0 %v1127
    %1159 = vmatpush1.bf16.msra.mxu0 %v1126
    %1160 = vmatprep.subr.bf16.mxu0 %v1129
    %1161 = vmatpush1.bf16.msra.mxu0 %v1128
    %1162 = vmatprep.subr.bf16.mxu0 0
    %1163 = vmatpush1.bf16.msra.mxu0 0
    %1164 = vmatprep.subr.bf16.mxu0 0
    %1165 = vmatpush1.bf16.msra.mxu0 0
    %1166 = vmatprep.subr.bf16.mxu0 0
    %1167 = vmatpush1.bf16.msra.mxu0 0
    %1168 = vmatprep.subr.bf16.mxu0 0
    %1169 = vmatpush1.bf16.msra.mxu0 0
    %1170 = vmatprep.subr.bf16.mxu0 0
    %1171 = vmatpush1.bf16.msra.mxu0 0
    %1172 = vmatprep.subr.bf16.mxu0 0
    %1173 = vmatpush1.bf16.msra.mxu0 0
    %1174 = vmatprep.subr.bf16.mxu0 0
    %1175 = vmatpush1.bf16.msra.mxu0 0
    %1176 = vmatprep.subr.bf16.mxu0 0
    %1177 = vmatpush1.bf16.msra.mxu0 0
    %1178 = vmatprep.mubr.bf16.mxu0 0
    %1179 = vmatmul.mubr.bf16.gmra.mrb[0].mxu0 %v663
    %v1180 = vpop.f32.mrb[0].mxu0
    %v1181 = vadd.f32 %v1048, %v1180
    %v1182 = vpop.f32.mrb[0].mxu0
    %v1183 = vadd.f32 %v1050, %v1182
    %v1184 = vpop.f32.mrb[0].mxu0
    %v1185 = vadd.f32 %v1052, %v1184
    %v1186 = vpop.f32.mrb[0].mxu0
    %v1187 = vadd.f32 %v1054, %v1186
    %1188 = vmatprep.mubr.bf16.mxu0 0
    %1189 = vmatmul.mubr.bf16.gmra.mrb[0].mxu0 %v665
    %v1190 = vpop.f32.mrb[0].mxu0
    %v1191 = vadd.f32 %v1058, %v1190
    %v1192 = vpop.f32.mrb[0].mxu0
    %v1193 = vadd.f32 %v1060, %v1192
    %v1194 = vpop.f32.mrb[0].mxu0
    %v1195 = vadd.f32 %v1062, %v1194
    %v1196 = vpop.f32.mrb[0].mxu0
    %v1197 = vadd.f32 %v1064, %v1196
    %1198 = vdwg.mxu0
    %v1199 = vld [vmem:[%s4 + $0x100] sm:$0xff]
    %v1200 = vld [vmem:[%s4 + $0x108] sm:$0xff]
    %v1201 = vld [vmem:[%s4 + $0x110] sm:$0xff]
    %v1202 = vld [vmem:[%s4 + $0x118] sm:$0xff]
    %v1203 = vld [vmem:[%s4 + $0x120] sm:$0xff]
    %v1204 = vld [vmem:[%s4 + $0x128] sm:$0xff]
    %v1205 = vld [vmem:[%s4 + $0x130] sm:$0xff]
    %v1206 = vld [vmem:[%s4 + $0x138] sm:$0xff]
    %v1207 = vld [vmem:[%s4 + $0x140] sm:$0xff]
    %v1208 = vld [vmem:[%s4 + $0x148] sm:$0xff]
    %v1209 = vld [vmem:[%s4 + $0x150] sm:$0xff]
    %v1210 = vld [vmem:[%s4 + $0x158] sm:$0xff]
    %v1211 = vld [vmem:[%s4 + $0x160] sm:$0xff]
    %v1212 = vld [vmem:[%s4 + $0x168] sm:$0xff]
    %v1213 = vld [vmem:[%s4 + $0x170] sm:$0xff]
    %v1214 = vld [vmem:[%s4 + $0x178] sm:$0xff]
    %v1231 = vunpack.c.l.b16 %v1199
    %v1232 = vunpack.c.h.b16 %v1199
    %v1233 = vunpack.c.l.b16 %v1200
    %v1234 = vunpack.c.h.b16 %v1200
    %v1235 = vunpack.c.l.b16 %v1201
    %v1236 = vunpack.c.h.b16 %v1201
    %v1237 = vunpack.c.l.b16 %v1202
    %v1238 = vunpack.c.h.b16 %v1202
    %v1239 = vunpack.c.l.b16 %v1203
    %v1240 = vunpack.c.h.b16 %v1203
    %v1241 = vunpack.c.l.b16 %v1204
    %v1242 = vunpack.c.h.b16 %v1204
    %v1243 = vunpack.c.l.b16 %v1205
    %v1244 = vunpack.c.h.b16 %v1205
    %v1245 = vunpack.c.l.b16 %v1206
    %v1246 = vunpack.c.h.b16 %v1206
    %v1247 = vunpack.c.l.b16 %v1207
    %v1248 = vunpack.c.h.b16 %v1207
    %v1249 = vunpack.c.l.b16 %v1208
    %v1250 = vunpack.c.h.b16 %v1208
    %v1251 = vunpack.c.l.b16 %v1209
    %v1252 = vunpack.c.h.b16 %v1209
    %v1253 = vunpack.c.l.b16 %v1210
    %v1254 = vunpack.c.h.b16 %v1210
    %v1255 = vunpack.c.l.b16 %v1211
    %v1256 = vunpack.c.h.b16 %v1211
    %v1257 = vunpack.c.l.b16 %v1212
    %v1258 = vunpack.c.h.b16 %v1212
    %v1259 = vunpack.c.l.b16 %v1213
    %v1260 = vunpack.c.h.b16 %v1213
    %v1261 = vunpack.c.l.b16 %v1214
    %v1262 = vunpack.c.h.b16 %v1214
    %v1263 = vpack.c.b16 %v1233, %v1231
    %v1264 = vpack.c.b16 %v1234, %v1232
    %v1265 = vpack.c.b16 %v1237, %v1235
    %v1266 = vpack.c.b16 %v1238, %v1236
    %v1267 = vpack.c.b16 %v1241, %v1239
    %v1268 = vpack.c.b16 %v1242, %v1240
    %v1269 = vpack.c.b16 %v1245, %v1243
    %v1270 = vpack.c.b16 %v1246, %v1244
    %v1271 = vpack.c.b16 %v1249, %v1247
    %v1272 = vpack.c.b16 %v1250, %v1248
    %v1273 = vpack.c.b16 %v1253, %v1251
    %v1274 = vpack.c.b16 %v1254, %v1252
    %v1275 = vpack.c.b16 %v1257, %v1255
    %v1276 = vpack.c.b16 %v1258, %v1256
    %v1277 = vpack.c.b16 %v1261, %v1259
    %v1278 = vpack.c.b16 %v1262, %v1260
    %1295 = vmatprep.subr.bf16.mxu0 %v1264
    %1296 = vmatpush1.bf16.msra.mxu0 %v1263
    %1297 = vmatprep.subr.bf16.mxu0 %v1266
    %1298 = vmatpush1.bf16.msra.mxu0 %v1265
    %1299 = vmatprep.subr.bf16.mxu0 %v1268
    %1300 = vmatpush1.bf16.msra.mxu0 %v1267
    %1301 = vmatprep.subr.bf16.mxu0 %v1270
    %1302 = vmatpush1.bf16.msra.mxu0 %v1269
    %1303 = vmatprep.subr.bf16.mxu0 %v1272
    %1304 = vmatpush1.bf16.msra.mxu0 %v1271
    %1305 = vmatprep.subr.bf16.mxu0 %v1274
    %1306 = vmatpush1.bf16.msra.mxu0 %v1273
    %1307 = vmatprep.subr.bf16.mxu0 %v1276
    %1308 = vmatpush1.bf16.msra.mxu0 %v1275
    %1309 = vmatprep.subr.bf16.mxu0 %v1278
    %1310 = vmatpush1.bf16.msra.mxu0 %v1277
    %1311 = vmatprep.subr.bf16.mxu0 0
    %1312 = vmatpush1.bf16.msra.mxu0 0
    %1313 = vmatprep.subr.bf16.mxu0 0
    %1314 = vmatpush1.bf16.msra.mxu0 0
    %1315 = vmatprep.subr.bf16.mxu0 0
    %1316 = vmatpush1.bf16.msra.mxu0 0
    %1317 = vmatprep.subr.bf16.mxu0 0
    %1318 = vmatpush1.bf16.msra.mxu0 0
    %1319 = vmatprep.subr.bf16.mxu0 0
    %1320 = vmatpush1.bf16.msra.mxu0 0
    %1321 = vmatprep.subr.bf16.mxu0 0
    %1322 = vmatpush1.bf16.msra.mxu0 0
    %1323 = vmatprep.subr.bf16.mxu0 0
    %1324 = vmatpush1.bf16.msra.mxu0 0
    %1325 = vmatprep.subr.bf16.mxu0 0
    %1326 = vmatpush1.bf16.msra.mxu0 0
    %1327 = vmatprep.mubr.bf16.mxu0 0
    %1328 = vmatmul.mubr.bf16.gmra.mrb[0].mxu0 %v819
    %v1329 = vpop.f32.mrb[0].mxu0
    %v1330 = vadd.f32 0.0, %v1329
    %v1331 = vpop.f32.mrb[0].mxu0
    %v1332 = vadd.f32 0.0, %v1331
    %v1333 = vpop.f32.mrb[0].mxu0
    %v1334 = vadd.f32 0.0, %v1333
    %v1335 = vpop.f32.mrb[0].mxu0
    %v1336 = vadd.f32 0.0, %v1335
    %1337 = vmatprep.mubr.bf16.mxu0 0
    %1338 = vmatmul.mubr.bf16.gmra.mrb[0].mxu0 %v821
    %v1339 = vpop.f32.mrb[0].mxu0
    %v1340 = vadd.f32 0.0, %v1339
    %v1341 = vpop.f32.mrb[0].mxu0
    %v1342 = vadd.f32 0.0, %v1341
    %v1343 = vpop.f32.mrb[0].mxu0
    %v1344 = vadd.f32 0.0, %v1343
    %v1345 = vpop.f32.mrb[0].mxu0
    %v1346 = vadd.f32 0.0, %v1345
    %1347 = vdwg.mxu0
    %v1348 = vadd.f32 %v1181, %v1330
    %v1349 = vadd.f32 %v1183, %v1332
    %v1350 = vadd.f32 %v1185, %v1334
    %v1351 = vadd.f32 %v1187, %v1336
    %v1352 = vadd.f32 %v1191, %v1340
    %v1353 = vadd.f32 %v1193, %v1342
    %v1354 = vadd.f32 %v1195, %v1344
    %v1355 = vadd.f32 %v1197, %v1346
    %v1356 = vld [vmem:[%s4 + $0x180] sm:$0xff]
    %v1357 = vld [vmem:[%s4 + $0x188] sm:$0xff]
    %v1358 = vld [vmem:[%s4 + $0x190] sm:$0xff]
    %v1359 = vld [vmem:[%s4 + $0x198] sm:$0xff]
    %v1360 = vld [vmem:[%s4 + $0x1a0] sm:$0xff]
    %v1361 = vld [vmem:[%s4 + $0x1a8] sm:$0xff]
    %v1362 = vld [vmem:[%s4 + $0x1b0] sm:$0xff]
    %v1363 = vld [vmem:[%s4 + $0x1b8] sm:$0xff]
    %v1364 = vld [vmem:[%s4 + $0x1c0] sm:$0xff]
    %v1365 = vld [vmem:[%s4 + $0x1c8] sm:$0xff]
    %v1366 = vld [vmem:[%s4 + $0x1d0] sm:$0xff]
    %v1367 = vld [vmem:[%s4 + $0x1d8] sm:$0xff]
    %v1368 = vld [vmem:[%s4 + $0x1e0] sm:$0xff]
    %v1369 = vld [vmem:[%s4 + $0x1e8] sm:$0xff]
    %v1370 = vld [vmem:[%s4 + $0x1f0] sm:$0xff]
    %v1371 = vld [vmem:[%s4 + $0x1f8] sm:$0xff]
    %v1388 = vunpack.c.l.b16 %v1356
    %v1389 = vunpack.c.h.b16 %v1356
    %v1390 = vunpack.c.l.b16 %v1357
    %v1391 = vunpack.c.h.b16 %v1357
    %v1392 = vunpack.c.l.b16 %v1358
    %v1393 = vunpack.c.h.b16 %v1358
    %v1394 = vunpack.c.l.b16 %v1359
    %v1395 = vunpack.c.h.b16 %v1359
    %v1396 = vunpack.c.l.b16 %v1360
    %v1397 = vunpack.c.h.b16 %v1360
    %v1398 = vunpack.c.l.b16 %v1361
    %v1399 = vunpack.c.h.b16 %v1361
    %v1400 = vunpack.c.l.b16 %v1362
    %v1401 = vunpack.c.h.b16 %v1362
    %v1402 = vunpack.c.l.b16 %v1363
    %v1403 = vunpack.c.h.b16 %v1363
    %v1404 = vunpack.c.l.b16 %v1364
    %v1405 = vunpack.c.h.b16 %v1364
    %v1406 = vunpack.c.l.b16 %v1365
    %v1407 = vunpack.c.h.b16 %v1365
    %v1408 = vunpack.c.l.b16 %v1366
    %v1409 = vunpack.c.h.b16 %v1366
    %v1410 = vunpack.c.l.b16 %v1367
    %v1411 = vunpack.c.h.b16 %v1367
    %v1412 = vunpack.c.l.b16 %v1368
    %v1413 = vunpack.c.h.b16 %v1368
    %v1414 = vunpack.c.l.b16 %v1369
    %v1415 = vunpack.c.h.b16 %v1369
    %v1416 = vunpack.c.l.b16 %v1370
    %v1417 = vunpack.c.h.b16 %v1370
    %v1418 = vunpack.c.l.b16 %v1371
    %v1419 = vunpack.c.h.b16 %v1371
    %v1420 = vpack.c.b16 %v1390, %v1388
    %v1421 = vpack.c.b16 %v1391, %v1389
    %v1422 = vpack.c.b16 %v1394, %v1392
    %v1423 = vpack.c.b16 %v1395, %v1393
    %v1424 = vpack.c.b16 %v1398, %v1396
    %v1425 = vpack.c.b16 %v1399, %v1397
    %v1426 = vpack.c.b16 %v1402, %v1400
    %v1427 = vpack.c.b16 %v1403, %v1401
    %v1428 = vpack.c.b16 %v1406, %v1404
    %v1429 = vpack.c.b16 %v1407, %v1405
    %v1430 = vpack.c.b16 %v1410, %v1408
    %v1431 = vpack.c.b16 %v1411, %v1409
    %v1432 = vpack.c.b16 %v1414, %v1412
    %v1433 = vpack.c.b16 %v1415, %v1413
    %v1434 = vpack.c.b16 %v1418, %v1416
    %v1435 = vpack.c.b16 %v1419, %v1417
    %1452 = vmatprep.subr.bf16.mxu0 %v1421
    %1453 = vmatpush1.bf16.msra.mxu0 %v1420
    %1454 = vmatprep.subr.bf16.mxu0 %v1423
    %1455 = vmatpush1.bf16.msra.mxu0 %v1422
    %1456 = vmatprep.subr.bf16.mxu0 %v1425
    %1457 = vmatpush1.bf16.msra.mxu0 %v1424
    %1458 = vmatprep.subr.bf16.mxu0 %v1427
    %1459 = vmatpush1.bf16.msra.mxu0 %v1426
    %1460 = vmatprep.subr.bf16.mxu0 %v1429
    %1461 = vmatpush1.bf16.msra.mxu0 %v1428
    %1462 = vmatprep.subr.bf16.mxu0 %v1431
    %1463 = vmatpush1.bf16.msra.mxu0 %v1430
    %1464 = vmatprep.subr.bf16.mxu0 %v1433
    %1465 = vmatpush1.bf16.msra.mxu0 %v1432
    %1466 = vmatprep.subr.bf16.mxu0 %v1435
    %1467 = vmatpush1.bf16.msra.mxu0 %v1434
    %1468 = vmatprep.subr.bf16.mxu0 0
    %1469 = vmatpush1.bf16.msra.mxu0 0
    %1470 = vmatprep.subr.bf16.mxu0 0
    %1471 = vmatpush1.bf16.msra.mxu0 0
    %1472 = vmatprep.subr.bf16.mxu0 0
    %1473 = vmatpush1.bf16.msra.mxu0 0
    %1474 = vmatprep.subr.bf16.mxu0 0
    %1475 = vmatpush1.bf16.msra.mxu0 0
    %1476 = vmatprep.subr.bf16.mxu0 0
    %1477 = vmatpush1.bf16.msra.mxu0 0
    %1478 = vmatprep.subr.bf16.mxu0 0
    %1479 = vmatpush1.bf16.msra.mxu0 0
    %1480 = vmatprep.subr.bf16.mxu0 0
    %1481 = vmatpush1.bf16.msra.mxu0 0
    %1482 = vmatprep.subr.bf16.mxu0 0
    %1483 = vmatpush1.bf16.msra.mxu0 0
    %1484 = vmatprep.mubr.bf16.mxu0 0
    %1485 = vmatmul.mubr.bf16.gmra.mrb[0].mxu0 %v897
    %v1486 = vpop.f32.mrb[0].mxu0
    %v1487 = vadd.f32 0.0, %v1486
    %v1488 = vpop.f32.mrb[0].mxu0
    %v1489 = vadd.f32 0.0, %v1488
    %v1490 = vpop.f32.mrb[0].mxu0
    %v1491 = vadd.f32 0.0, %v1490
    %v1492 = vpop.f32.mrb[0].mxu0
    %v1493 = vadd.f32 0.0, %v1492
    %1494 = vmatprep.mubr.bf16.mxu0 0
    %1495 = vmatmul.mubr.bf16.gmra.mrb[0].mxu0 %v899
    %v1496 = vpop.f32.mrb[0].mxu0
    %v1497 = vadd.f32 0.0, %v1496
    %v1498 = vpop.f32.mrb[0].mxu0
    %v1499 = vadd.f32 0.0, %v1498
    %v1500 = vpop.f32.mrb[0].mxu0
    %v1501 = vadd.f32 0.0, %v1500
    %v1502 = vpop.f32.mrb[0].mxu0
    %v1503 = vadd.f32 0.0, %v1502
    %1504 = vdwg.mxu0
    %v1505 = vadd.f32 %v1348, %v1487
    %v1506 = vadd.f32 %v1349, %v1489
    %v1507 = vadd.f32 %v1350, %v1491
    %v1508 = vadd.f32 %v1351, %v1493
    %v1509 = vadd.f32 %v1352, %v1497
    %v1510 = vadd.f32 %v1353, %v1499
    %v1511 = vadd.f32 %v1354, %v1501
    %v1512 = vadd.f32 %v1355, %v1503
    %1513 = vmatprep.subr.bf16.mxu0 %v982
    %1514 = vmatpush1.bf16.msra.mxu0 %v981
    %1515 = vmatprep.subr.bf16.mxu0 %v984
    %1516 = vmatpush1.bf16.msra.mxu0 %v983
    %1517 = vmatprep.subr.bf16.mxu0 %v986
    %1518 = vmatpush1.bf16.msra.mxu0 %v985
    %1519 = vmatprep.subr.bf16.mxu0 %v988
    %1520 = vmatpush1.bf16.msra.mxu0 %v987
    %1521 = vmatprep.subr.bf16.mxu0 %v990
    %1522 = vmatpush1.bf16.msra.mxu0 %v989
    %1523 = vmatprep.subr.bf16.mxu0 %v992
    %1524 = vmatpush1.bf16.msra.mxu0 %v991
    %1525 = vmatprep.subr.bf16.mxu0 %v994
    %1526 = vmatpush1.bf16.msra.mxu0 %v993
    %1527 = vmatprep.subr.bf16.mxu0 %v996
    %1528 = vmatpush1.bf16.msra.mxu0 %v995
    %1529 = vmatprep.subr.bf16.mxu0 0
    %1530 = vmatpush1.bf16.msra.mxu0 0
    %1531 = vmatprep.subr.bf16.mxu0 0
    %1532 = vmatpush1.bf16.msra.mxu0 0
    %1533 = vmatprep.subr.bf16.mxu0 0
    %1534 = vmatpush1.bf16.msra.mxu0 0
    %1535 = vmatprep.subr.bf16.mxu0 0
    %1536 = vmatpush1.bf16.msra.mxu0 0
    %1537 = vmatprep.subr.bf16.mxu0 0
    %1538 = vmatpush1.bf16.msra.mxu0 0
    %1539 = vmatprep.subr.bf16.mxu0 0
    %1540 = vmatpush1.bf16.msra.mxu0 0
    %1541 = vmatprep.subr.bf16.mxu0 0
    %1542 = vmatpush1.bf16.msra.mxu0 0
    %1543 = vmatprep.subr.bf16.mxu0 0
    %1544 = vmatpush1.bf16.msra.mxu0 0
    %1545 = vmatprep.mubr.bf16.mxu0 0
    %1546 = vmatmul.mubr.bf16.gmra.mrb[0].mxu0 %v742
    %v1547 = vpop.f32.mrb[0].mxu0
    %v1548 = vadd.f32 0.0, %v1547
    %v1549 = vpop.f32.mrb[0].mxu0
    %v1550 = vadd.f32 0.0, %v1549
    %v1551 = vpop.f32.mrb[0].mxu0
    %v1552 = vadd.f32 0.0, %v1551
    %v1553 = vpop.f32.mrb[0].mxu0
    %v1554 = vadd.f32 0.0, %v1553
    %1555 = vmatprep.mubr.bf16.mxu0 0
    %1556 = vmatmul.mubr.bf16.gmra.mrb[0].mxu0 %v744
    %v1557 = vpop.f32.mrb[0].mxu0
    %v1558 = vadd.f32 0.0, %v1557
    %v1559 = vpop.f32.mrb[0].mxu0
    %v1560 = vadd.f32 0.0, %v1559
    %v1561 = vpop.f32.mrb[0].mxu0
    %v1562 = vadd.f32 0.0, %v1561
    %v1563 = vpop.f32.mrb[0].mxu0
    %v1564 = vadd.f32 0.0, %v1563
    %1565 = vdwg.mxu0
    %1566 = vmatprep.subr.bf16.mxu0 %v1115
    %1567 = vmatpush1.bf16.msra.mxu0 %v1114
    %1568 = vmatprep.subr.bf16.mxu0 %v1117
    %1569 = vmatpush1.bf16.msra.mxu0 %v1116
    %1570 = vmatprep.subr.bf16.mxu0 %v1119
    %1571 = vmatpush1.bf16.msra.mxu0 %v1118
    %1572 = vmatprep.subr.bf16.mxu0 %v1121
    %1573 = vmatpush1.bf16.msra.mxu0 %v1120
    %1574 = vmatprep.subr.bf16.mxu0 %v1123
    %1575 = vmatpush1.bf16.msra.mxu0 %v1122
    %1576 = vmatprep.subr.bf16.mxu0 %v1125
    %1577 = vmatpush1.bf16.msra.mxu0 %v1124
    %1578 = vmatprep.subr.bf16.mxu0 %v1127
    %1579 = vmatpush1.bf16.msra.mxu0 %v1126
    %1580 = vmatprep.subr.bf16.mxu0 %v1129
    %1581 = vmatpush1.bf16.msra.mxu0 %v1128
    %1582 = vmatprep.subr.bf16.mxu0 0
    %1583 = vmatpush1.bf16.msra.mxu0 0
    %1584 = vmatprep.subr.bf16.mxu0 0
    %1585 = vmatpush1.bf16.msra.mxu0 0
    %1586 = vmatprep.subr.bf16.mxu0 0
    %1587 = vmatpush1.bf16.msra.mxu0 0
    %1588 = vmatprep.subr.bf16.mxu0 0
    %1589 = vmatpush1.bf16.msra.mxu0 0
    %1590 = vmatprep.subr.bf16.mxu0 0
    %1591 = vmatpush1.bf16.msra.mxu0 0
    %1592 = vmatprep.subr.bf16.mxu0 0
    %1593 = vmatpush1.bf16.msra.mxu0 0
    %1594 = vmatprep.subr.bf16.mxu0 0
    %1595 = vmatpush1.bf16.msra.mxu0 0
    %1596 = vmatprep.subr.bf16.mxu0 0
    %1597 = vmatpush1.bf16.msra.mxu0 0
    %1598 = vmatprep.mubr.bf16.mxu0 0
    %1599 = vmatmul.mubr.bf16.gmra.mrb[0].mxu0 %v664
    %v1600 = vpop.f32.mrb[0].mxu0
    %v1601 = vadd.f32 %v1548, %v1600
    %v1602 = vpop.f32.mrb[0].mxu0
    %v1603 = vadd.f32 %v1550, %v1602
    %v1604 = vpop.f32.mrb[0].mxu0
    %v1605 = vadd.f32 %v1552, %v1604
    %v1606 = vpop.f32.mrb[0].mxu0
    %v1607 = vadd.f32 %v1554, %v1606
    %1608 = vmatprep.mubr.bf16.mxu0 0
    %1609 = vmatmul.mubr.bf16.gmra.mrb[0].mxu0 %v666
    %v1610 = vpop.f32.mrb[0].mxu0
    %v1611 = vadd.f32 %v1558, %v1610
    %v1612 = vpop.f32.mrb[0].mxu0
    %v1613 = vadd.f32 %v1560, %v1612
    %v1614 = vpop.f32.mrb[0].mxu0
    %v1615 = vadd.f32 %v1562, %v1614
    %v1616 = vpop.f32.mrb[0].mxu0
    %v1617 = vadd.f32 %v1564, %v1616
    %1618 = vdwg.mxu0
    %1619 = vmatprep.subr.bf16.mxu0 %v1264
    %1620 = vmatpush1.bf16.msra.mxu0 %v1263
    %1621 = vmatprep.subr.bf16.mxu0 %v1266
    %1622 = vmatpush1.bf16.msra.mxu0 %v1265
    %1623 = vmatprep.subr.bf16.mxu0 %v1268
    %1624 = vmatpush1.bf16.msra.mxu0 %v1267
    %1625 = vmatprep.subr.bf16.mxu0 %v1270
    %1626 = vmatpush1.bf16.msra.mxu0 %v1269
    %1627 = vmatprep.subr.bf16.mxu0 %v1272
    %1628 = vmatpush1.bf16.msra.mxu0 %v1271
    %1629 = vmatprep.subr.bf16.mxu0 %v1274
    %1630 = vmatpush1.bf16.msra.mxu0 %v1273
    %1631 = vmatprep.subr.bf16.mxu0 %v1276
    %1632 = vmatpush1.bf16.msra.mxu0 %v1275
    %1633 = vmatprep.subr.bf16.mxu0 %v1278
    %1634 = vmatpush1.bf16.msra.mxu0 %v1277
    %1635 = vmatprep.subr.bf16.mxu0 0
    %1636 = vmatpush1.bf16.msra.mxu0 0
    %1637 = vmatprep.subr.bf16.mxu0 0
    %1638 = vmatpush1.bf16.msra.mxu0 0
    %1639 = vmatprep.subr.bf16.mxu0 0
    %1640 = vmatpush1.bf16.msra.mxu0 0
    %1641 = vmatprep.subr.bf16.mxu0 0
    %1642 = vmatpush1.bf16.msra.mxu0 0
    %1643 = vmatprep.subr.bf16.mxu0 0
    %1644 = vmatpush1.bf16.msra.mxu0 0
    %1645 = vmatprep.subr.bf16.mxu0 0
    %1646 = vmatpush1.bf16.msra.mxu0 0
    %1647 = vmatprep.subr.bf16.mxu0 0
    %1648 = vmatpush1.bf16.msra.mxu0 0
    %1649 = vmatprep.subr.bf16.mxu0 0
    %1650 = vmatpush1.bf16.msra.mxu0 0
    %1651 = vmatprep.mubr.bf16.mxu0 0
    %1652 = vmatmul.mubr.bf16.gmra.mrb[0].mxu0 %v820
    %v1653 = vpop.f32.mrb[0].mxu0
    %v1654 = vadd.f32 0.0, %v1653
    %v1655 = vpop.f32.mrb[0].mxu0
    %v1656 = vadd.f32 0.0, %v1655
    %v1657 = vpop.f32.mrb[0].mxu0
    %v1658 = vadd.f32 0.0, %v1657
    %v1659 = vpop.f32.mrb[0].mxu0
    %v1660 = vadd.f32 0.0, %v1659
    %1661 = vmatprep.mubr.bf16.mxu0 0
    %1662 = vmatmul.mubr.bf16.gmra.mrb[0].mxu0 %v822
    %v1663 = vpop.f32.mrb[0].mxu0
    %v1664 = vadd.f32 0.0, %v1663
    %v1665 = vpop.f32.mrb[0].mxu0
    %v1666 = vadd.f32 0.0, %v1665
    %v1667 = vpop.f32.mrb[0].mxu0
    %v1668 = vadd.f32 0.0, %v1667
    %v1669 = vpop.f32.mrb[0].mxu0
    %v1670 = vadd.f32 0.0, %v1669
    %1671 = vdwg.mxu0
    %v1672 = vadd.f32 %v1601, %v1654
    %v1673 = vadd.f32 %v1603, %v1656
    %v1674 = vadd.f32 %v1605, %v1658
    %v1675 = vadd.f32 %v1607, %v1660
    %v1676 = vadd.f32 %v1611, %v1664
    %v1677 = vadd.f32 %v1613, %v1666
    %v1678 = vadd.f32 %v1615, %v1668
    %v1679 = vadd.f32 %v1617, %v1670
    %1680 = vmatprep.subr.bf16.mxu0 %v1421
    %1681 = vmatpush1.bf16.msra.mxu0 %v1420
    %1682 = vmatprep.subr.bf16.mxu0 %v1423
    %1683 = vmatpush1.bf16.msra.mxu0 %v1422
    %1684 = vmatprep.subr.bf16.mxu0 %v1425
    %1685 = vmatpush1.bf16.msra.mxu0 %v1424
    %1686 = vmatprep.subr.bf16.mxu0 %v1427
    %1687 = vmatpush1.bf16.msra.mxu0 %v1426
    %1688 = vmatprep.subr.bf16.mxu0 %v1429
    %1689 = vmatpush1.bf16.msra.mxu0 %v1428
    %1690 = vmatprep.subr.bf16.mxu0 %v1431
    %1691 = vmatpush1.bf16.msra.mxu0 %v1430
    %1692 = vmatprep.subr.bf16.mxu0 %v1433
    %1693 = vmatpush1.bf16.msra.mxu0 %v1432
    %1694 = vmatprep.subr.bf16.mxu0 %v1435
    %1695 = vmatpush1.bf16.msra.mxu0 %v1434
    %1696 = vmatprep.subr.bf16.mxu0 0
    %1697 = vmatpush1.bf16.msra.mxu0 0
    %1698 = vmatprep.subr.bf16.mxu0 0
    %1699 = vmatpush1.bf16.msra.mxu0 0
    %1700 = vmatprep.subr.bf16.mxu0 0
    %1701 = vmatpush1.bf16.msra.mxu0 0
    %1702 = vmatprep.subr.bf16.mxu0 0
    %1703 = vmatpush1.bf16.msra.mxu0 0
    %1704 = vmatprep.subr.bf16.mxu0 0
    %1705 = vmatpush1.bf16.msra.mxu0 0
    %1706 = vmatprep.subr.bf16.mxu0 0
    %1707 = vmatpush1.bf16.msra.mxu0 0
    %1708 = vmatprep.subr.bf16.mxu0 0
    %1709 = vmatpush1.bf16.msra.mxu0 0
    %1710 = vmatprep.subr.bf16.mxu0 0
    %1711 = vmatpush1.bf16.msra.mxu0 0
    %1712 = vmatprep.mubr.bf16.mxu0 0
    %1713 = vmatmul.mubr.bf16.gmra.mrb[0].mxu0 %v898
    %v1714 = vpop.f32.mrb[0].mxu0
    %v1715 = vadd.f32 0.0, %v1714
    %v1716 = vpop.f32.mrb[0].mxu0
    %v1717 = vadd.f32 0.0, %v1716
    %v1718 = vpop.f32.mrb[0].mxu0
    %v1719 = vadd.f32 0.0, %v1718
    %v1720 = vpop.f32.mrb[0].mxu0
    %v1721 = vadd.f32 0.0, %v1720
    %1722 = vmatprep.mubr.bf16.mxu0 0
    %1723 = vmatmul.mubr.bf16.gmra.mrb[0].mxu0 %v900
    %v1724 = vpop.f32.mrb[0].mxu0
    %v1725 = vadd.f32 0.0, %v1724
    %v1726 = vpop.f32.mrb[0].mxu0
    %v1727 = vadd.f32 0.0, %v1726
    %v1728 = vpop.f32.mrb[0].mxu0
    %v1729 = vadd.f32 0.0, %v1728
    %v1730 = vpop.f32.mrb[0].mxu0
    %v1731 = vadd.f32 0.0, %v1730
    %1732 = vdwg.mxu0
    %v1733 = vadd.f32 %v1672, %v1715
    %v1734 = vadd.f32 %v1673, %v1717
    %v1735 = vadd.f32 %v1674, %v1719
    %v1736 = vadd.f32 %v1675, %v1721
    %v1737 = vadd.f32 %v1676, %v1725
    %v1738 = vadd.f32 %v1677, %v1727
    %v1739 = vadd.f32 %v1678, %v1729
    %v1740 = vadd.f32 %v1679, %v1731
    %v1741 = vadd.f32 %v1505, %v1507
    %v1742 = vadd.f32 %v1741, %v1509
    %v1743 = vsel %vm400, %v1511, 0.0
    %v1744 = vadd.f32 %v1742, %v1743
    %v1745 = vrot.slane %v1744, 4
    %v1746 = vadd.f32 %v1744, %v1745
    %v1747 = vrot.slane %v1746, 2
    %v1748 = vadd.f32 %v1746, %v1747
    %v1749 = vrot.slane %v1748, 1
    %v1750 = vadd.f32 %v1748, %v1749
    %v1751 = vadd.f32 %v1506, %v1508
    %v1752 = vadd.f32 %v1751, %v1510
    %v1753 = vsel %vm400, %v1512, 0.0
    %v1754 = vadd.f32 %v1752, %v1753
    %v1755 = vrot.slane %v1754, 4
    %v1756 = vadd.f32 %v1754, %v1755
    %v1757 = vrot.slane %v1756, 2
    %v1758 = vadd.f32 %v1756, %v1757
    %v1759 = vrot.slane %v1758, 1
    %v1760 = vadd.f32 %v1758, %v1759
    %v1761 = vmul.f32 %v1505, %v1505
    %v1762 = vmul.f32 %v1506, %v1506
    %v1763 = vmul.f32 %v1507, %v1507
    %v1764 = vmul.f32 %v1508, %v1508
    %v1765 = vmul.f32 %v1509, %v1509
    %v1766 = vmul.f32 %v1510, %v1510
    %v1767 = vmul.f32 %v1511, %v1511
    %v1768 = vmul.f32 %v1512, %v1512
    %v1769 = vadd.f32 %v1761, %v1763
    %v1770 = vadd.f32 %v1769, %v1765
    %v1771 = vsel %vm400, %v1767, 0.0
    %v1772 = vadd.f32 %v1770, %v1771
    %v1773 = vrot.slane %v1772, 4
    %v1774 = vadd.f32 %v1772, %v1773
    %v1775 = vrot.slane %v1774, 2
    %v1776 = vadd.f32 %v1774, %v1775
    %v1777 = vrot.slane %v1776, 1
    %v1778 = vadd.f32 %v1776, %v1777
    %v1779 = vadd.f32 %v1762, %v1764
    %v1780 = vadd.f32 %v1779, %v1766
    %v1781 = vsel %vm400, %v1768, 0.0
    %v1782 = vadd.f32 %v1780, %v1781
    %v1783 = vrot.slane %v1782, 4
    %v1784 = vadd.f32 %v1782, %v1783
    %v1785 = vrot.slane %v1784, 2
    %v1786 = vadd.f32 %v1784, %v1785
    %v1787 = vrot.slane %v1786, 1
    %v1788 = vadd.f32 %v1786, %v1787
    %v1789 = vadd.f32 %v1733, %v1735
    %v1790 = vadd.f32 %v1789, %v1737
    %v1791 = vsel %vm400, %v1739, 0.0
    %v1792 = vadd.f32 %v1790, %v1791
    %v1793 = vrot.slane %v1792, 4
    %v1794 = vadd.f32 %v1792, %v1793
    %v1795 = vrot.slane %v1794, 2
    %v1796 = vadd.f32 %v1794, %v1795
    %v1797 = vrot.slane %v1796, 1
    %v1798 = vadd.f32 %v1796, %v1797
    %v1799 = vadd.f32 %v1734, %v1736
    %v1800 = vadd.f32 %v1799, %v1738
    %v1801 = vsel %vm400, %v1740, 0.0
    %v1802 = vadd.f32 %v1800, %v1801
    %v1803 = vrot.slane %v1802, 4
    %v1804 = vadd.f32 %v1802, %v1803
    %v1805 = vrot.slane %v1804, 2
    %v1806 = vadd.f32 %v1804, %v1805
    %v1807 = vrot.slane %v1806, 1
    %v1808 = vadd.f32 %v1806, %v1807
    %v1809 = vadd.f32 %v1750, %v1798
    %v1810 = vadd.f32 %v1760, %v1808
    %v1811 = vmul.f32 %v1733, %v1733
    %v1812 = vmul.f32 %v1734, %v1734
    %v1813 = vmul.f32 %v1735, %v1735
    %v1814 = vmul.f32 %v1736, %v1736
    %v1815 = vmul.f32 %v1737, %v1737
    %v1816 = vmul.f32 %v1738, %v1738
    %v1817 = vmul.f32 %v1739, %v1739
    %v1818 = vmul.f32 %v1740, %v1740
    %v1819 = vadd.f32 %v1811, %v1813
    %v1820 = vadd.f32 %v1819, %v1815
    %v1821 = vsel %vm400, %v1817, 0.0
    %v1822 = vadd.f32 %v1820, %v1821
    %v1823 = vrot.slane %v1822, 4
    %v1824 = vadd.f32 %v1822, %v1823
    %v1825 = vrot.slane %v1824, 2
    %v1826 = vadd.f32 %v1824, %v1825
    %v1827 = vrot.slane %v1826, 1
    %v1828 = vadd.f32 %v1826, %v1827
    %v1829 = vadd.f32 %v1812, %v1814
    %v1830 = vadd.f32 %v1829, %v1816
    %v1831 = vsel %vm400, %v1818, 0.0
    %v1832 = vadd.f32 %v1830, %v1831
    %v1833 = vrot.slane %v1832, 4
    %v1834 = vadd.f32 %v1832, %v1833
    %v1835 = vrot.slane %v1834, 2
    %v1836 = vadd.f32 %v1834, %v1835
    %v1837 = vrot.slane %v1836, 1
    %v1838 = vadd.f32 %v1836, %v1837
    %v1839 = vadd.f32 %v1778, %v1828
    %v1840 = vadd.f32 %v1788, %v1838
    %v1841 = vmul.f32 %v1809, 0.02
    %v1842 = vmul.f32 %v1810, 0.02
    %v1843 = vmul.f32 %v1839, 0.02
    %v1844 = vmul.f32 %v1840, 0.02
    %v1845 = vmul.f32 %v1841, %v1841
    %v1846 = vmul.f32 %v1842, %v1842
    %v1847 = vsub.f32 %v1843, %v1845
    %v1848 = vsub.f32 %v1844, %v1846
    %v1849 = vld [vmem:[%s5] ss:$2 sm:$0x3]
    %v1850 = vadd.f32 %v1847, 1e-05
    %v1851 = vadd.f32 %v1848, 1e-05
    %v1852 = vrsqrt.pop %v1850
    %v1853 = vrsqrt.pop %v1851
    %v1856 = vcombine.low %v1852, %v1853
    %v1858 = vunpack.c.l.s4 1966171168
    %v1859 = vunpack.c.0.s8 %v1858
    %v1860 = vlaneseq
    %v1861 = vshrl.u32 %v1860, 7
    %v1862 = vsub.s32 %v1859, %v1861
    %v1863 = vrot.slane %v1856, %v1862
    %v1865 = vunpack.c.l.s4 1966171168
    %v1866 = vunpack.c.0.s8 %v1865
    %v1867 = vlaneseq
    %v1868 = vshrl.u32 %v1867, 7
    %v1869 = vsub.s32 %v1866, %v1868
    %v1870 = vrot.slane %v1863, %v1869
    %v1872 = vmul.f32 %v1849, %v1870
    %s1873 = scalar_lea.vmem %s5, 1
    %v1874 = vld [vmem:[%s1873] ss:$2 sm:$0x3]
    %v1876 = vlaneseq
    %v1877 = vshrl.u32 %v1876, 7
    %v1878 = vsub.s32 0, %v1877
    %v1879 = vrot.slane %v1872, %v1878
    %v1880 = vlaneseq
    %v1881 = vshrl.u32 %v1880, 7
    %v1882 = vsub.s32 1, %v1881
    %v1883 = vrot.slane %v1872, %v1882
    %v1886 = vmul.f32 %v1841, %v1879
    %v1887 = vmul.f32 %v1842, %v1883
    %v1890 = vcombine.low %v1886, %v1887
    %v1892 = vunpack.c.l.s4 1966171168
    %v1893 = vunpack.c.0.s8 %v1892
    %v1894 = vlaneseq
    %v1895 = vshrl.u32 %v1894, 7
    %v1896 = vsub.s32 %v1893, %v1895
    %v1897 = vrot.slane %v1890, %v1896
    %v1899 = vunpack.c.l.s4 1966171168
    %v1900 = vunpack.c.0.s8 %v1899
    %v1901 = vlaneseq
    %v1902 = vshrl.u32 %v1901, 7
    %v1903 = vsub.s32 %v1900, %v1902
    %v1904 = vrot.slane %v1897, %v1903
    %v1906 = vsub.f32 %v1874, %v1904
    %v1907 = vmul.f32 %v1505, %v1879
    %v1908 = vmul.f32 %v1506, %v1883
    %v1909 = vmul.f32 %v1507, %v1879
    %v1910 = vmul.f32 %v1508, %v1883
    %v1911 = vmul.f32 %v1509, %v1879
    %v1912 = vmul.f32 %v1510, %v1883
    %v1913 = vmul.f32 %v1511, %v1879
    %v1914 = vmul.f32 %v1512, %v1883
    %v1916 = vlaneseq
    %v1917 = vshrl.u32 %v1916, 7
    %v1918 = vsub.s32 0, %v1917
    %v1919 = vrot.slane %v1906, %v1918
    %v1920 = vlaneseq
    %v1921 = vshrl.u32 %v1920, 7
    %v1922 = vsub.s32 1, %v1921
    %v1923 = vrot.slane %v1906, %v1922
    %v1926 = vadd.f32 %v1907, %v1919
    %v1927 = vadd.f32 %v1908, %v1923
    %v1928 = vadd.f32 %v1909, %v1919
    %v1929 = vadd.f32 %v1910, %v1923
    %v1930 = vadd.f32 %v1911, %v1919
    %v1931 = vadd.f32 %v1912, %v1923
    %v1932 = vadd.f32 %v1913, %v1919
    %v1933 = vadd.f32 %v1914, %v1923
    %v1934 = vadd.f32 %v1926, %v1927
    %v1935 = vadd.f32 %v1928, %v1929
    %v1936 = vadd.f32 %v1930, %v1931
    %v1937 = vadd.f32 %v1932, %v1933
    %v1938 = vmax.f32 %v1934, 0.0
    %v1939 = vmax.f32 %v1935, 0.0
    %v1940 = vmax.f32 %v1936, 0.0
    %v1941 = vmax.f32 %v1937, 0.0
    %v1942 = vmul.f32 %v1733, %v1879
    %v1943 = vmul.f32 %v1734, %v1883
    %v1944 = vmul.f32 %v1735, %v1879
    %v1945 = vmul.f32 %v1736, %v1883
    %v1946 = vmul.f32 %v1737, %v1879
    %v1947 = vmul.f32 %v1738, %v1883
    %v1948 = vmul.f32 %v1739, %v1879
    %v1949 = vmul.f32 %v1740, %v1883
    %v1950 = vadd.f32 %v1942, %v1919
    %v1951 = vadd.f32 %v1943, %v1923
    %v1952 = vadd.f32 %v1944, %v1919
    %v1953 = vadd.f32 %v1945, %v1923
    %v1954 = vadd.f32 %v1946, %v1919
    %v1955 = vadd.f32 %v1947, %v1923
    %v1956 = vadd.f32 %v1948, %v1919
    %v1957 = vadd.f32 %v1949, %v1923
    %v1958 = vadd.f32 %v1950, %v1951
    %v1959 = vadd.f32 %v1952, %v1953
    %v1960 = vadd.f32 %v1954, %v1955
    %v1961 = vadd.f32 %v1956, %v1957
    %v1962 = vmax.f32 %v1958, 0.0
    %v1963 = vmax.f32 %v1959, 0.0
    %v1964 = vmax.f32 %v1960, 0.0
    %v1965 = vmax.f32 %v1961, 0.0
    %v1966 = vpack.c.bf16 %v1939, %v1938
    %v1967 = vpack.c.bf16 %v1963, %v1962
    %v1968 = vpack.c.bf16 %v1941, %v1940
    %v1969 = vpack.c.bf16 %v1965, %v1964
    %v1970 = vld [vmem:[%s6] sm:$0xf]
    %v1971 = vld [vmem:[%s6 + $0x4] sm:$0x1]
    %v1974 = vunpack.c.l.b16 %v1970
    %v1975 = vunpack.c.l.b16 %v1971
    %v1976 = vpack.c.b16 %v1975, %v1974
    %vm1977 = vcmask 203776
    %v1979 = vsel %vm1977, %v1976, 0
    %vm1981 = vcmask 1043456
    %vm1982 = vcmask 1044480
    %v1983 = vsel %vm1981, 4294967295, 65535
    %v1984 = vsel %vm1982, %v1983, 0
    %v1986 = vand.u32 %v1968, %v1984
    %v1989 = vand.u32 %v1969, %v1984
    %1991 = vmatprep.subr.bf16.mxu0 %v1967
    %1992 = vmatpush1.bf16.msra.mxu0 %v1966
    %1993 = vmatprep.subr.bf16.mxu0 %v1989
    %1994 = vmatpush1.bf16.msra.mxu0 %v1986
    %1995 = vmatprep.subr.bf16.mxu0 0
    %1996 = vmatpush1.bf16.msra.mxu0 0
    %1997 = vmatprep.subr.bf16.mxu0 0
    %1998 = vmatpush1.bf16.msra.mxu0 0
    %1999 = vmatprep.subr.bf16.mxu0 0
    %2000 = vmatpush1.bf16.msra.mxu0 0
    %2001 = vmatprep.subr.bf16.mxu0 0
    %2002 = vmatpush1.bf16.msra.mxu0 0
    %2003 = vmatprep.subr.bf16.mxu0 0
    %2004 = vmatpush1.bf16.msra.mxu0 0
    %2005 = vmatprep.subr.bf16.mxu0 0
    %2006 = vmatpush1.bf16.msra.mxu0 0
    %2007 = vmatprep.subr.bf16.mxu0 0
    %2008 = vmatpush1.bf16.msra.mxu0 0
    %2009 = vmatprep.subr.bf16.mxu0 0
    %2010 = vmatpush1.bf16.msra.mxu0 0
    %2011 = vmatprep.subr.bf16.mxu0 0
    %2012 = vmatpush1.bf16.msra.mxu0 0
    %2013 = vmatprep.subr.bf16.mxu0 0
    %2014 = vmatpush1.bf16.msra.mxu0 0
    %2015 = vmatprep.subr.bf16.mxu0 0
    %2016 = vmatpush1.bf16.msra.mxu0 0
    %2017 = vmatprep.subr.bf16.mxu0 0
    %2018 = vmatpush1.bf16.msra.mxu0 0
    %2019 = vmatprep.subr.bf16.mxu0 0
    %2020 = vmatpush1.bf16.msra.mxu0 0
    %2021 = vmatprep.subr.bf16.mxu0 0
    %2022 = vmatpush1.bf16.msra.mxu0 0
    %2023 = vmatprep.mubr.bf16.mxu0 0
    %2024 = vmatmul.mubr.bf16.gmra.mrb[0].mxu0 %v1979
    %v2025 = vpop.f32.mrb[0].mxu0
    %v2026 = vadd.f32 0.0, %v2025
    %v2027 = vpop.f32.mrb[0].mxu0
    %v2028 = vadd.f32 0.0, %v2027
    %v2029 = vpop.f32.mrb[0].mxu0
    %v2030 = vadd.f32 0.0, %v2029
    %v2031 = vpop.f32.mrb[0].mxu0
    %v2032 = vadd.f32 0.0, %v2031
    %2033 = vdwg.mxu0
    %v2034 = vpack.c.bf16 %v2030, %v2026
    %v2035 = vpack.c.bf16 %v2032, %v2028
    %s2036 = scalar_lea.vmem %s6, 8
    %v2037 = vld [vmem:[%s2036] sm:$0xf]
    %v2038 = vld [vmem:[%s2036 + $0x4] sm:$0x1]
    %v2041 = vunpack.c.l.b16 %v2037
    %v2042 = vunpack.c.l.b16 %v2038
    %v2043 = vpack.c.b16 %v2042, %v2041
    %v2045 = vsel %vm1977, %v2043, 0
    %2047 = vmatprep.subr.bf16.mxu0 %v1967
    %2048 = vmatpush1.bf16.msra.mxu0 %v1966
    %2049 = vmatprep.subr.bf16.mxu0 %v1989
    %2050 = vmatpush1.bf16.msra.mxu0 %v1986
    %2051 = vmatprep.subr.bf16.mxu0 0
    %2052 = vmatpush1.bf16.msra.mxu0 0
    %2053 = vmatprep.subr.bf16.mxu0 0
    %2054 = vmatpush1.bf16.msra.mxu0 0
    %2055 = vmatprep.subr.bf16.mxu0 0
    %2056 = vmatpush1.bf16.msra.mxu0 0
    %2057 = vmatprep.subr.bf16.mxu0 0
    %2058 = vmatpush1.bf16.msra.mxu0 0
    %2059 = vmatprep.subr.bf16.mxu0 0
    %2060 = vmatpush1.bf16.msra.mxu0 0
    %2061 = vmatprep.subr.bf16.mxu0 0
    %2062 = vmatpush1.bf16.msra.mxu0 0
    %2063 = vmatprep.subr.bf16.mxu0 0
    %2064 = vmatpush1.bf16.msra.mxu0 0
    %2065 = vmatprep.subr.bf16.mxu0 0
    %2066 = vmatpush1.bf16.msra.mxu0 0
    %2067 = vmatprep.subr.bf16.mxu0 0
    %2068 = vmatpush1.bf16.msra.mxu0 0
    %2069 = vmatprep.subr.bf16.mxu0 0
    %2070 = vmatpush1.bf16.msra.mxu0 0
    %2071 = vmatprep.subr.bf16.mxu0 0
    %2072 = vmatpush1.bf16.msra.mxu0 0
    %2073 = vmatprep.subr.bf16.mxu0 0
    %2074 = vmatpush1.bf16.msra.mxu0 0
    %2075 = vmatprep.subr.bf16.mxu0 0
    %2076 = vmatpush1.bf16.msra.mxu0 0
    %2077 = vmatprep.subr.bf16.mxu0 0
    %2078 = vmatpush1.bf16.msra.mxu0 0
    %2079 = vmatprep.mubr.bf16.mxu0 0
    %2080 = vmatmul.mubr.bf16.gmra.mrb[0].mxu0 %v2045
    %v2081 = vpop.f32.mrb[0].mxu0
    %v2082 = vadd.f32 0.0, %v2081
    %v2083 = vpop.f32.mrb[0].mxu0
    %v2084 = vadd.f32 0.0, %v2083
    %v2085 = vpop.f32.mrb[0].mxu0
    %v2086 = vadd.f32 0.0, %v2085
    %v2087 = vpop.f32.mrb[0].mxu0
    %v2088 = vadd.f32 0.0, %v2087
    %2089 = vdwg.mxu0
    %v2090 = vpack.c.bf16 %v2086, %v2082
    %v2091 = vpack.c.bf16 %v2088, %v2084
    %s2092 = scalar_lea.vmem %s6, 16
    %v2093 = vld [vmem:[%s2092] sm:$0xf]
    %v2094 = vld [vmem:[%s2092 + $0x4] sm:$0x1]
    %v2097 = vunpack.c.l.b16 %v2093
    %v2098 = vunpack.c.l.b16 %v2094
    %v2099 = vpack.c.b16 %v2098, %v2097
    %v2101 = vsel %vm1977, %v2099, 0
    %2103 = vmatprep.subr.bf16.mxu0 %v1967
    %2104 = vmatpush1.bf16.msra.mxu0 %v1966
    %2105 = vmatprep.subr.bf16.mxu0 %v1989
    %2106 = vmatpush1.bf16.msra.mxu0 %v1986
    %2107 = vmatprep.subr.bf16.mxu0 0
    %2108 = vmatpush1.bf16.msra.mxu0 0
    %2109 = vmatprep.subr.bf16.mxu0 0
    %2110 = vmatpush1.bf16.msra.mxu0 0
    %2111 = vmatprep.subr.bf16.mxu0 0
    %2112 = vmatpush1.bf16.msra.mxu0 0
    %2113 = vmatprep.subr.bf16.mxu0 0
    %2114 = vmatpush1.bf16.msra.mxu0 0
    %2115 = vmatprep.subr.bf16.mxu0 0
    %2116 = vmatpush1.bf16.msra.mxu0 0
    %2117 = vmatprep.subr.bf16.mxu0 0
    %2118 = vmatpush1.bf16.msra.mxu0 0
    %2119 = vmatprep.subr.bf16.mxu0 0
    %2120 = vmatpush1.bf16.msra.mxu0 0
    %2121 = vmatprep.subr.bf16.mxu0 0
    %2122 = vmatpush1.bf16.msra.mxu0 0
    %2123 = vmatprep.subr.bf16.mxu0 0
    %2124 = vmatpush1.bf16.msra.mxu0 0
    %2125 = vmatprep.subr.bf16.mxu0 0
    %2126 = vmatpush1.bf16.msra.mxu0 0
    %2127 = vmatprep.subr.bf16.mxu0 0
    %2128 = vmatpush1.bf16.msra.mxu0 0
    %2129 = vmatprep.subr.bf16.mxu0 0
    %2130 = vmatpush1.bf16.msra.mxu0 0
    %2131 = vmatprep.subr.bf16.mxu0 0
    %2132 = vmatpush1.bf16.msra.mxu0 0
    %2133 = vmatprep.subr.bf16.mxu0 0
    %2134 = vmatpush1.bf16.msra.mxu0 0
    %2135 = vmatprep.mubr.bf16.mxu0 0
    %2136 = vmatmul.mubr.bf16.gmra.mrb[0].mxu0 %v2101
    %v2137 = vpop.f32.mrb[0].mxu0
    %v2138 = vadd.f32 0.0, %v2137
    %v2139 = vpop.f32.mrb[0].mxu0
    %v2140 = vadd.f32 0.0, %v2139
    %v2141 = vpop.f32.mrb[0].mxu0
    %v2142 = vadd.f32 0.0, %v2141
    %v2143 = vpop.f32.mrb[0].mxu0
    %v2144 = vadd.f32 0.0, %v2143
    %2145 = vdwg.mxu0
    %v2146 = vpack.c.bf16 %v2142, %v2138
    %v2147 = vpack.c.bf16 %v2144, %v2140
    %s2148 = scalar_lea.vmem %s6, 24
    %v2149 = vld [vmem:[%s2148] sm:$0xf]
    %v2150 = vld [vmem:[%s2148 + $0x4] sm:$0x1]
    %v2153 = vunpack.c.l.b16 %v2149
    %v2154 = vunpack.c.l.b16 %v2150
    %v2155 = vpack.c.b16 %v2154, %v2153
    %v2157 = vsel %vm1977, %v2155, 0
    %2159 = vmatprep.subr.bf16.mxu0 %v1967
    %2160 = vmatpush1.bf16.msra.mxu0 %v1966
    %2161 = vmatprep.subr.bf16.mxu0 %v1989
    %2162 = vmatpush1.bf16.msra.mxu0 %v1986
    %2163 = vmatprep.subr.bf16.mxu0 0
    %2164 = vmatpush1.bf16.msra.mxu0 0
    %2165 = vmatprep.subr.bf16.mxu0 0
    %2166 = vmatpush1.bf16.msra.mxu0 0
    %2167 = vmatprep.subr.bf16.mxu0 0
    %2168 = vmatpush1.bf16.msra.mxu0 0
    %2169 = vmatprep.subr.bf16.mxu0 0
    %2170 = vmatpush1.bf16.msra.mxu0 0
    %2171 = vmatprep.subr.bf16.mxu0 0
    %2172 = vmatpush1.bf16.msra.mxu0 0
    %2173 = vmatprep.subr.bf16.mxu0 0
    %2174 = vmatpush1.bf16.msra.mxu0 0
    %2175 = vmatprep.subr.bf16.mxu0 0
    %2176 = vmatpush1.bf16.msra.mxu0 0
    %2177 = vmatprep.subr.bf16.mxu0 0
    %2178 = vmatpush1.bf16.msra.mxu0 0
    %2179 = vmatprep.subr.bf16.mxu0 0
    %2180 = vmatpush1.bf16.msra.mxu0 0
    %2181 = vmatprep.subr.bf16.mxu0 0
    %2182 = vmatpush1.bf16.msra.mxu0 0
    %2183 = vmatprep.subr.bf16.mxu0 0
    %2184 = vmatpush1.bf16.msra.mxu0 0
    %2185 = vmatprep.subr.bf16.mxu0 0
    %2186 = vmatpush1.bf16.msra.mxu0 0
    %2187 = vmatprep.subr.bf16.mxu0 0
    %2188 = vmatpush1.bf16.msra.mxu0 0
    %2189 = vmatprep.subr.bf16.mxu0 0
    %2190 = vmatpush1.bf16.msra.mxu0 0
    %2191 = vmatprep.mubr.bf16.mxu0 0
    %2192 = vmatmul.mubr.bf16.gmra.mrb[0].mxu0 %v2157
    %v2193 = vpop.f32.mrb[0].mxu0
    %v2194 = vadd.f32 0.0, %v2193
    %v2195 = vpop.f32.mrb[0].mxu0
    %v2196 = vadd.f32 0.0, %v2195
    %v2197 = vpop.f32.mrb[0].mxu0
    %v2198 = vadd.f32 0.0, %v2197
    %v2199 = vpop.f32.mrb[0].mxu0
    %v2200 = vadd.f32 0.0, %v2199
    %2201 = vdwg.mxu0
    %v2202 = vpack.c.bf16 %v2198, %v2194
    %v2203 = vpack.c.bf16 %v2200, %v2196
    %v2204 = vld [vmem:[%s7] sm:$0xff]
    %v2205 = vld [vmem:[%s7 + $0x8] sm:$0xff]
    %v2206 = vld [vmem:[%s7 + $0x10] sm:$0xff]
    %v2207 = vld [vmem:[%s7 + $0x18] sm:$0xff]
    %v2208 = vld [vmem:[%s7 + $0x20] sm:$0xff]
    %v2209 = vld [vmem:[%s7 + $0x28] sm:$0xff]
    %v2210 = vld [vmem:[%s7 + $0x30] sm:$0xff]
    %v2211 = vld [vmem:[%s7 + $0x38] sm:$0xff]
    %v2212 = vld [vmem:[%s7 + $0x40] sm:$0xff]
    %v2213 = vld [vmem:[%s7 + $0x48] sm:$0xff]
    %v2214 = vld [vmem:[%s7 + $0x50] sm:$0xff]
    %v2215 = vld [vmem:[%s7 + $0x58] sm:$0xff]
    %v2216 = vld [vmem:[%s7 + $0x60] sm:$0xff]
    %v2217 = vld [vmem:[%s7 + $0x68] sm:$0xff]
    %v2218 = vld [vmem:[%s7 + $0x70] sm:$0xff]
    %v2219 = vld [vmem:[%s7 + $0x78] sm:$0xff]
    %v2220 = vld [vmem:[%s7 + $0x80] sm:$0xff]
    %v2221 = vld [vmem:[%s7 + $0x88] sm:$0xff]
    %v2222 = vld [vmem:[%s7 + $0x90] sm:$0xff]
    %v2223 = vld [vmem:[%s7 + $0x98] sm:$0xff]
    %v2224 = vld [vmem:[%s7 + $0xa0] sm:$0xff]
    %v2225 = vld [vmem:[%s7 + $0xa8] sm:$0xff]
    %v2226 = vld [vmem:[%s7 + $0xb0] sm:$0xff]
    %v2227 = vld [vmem:[%s7 + $0xb8] sm:$0xff]
    %v2228 = vld [vmem:[%s7 + $0xc0] sm:$0xff]
    %v2229 = vld [vmem:[%s7 + $0xc8] sm:$0xff]
    %v2230 = vld [vmem:[%s7 + $0xd0] sm:$0xff]
    %v2231 = vld [vmem:[%s7 + $0xd8] sm:$0xff]
    %v2232 = vld [vmem:[%s7 + $0xe0] sm:$0xff]
    %v2233 = vld [vmem:[%s7 + $0xe8] sm:$0xff]
    %v2234 = vld [vmem:[%s7 + $0xf0] sm:$0xff]
    %v2235 = vld [vmem:[%s7 + $0xf8] sm:$0xff]
    %v2252 = vunpack.c.l.b16 %v2220
    %v2253 = vunpack.c.h.b16 %v2220
    %v2254 = vunpack.c.l.b16 %v2221
    %v2255 = vunpack.c.h.b16 %v2221
    %v2256 = vunpack.c.l.b16 %v2222
    %v2257 = vunpack.c.h.b16 %v2222
    %v2258 = vunpack.c.l.b16 %v2223
    %v2259 = vunpack.c.h.b16 %v2223
    %v2260 = vunpack.c.l.b16 %v2224
    %v2261 = vunpack.c.h.b16 %v2224
    %v2262 = vunpack.c.l.b16 %v2225
    %v2263 = vunpack.c.h.b16 %v2225
    %v2264 = vunpack.c.l.b16 %v2226
    %v2265 = vunpack.c.h.b16 %v2226
    %v2266 = vunpack.c.l.b16 %v2227
    %v2267 = vunpack.c.h.b16 %v2227
    %v2268 = vunpack.c.l.b16 %v2228
    %v2269 = vunpack.c.h.b16 %v2228
    %v2270 = vunpack.c.l.b16 %v2229
    %v2271 = vunpack.c.h.b16 %v2229
    %v2272 = vunpack.c.l.b16 %v2230
    %v2273 = vunpack.c.h.b16 %v2230
    %v2274 = vunpack.c.l.b16 %v2231
    %v2275 = vunpack.c.h.b16 %v2231
    %v2276 = vunpack.c.l.b16 %v2232
    %v2277 = vunpack.c.h.b16 %v2232
    %v2278 = vunpack.c.l.b16 %v2233
    %v2279 = vunpack.c.h.b16 %v2233
    %v2280 = vunpack.c.l.b16 %v2234
    %v2281 = vunpack.c.h.b16 %v2234
    %v2282 = vunpack.c.l.b16 %v2235
    %v2283 = vunpack.c.h.b16 %v2235
    %v2284 = vpack.c.b16 %v2254, %v2252
    %v2285 = vpack.c.b16 %v2255, %v2253
    %v2286 = vpack.c.b16 %v2258, %v2256
    %v2287 = vpack.c.b16 %v2259, %v2257
    %v2288 = vpack.c.b16 %v2262, %v2260
    %v2289 = vpack.c.b16 %v2263, %v2261
    %v2290 = vpack.c.b16 %v2266, %v2264
    %v2291 = vpack.c.b16 %v2267, %v2265
    %v2292 = vpack.c.b16 %v2270, %v2268
    %v2293 = vpack.c.b16 %v2271, %v2269
    %v2294 = vpack.c.b16 %v2274, %v2272
    %v2295 = vpack.c.b16 %v2275, %v2273
    %v2296 = vpack.c.b16 %v2278, %v2276
    %v2297 = vpack.c.b16 %v2279, %v2277
    %v2298 = vpack.c.b16 %v2282, %v2280
    %v2299 = vpack.c.b16 %v2283, %v2281
    %2316 = vmatprep.subr.bf16.mxu0 %v2285
    %2317 = vmatpush1.bf16.msra.mxu0 %v2284
    %2318 = vmatprep.subr.bf16.mxu0 %v2287
    %2319 = vmatpush1.bf16.msra.mxu0 %v2286
    %2320 = vmatprep.subr.bf16.mxu0 %v2289
    %2321 = vmatpush1.bf16.msra.mxu0 %v2288
    %2322 = vmatprep.subr.bf16.mxu0 %v2291
    %2323 = vmatpush1.bf16.msra.mxu0 %v2290
    %2324 = vmatprep.subr.bf16.mxu0 %v2293
    %2325 = vmatpush1.bf16.msra.mxu0 %v2292
    %2326 = vmatprep.subr.bf16.mxu0 %v2295
    %2327 = vmatpush1.bf16.msra.mxu0 %v2294
    %2328 = vmatprep.subr.bf16.mxu0 %v2297
    %2329 = vmatpush1.bf16.msra.mxu0 %v2296
    %2330 = vmatprep.subr.bf16.mxu0 %v2299
    %2331 = vmatpush1.bf16.msra.mxu0 %v2298
    %2332 = vmatprep.subr.bf16.mxu0 0
    %2333 = vmatpush1.bf16.msra.mxu0 0
    %2334 = vmatprep.subr.bf16.mxu0 0
    %2335 = vmatpush1.bf16.msra.mxu0 0
    %2336 = vmatprep.subr.bf16.mxu0 0
    %2337 = vmatpush1.bf16.msra.mxu0 0
    %2338 = vmatprep.subr.bf16.mxu0 0
    %2339 = vmatpush1.bf16.msra.mxu0 0
    %2340 = vmatprep.subr.bf16.mxu0 0
    %2341 = vmatpush1.bf16.msra.mxu0 0
    %2342 = vmatprep.subr.bf16.mxu0 0
    %2343 = vmatpush1.bf16.msra.mxu0 0
    %2344 = vmatprep.subr.bf16.mxu0 0
    %2345 = vmatpush1.bf16.msra.mxu0 0
    %2346 = vmatprep.subr.bf16.mxu0 0
    %2347 = vmatpush1.bf16.msra.mxu0 0
    %2348 = vmatprep.mubr.bf16.mxu0 0
    %2349 = vmatmul.mubr.bf16.gmra.mrb[0].mxu0 %v2090
    %v2350 = vpop.f32.mrb[0].mxu0
    %v2351 = vadd.f32 0.0, %v2350
    %v2352 = vpop.f32.mrb[0].mxu0
    %v2353 = vadd.f32 0.0, %v2352
    %v2354 = vpop.f32.mrb[0].mxu0
    %v2355 = vadd.f32 0.0, %v2354
    %v2356 = vpop.f32.mrb[0].mxu0
    %v2357 = vadd.f32 0.0, %v2356
    %2358 = vdwg.mxu0
    %v2375 = vunpack.c.l.b16 %v2204
    %v2376 = vunpack.c.h.b16 %v2204
    %v2377 = vunpack.c.l.b16 %v2205
    %v2378 = vunpack.c.h.b16 %v2205
    %v2379 = vunpack.c.l.b16 %v2206
    %v2380 = vunpack.c.h.b16 %v2206
    %v2381 = vunpack.c.l.b16 %v2207
    %v2382 = vunpack.c.h.b16 %v2207
    %v2383 = vunpack.c.l.b16 %v2208
    %v2384 = vunpack.c.h.b16 %v2208
    %v2385 = vunpack.c.l.b16 %v2209
    %v2386 = vunpack.c.h.b16 %v2209
    %v2387 = vunpack.c.l.b16 %v2210
    %v2388 = vunpack.c.h.b16 %v2210
    %v2389 = vunpack.c.l.b16 %v2211
    %v2390 = vunpack.c.h.b16 %v2211
    %v2391 = vunpack.c.l.b16 %v2212
    %v2392 = vunpack.c.h.b16 %v2212
    %v2393 = vunpack.c.l.b16 %v2213
    %v2394 = vunpack.c.h.b16 %v2213
    %v2395 = vunpack.c.l.b16 %v2214
    %v2396 = vunpack.c.h.b16 %v2214
    %v2397 = vunpack.c.l.b16 %v2215
    %v2398 = vunpack.c.h.b16 %v2215
    %v2399 = vunpack.c.l.b16 %v2216
    %v2400 = vunpack.c.h.b16 %v2216
    %v2401 = vunpack.c.l.b16 %v2217
    %v2402 = vunpack.c.h.b16 %v2217
    %v2403 = vunpack.c.l.b16 %v2218
    %v2404 = vunpack.c.h.b16 %v2218
    %v2405 = vunpack.c.l.b16 %v2219
    %v2406 = vunpack.c.h.b16 %v2219
    %v2407 = vpack.c.b16 %v2377, %v2375
    %v2408 = vpack.c.b16 %v2378, %v2376
    %v2409 = vpack.c.b16 %v2381, %v2379
    %v2410 = vpack.c.b16 %v2382, %v2380
    %v2411 = vpack.c.b16 %v2385, %v2383
    %v2412 = vpack.c.b16 %v2386, %v2384
    %v2413 = vpack.c.b16 %v2389, %v2387
    %v2414 = vpack.c.b16 %v2390, %v2388
    %v2415 = vpack.c.b16 %v2393, %v2391
    %v2416 = vpack.c.b16 %v2394, %v2392
    %v2417 = vpack.c.b16 %v2397, %v2395
    %v2418 = vpack.c.b16 %v2398, %v2396
    %v2419 = vpack.c.b16 %v2401, %v2399
    %v2420 = vpack.c.b16 %v2402, %v2400
    %v2421 = vpack.c.b16 %v2405, %v2403
    %v2422 = vpack.c.b16 %v2406, %v2404
    %2439 = vmatprep.subr.bf16.mxu0 %v2408
    %2440 = vmatpush1.bf16.msra.mxu0 %v2407
    %2441 = vmatprep.subr.bf16.mxu0 %v2410
    %2442 = vmatpush1.bf16.msra.mxu0 %v2409
    %2443 = vmatprep.subr.bf16.mxu0 %v2412
    %2444 = vmatpush1.bf16.msra.mxu0 %v2411
    %2445 = vmatprep.subr.bf16.mxu0 %v2414
    %2446 = vmatpush1.bf16.msra.mxu0 %v2413
    %2447 = vmatprep.subr.bf16.mxu0 %v2416
    %2448 = vmatpush1.bf16.msra.mxu0 %v2415
    %2449 = vmatprep.subr.bf16.mxu0 %v2418
    %2450 = vmatpush1.bf16.msra.mxu0 %v2417
    %2451 = vmatprep.subr.bf16.mxu0 %v2420
    %2452 = vmatpush1.bf16.msra.mxu0 %v2419
    %2453 = vmatprep.subr.bf16.mxu0 %v2422
    %2454 = vmatpush1.bf16.msra.mxu0 %v2421
    %2455 = vmatprep.subr.bf16.mxu0 0
    %2456 = vmatpush1.bf16.msra.mxu0 0
    %2457 = vmatprep.subr.bf16.mxu0 0
    %2458 = vmatpush1.bf16.msra.mxu0 0
    %2459 = vmatprep.subr.bf16.mxu0 0
    %2460 = vmatpush1.bf16.msra.mxu0 0
    %2461 = vmatprep.subr.bf16.mxu0 0
    %2462 = vmatpush1.bf16.msra.mxu0 0
    %2463 = vmatprep.subr.bf16.mxu0 0
    %2464 = vmatpush1.bf16.msra.mxu0 0
    %2465 = vmatprep.subr.bf16.mxu0 0
    %2466 = vmatpush1.bf16.msra.mxu0 0
    %2467 = vmatprep.subr.bf16.mxu0 0
    %2468 = vmatpush1.bf16.msra.mxu0 0
    %2469 = vmatprep.subr.bf16.mxu0 0
    %2470 = vmatpush1.bf16.msra.mxu0 0
    %2471 = vmatprep.mubr.bf16.mxu0 0
    %2472 = vmatmul.mubr.bf16.gmra.mrb[0].mxu0 %v2034
    %v2473 = vpop.f32.mrb[0].mxu0
    %v2474 = vadd.f32 %v2351, %v2473
    %v2475 = vpop.f32.mrb[0].mxu0
    %v2476 = vadd.f32 %v2353, %v2475
    %v2477 = vpop.f32.mrb[0].mxu0
    %v2478 = vadd.f32 %v2355, %v2477
    %v2479 = vpop.f32.mrb[0].mxu0
    %v2480 = vadd.f32 %v2357, %v2479
    %2481 = vdwg.mxu0
    %v2482 = vld [vmem:[%s7 + $0x100] sm:$0xff]
    %v2483 = vld [vmem:[%s7 + $0x108] sm:$0xff]
    %v2484 = vld [vmem:[%s7 + $0x110] sm:$0xff]
    %v2485 = vld [vmem:[%s7 + $0x118] sm:$0xff]
    %v2486 = vld [vmem:[%s7 + $0x120] sm:$0xff]
    %v2487 = vld [vmem:[%s7 + $0x128] sm:$0xff]
    %v2488 = vld [vmem:[%s7 + $0x130] sm:$0xff]
    %v2489 = vld [vmem:[%s7 + $0x138] sm:$0xff]
    %v2490 = vld [vmem:[%s7 + $0x140] sm:$0xff]
    %v2491 = vld [vmem:[%s7 + $0x148] sm:$0xff]
    %v2492 = vld [vmem:[%s7 + $0x150] sm:$0xff]
    %v2493 = vld [vmem:[%s7 + $0x158] sm:$0xff]
    %v2494 = vld [vmem:[%s7 + $0x160] sm:$0xff]
    %v2495 = vld [vmem:[%s7 + $0x168] sm:$0xff]
    %v2496 = vld [vmem:[%s7 + $0x170] sm:$0xff]
    %v2497 = vld [vmem:[%s7 + $0x178] sm:$0xff]
    %v2514 = vunpack.c.l.b16 %v2482
    %v2515 = vunpack.c.h.b16 %v2482
    %v2516 = vunpack.c.l.b16 %v2483
    %v2517 = vunpack.c.h.b16 %v2483
    %v2518 = vunpack.c.l.b16 %v2484
    %v2519 = vunpack.c.h.b16 %v2484
    %v2520 = vunpack.c.l.b16 %v2485
    %v2521 = vunpack.c.h.b16 %v2485
    %v2522 = vunpack.c.l.b16 %v2486
    %v2523 = vunpack.c.h.b16 %v2486
    %v2524 = vunpack.c.l.b16 %v2487
    %v2525 = vunpack.c.h.b16 %v2487
    %v2526 = vunpack.c.l.b16 %v2488
    %v2527 = vunpack.c.h.b16 %v2488
    %v2528 = vunpack.c.l.b16 %v2489
    %v2529 = vunpack.c.h.b16 %v2489
    %v2530 = vunpack.c.l.b16 %v2490
    %v2531 = vunpack.c.h.b16 %v2490
    %v2532 = vunpack.c.l.b16 %v2491
    %v2533 = vunpack.c.h.b16 %v2491
    %v2534 = vunpack.c.l.b16 %v2492
    %v2535 = vunpack.c.h.b16 %v2492
    %v2536 = vunpack.c.l.b16 %v2493
    %v2537 = vunpack.c.h.b16 %v2493
    %v2538 = vunpack.c.l.b16 %v2494
    %v2539 = vunpack.c.h.b16 %v2494
    %v2540 = vunpack.c.l.b16 %v2495
    %v2541 = vunpack.c.h.b16 %v2495
    %v2542 = vunpack.c.l.b16 %v2496
    %v2543 = vunpack.c.h.b16 %v2496
    %v2544 = vunpack.c.l.b16 %v2497
    %v2545 = vunpack.c.h.b16 %v2497
    %v2546 = vpack.c.b16 %v2516, %v2514
    %v2547 = vpack.c.b16 %v2517, %v2515
    %v2548 = vpack.c.b16 %v2520, %v2518
    %v2549 = vpack.c.b16 %v2521, %v2519
    %v2550 = vpack.c.b16 %v2524, %v2522
    %v2551 = vpack.c.b16 %v2525, %v2523
    %v2552 = vpack.c.b16 %v2528, %v2526
    %v2553 = vpack.c.b16 %v2529, %v2527
    %v2554 = vpack.c.b16 %v2532, %v2530
    %v2555 = vpack.c.b16 %v2533, %v2531
    %v2556 = vpack.c.b16 %v2536, %v2534
    %v2557 = vpack.c.b16 %v2537, %v2535
    %v2558 = vpack.c.b16 %v2540, %v2538
    %v2559 = vpack.c.b16 %v2541, %v2539
    %v2560 = vpack.c.b16 %v2544, %v2542
    %v2561 = vpack.c.b16 %v2545, %v2543
    %2578 = vmatprep.subr.bf16.mxu0 %v2547
    %2579 = vmatpush1.bf16.msra.mxu0 %v2546
    %2580 = vmatprep.subr.bf16.mxu0 %v2549
    %2581 = vmatpush1.bf16.msra.mxu0 %v2548
    %2582 = vmatprep.subr.bf16.mxu0 %v2551
    %2583 = vmatpush1.bf16.msra.mxu0 %v2550
    %2584 = vmatprep.subr.bf16.mxu0 %v2553
    %2585 = vmatpush1.bf16.msra.mxu0 %v2552
    %2586 = vmatprep.subr.bf16.mxu0 %v2555
    %2587 = vmatpush1.bf16.msra.mxu0 %v2554
    %2588 = vmatprep.subr.bf16.mxu0 %v2557
    %2589 = vmatpush1.bf16.msra.mxu0 %v2556
    %2590 = vmatprep.subr.bf16.mxu0 %v2559
    %2591 = vmatpush1.bf16.msra.mxu0 %v2558
    %2592 = vmatprep.subr.bf16.mxu0 %v2561
    %2593 = vmatpush1.bf16.msra.mxu0 %v2560
    %2594 = vmatprep.subr.bf16.mxu0 0
    %2595 = vmatpush1.bf16.msra.mxu0 0
    %2596 = vmatprep.subr.bf16.mxu0 0
    %2597 = vmatpush1.bf16.msra.mxu0 0
    %2598 = vmatprep.subr.bf16.mxu0 0
    %2599 = vmatpush1.bf16.msra.mxu0 0
    %2600 = vmatprep.subr.bf16.mxu0 0
    %2601 = vmatpush1.bf16.msra.mxu0 0
    %2602 = vmatprep.subr.bf16.mxu0 0
    %2603 = vmatpush1.bf16.msra.mxu0 0
    %2604 = vmatprep.subr.bf16.mxu0 0
    %2605 = vmatpush1.bf16.msra.mxu0 0
    %2606 = vmatprep.subr.bf16.mxu0 0
    %2607 = vmatpush1.bf16.msra.mxu0 0
    %2608 = vmatprep.subr.bf16.mxu0 0
    %2609 = vmatpush1.bf16.msra.mxu0 0
    %2610 = vmatprep.mubr.bf16.mxu0 0
    %2611 = vmatmul.mubr.bf16.gmra.mrb[0].mxu0 %v2146
    %v2612 = vpop.f32.mrb[0].mxu0
    %v2613 = vadd.f32 0.0, %v2612
    %v2614 = vpop.f32.mrb[0].mxu0
    %v2615 = vadd.f32 0.0, %v2614
    %v2616 = vpop.f32.mrb[0].mxu0
    %v2617 = vadd.f32 0.0, %v2616
    %v2618 = vpop.f32.mrb[0].mxu0
    %v2619 = vadd.f32 0.0, %v2618
    %2620 = vdwg.mxu0
    %v2621 = vadd.f32 %v2474, %v2613
    %v2622 = vadd.f32 %v2476, %v2615
    %v2623 = vadd.f32 %v2478, %v2617
    %v2624 = vadd.f32 %v2480, %v2619
    %v2625 = vld [vmem:[%s7 + $0x180] sm:$0xff]
    %v2626 = vld [vmem:[%s7 + $0x188] sm:$0xff]
    %v2627 = vld [vmem:[%s7 + $0x190] sm:$0xff]
    %v2628 = vld [vmem:[%s7 + $0x198] sm:$0xff]
    %v2629 = vld [vmem:[%s7 + $0x1a0] sm:$0xff]
    %v2630 = vld [vmem:[%s7 + $0x1a8] sm:$0xff]
    %v2631 = vld [vmem:[%s7 + $0x1b0] sm:$0xff]
    %v2632 = vld [vmem:[%s7 + $0x1b8] sm:$0xff]
    %v2633 = vld [vmem:[%s7 + $0x1c0] sm:$0xff]
    %v2634 = vld [vmem:[%s7 + $0x1c8] sm:$0xff]
    %v2635 = vld [vmem:[%s7 + $0x1d0] sm:$0xff]
    %v2636 = vld [vmem:[%s7 + $0x1d8] sm:$0xff]
    %v2637 = vld [vmem:[%s7 + $0x1e0] sm:$0xff]
    %v2638 = vld [vmem:[%s7 + $0x1e8] sm:$0xff]
    %v2639 = vld [vmem:[%s7 + $0x1f0] sm:$0xff]
    %v2640 = vld [vmem:[%s7 + $0x1f8] sm:$0xff]
    %v2657 = vunpack.c.l.b16 %v2625
    %v2658 = vunpack.c.h.b16 %v2625
    %v2659 = vunpack.c.l.b16 %v2626
    %v2660 = vunpack.c.h.b16 %v2626
    %v2661 = vunpack.c.l.b16 %v2627
    %v2662 = vunpack.c.h.b16 %v2627
    %v2663 = vunpack.c.l.b16 %v2628
    %v2664 = vunpack.c.h.b16 %v2628
    %v2665 = vunpack.c.l.b16 %v2629
    %v2666 = vunpack.c.h.b16 %v2629
    %v2667 = vunpack.c.l.b16 %v2630
    %v2668 = vunpack.c.h.b16 %v2630
    %v2669 = vunpack.c.l.b16 %v2631
    %v2670 = vunpack.c.h.b16 %v2631
    %v2671 = vunpack.c.l.b16 %v2632
    %v2672 = vunpack.c.h.b16 %v2632
    %v2673 = vunpack.c.l.b16 %v2633
    %v2674 = vunpack.c.h.b16 %v2633
    %v2675 = vunpack.c.l.b16 %v2634
    %v2676 = vunpack.c.h.b16 %v2634
    %v2677 = vunpack.c.l.b16 %v2635
    %v2678 = vunpack.c.h.b16 %v2635
    %v2679 = vunpack.c.l.b16 %v2636
    %v2680 = vunpack.c.h.b16 %v2636
    %v2681 = vunpack.c.l.b16 %v2637
    %v2682 = vunpack.c.h.b16 %v2637
    %v2683 = vunpack.c.l.b16 %v2638
    %v2684 = vunpack.c.h.b16 %v2638
    %v2685 = vunpack.c.l.b16 %v2639
    %v2686 = vunpack.c.h.b16 %v2639
    %v2687 = vunpack.c.l.b16 %v2640
    %v2688 = vunpack.c.h.b16 %v2640
    %v2689 = vpack.c.b16 %v2659, %v2657
    %v2690 = vpack.c.b16 %v2660, %v2658
    %v2691 = vpack.c.b16 %v2663, %v2661
    %v2692 = vpack.c.b16 %v2664, %v2662
    %v2693 = vpack.c.b16 %v2667, %v2665
    %v2694 = vpack.c.b16 %v2668, %v2666
    %v2695 = vpack.c.b16 %v2671, %v2669
    %v2696 = vpack.c.b16 %v2672, %v2670
    %v2697 = vpack.c.b16 %v2675, %v2673
    %v2698 = vpack.c.b16 %v2676, %v2674
    %v2699 = vpack.c.b16 %v2679, %v2677
    %v2700 = vpack.c.b16 %v2680, %v2678
    %v2701 = vpack.c.b16 %v2683, %v2681
    %v2702 = vpack.c.b16 %v2684, %v2682
    %v2703 = vpack.c.b16 %v2687, %v2685
    %v2704 = vpack.c.b16 %v2688, %v2686
    %2721 = vmatprep.subr.bf16.mxu0 %v2690
    %2722 = vmatpush1.bf16.msra.mxu0 %v2689
    %2723 = vmatprep.subr.bf16.mxu0 %v2692
    %2724 = vmatpush1.bf16.msra.mxu0 %v2691
    %2725 = vmatprep.subr.bf16.mxu0 %v2694
    %2726 = vmatpush1.bf16.msra.mxu0 %v2693
    %2727 = vmatprep.subr.bf16.mxu0 %v2696
    %2728 = vmatpush1.bf16.msra.mxu0 %v2695
    %2729 = vmatprep.subr.bf16.mxu0 %v2698
    %2730 = vmatpush1.bf16.msra.mxu0 %v2697
    %2731 = vmatprep.subr.bf16.mxu0 %v2700
    %2732 = vmatpush1.bf16.msra.mxu0 %v2699
    %2733 = vmatprep.subr.bf16.mxu0 %v2702
    %2734 = vmatpush1.bf16.msra.mxu0 %v2701
    %2735 = vmatprep.subr.bf16.mxu0 %v2704
    %2736 = vmatpush1.bf16.msra.mxu0 %v2703
    %2737 = vmatprep.subr.bf16.mxu0 0
    %2738 = vmatpush1.bf16.msra.mxu0 0
    %2739 = vmatprep.subr.bf16.mxu0 0
    %2740 = vmatpush1.bf16.msra.mxu0 0
    %2741 = vmatprep.subr.bf16.mxu0 0
    %2742 = vmatpush1.bf16.msra.mxu0 0
    %2743 = vmatprep.subr.bf16.mxu0 0
    %2744 = vmatpush1.bf16.msra.mxu0 0
    %2745 = vmatprep.subr.bf16.mxu0 0
    %2746 = vmatpush1.bf16.msra.mxu0 0
    %2747 = vmatprep.subr.bf16.mxu0 0
    %2748 = vmatpush1.bf16.msra.mxu0 0
    %2749 = vmatprep.subr.bf16.mxu0 0
    %2750 = vmatpush1.bf16.msra.mxu0 0
    %2751 = vmatprep.subr.bf16.mxu0 0
    %2752 = vmatpush1.bf16.msra.mxu0 0
    %2753 = vmatprep.mubr.bf16.mxu0 0
    %2754 = vmatmul.mubr.bf16.gmra.mrb[0].mxu0 %v2202
    %v2755 = vpop.f32.mrb[0].mxu0
    %v2756 = vadd.f32 0.0, %v2755
    %v2757 = vpop.f32.mrb[0].mxu0
    %v2758 = vadd.f32 0.0, %v2757
    %v2759 = vpop.f32.mrb[0].mxu0
    %v2760 = vadd.f32 0.0, %v2759
    %v2761 = vpop.f32.mrb[0].mxu0
    %v2762 = vadd.f32 0.0, %v2761
    %2763 = vdwg.mxu0
    %v2764 = vadd.f32 %v2621, %v2756
    %v2765 = vadd.f32 %v2622, %v2758
    %v2766 = vadd.f32 %v2623, %v2760
    %v2767 = vadd.f32 %v2624, %v2762
    %2768 = vmatprep.subr.bf16.mxu0 %v2285
    %2769 = vmatpush1.bf16.msra.mxu0 %v2284
    %2770 = vmatprep.subr.bf16.mxu0 %v2287
    %2771 = vmatpush1.bf16.msra.mxu0 %v2286
    %2772 = vmatprep.subr.bf16.mxu0 %v2289
    %2773 = vmatpush1.bf16.msra.mxu0 %v2288
    %2774 = vmatprep.subr.bf16.mxu0 %v2291
    %2775 = vmatpush1.bf16.msra.mxu0 %v2290
    %2776 = vmatprep.subr.bf16.mxu0 %v2293
    %2777 = vmatpush1.bf16.msra.mxu0 %v2292
    %2778 = vmatprep.subr.bf16.mxu0 %v2295
    %2779 = vmatpush1.bf16.msra.mxu0 %v2294
    %2780 = vmatprep.subr.bf16.mxu0 %v2297
    %2781 = vmatpush1.bf16.msra.mxu0 %v2296
    %2782 = vmatprep.subr.bf16.mxu0 %v2299
    %2783 = vmatpush1.bf16.msra.mxu0 %v2298
    %2784 = vmatprep.subr.bf16.mxu0 0
    %2785 = vmatpush1.bf16.msra.mxu0 0
    %2786 = vmatprep.subr.bf16.mxu0 0
    %2787 = vmatpush1.bf16.msra.mxu0 0
    %2788 = vmatprep.subr.bf16.mxu0 0
    %2789 = vmatpush1.bf16.msra.mxu0 0
    %2790 = vmatprep.subr.bf16.mxu0 0
    %2791 = vmatpush1.bf16.msra.mxu0 0
    %2792 = vmatprep.subr.bf16.mxu0 0
    %2793 = vmatpush1.bf16.msra.mxu0 0
    %2794 = vmatprep.subr.bf16.mxu0 0
    %2795 = vmatpush1.bf16.msra.mxu0 0
    %2796 = vmatprep.subr.bf16.mxu0 0
    %2797 = vmatpush1.bf16.msra.mxu0 0
    %2798 = vmatprep.subr.bf16.mxu0 0
    %2799 = vmatpush1.bf16.msra.mxu0 0
    %2800 = vmatprep.mubr.bf16.mxu0 0
    %2801 = vmatmul.mubr.bf16.gmra.mrb[0].mxu0 %v2091
    %v2802 = vpop.f32.mrb[0].mxu0
    %v2803 = vadd.f32 0.0, %v2802
    %v2804 = vpop.f32.mrb[0].mxu0
    %v2805 = vadd.f32 0.0, %v2804
    %v2806 = vpop.f32.mrb[0].mxu0
    %v2807 = vadd.f32 0.0, %v2806
    %v2808 = vpop.f32.mrb[0].mxu0
    %v2809 = vadd.f32 0.0, %v2808
    %2810 = vdwg.mxu0
    %2811 = vmatprep.subr.bf16.mxu0 %v2408
    %2812 = vmatpush1.bf16.msra.mxu0 %v2407
    %2813 = vmatprep.subr.bf16.mxu0 %v2410
    %2814 = vmatpush1.bf16.msra.mxu0 %v2409
    %2815 = vmatprep.subr.bf16.mxu0 %v2412
    %2816 = vmatpush1.bf16.msra.mxu0 %v2411
    %2817 = vmatprep.subr.bf16.mxu0 %v2414
    %2818 = vmatpush1.bf16.msra.mxu0 %v2413
    %2819 = vmatprep.subr.bf16.mxu0 %v2416
    %2820 = vmatpush1.bf16.msra.mxu0 %v2415
    %2821 = vmatprep.subr.bf16.mxu0 %v2418
    %2822 = vmatpush1.bf16.msra.mxu0 %v2417
    %2823 = vmatprep.subr.bf16.mxu0 %v2420
    %2824 = vmatpush1.bf16.msra.mxu0 %v2419
    %2825 = vmatprep.subr.bf16.mxu0 %v2422
    %2826 = vmatpush1.bf16.msra.mxu0 %v2421
    %2827 = vmatprep.subr.bf16.mxu0 0
    %2828 = vmatpush1.bf16.msra.mxu0 0
    %2829 = vmatprep.subr.bf16.mxu0 0
    %2830 = vmatpush1.bf16.msra.mxu0 0
    %2831 = vmatprep.subr.bf16.mxu0 0
    %2832 = vmatpush1.bf16.msra.mxu0 0
    %2833 = vmatprep.subr.bf16.mxu0 0
    %2834 = vmatpush1.bf16.msra.mxu0 0
    %2835 = vmatprep.subr.bf16.mxu0 0
    %2836 = vmatpush1.bf16.msra.mxu0 0
    %2837 = vmatprep.subr.bf16.mxu0 0
    %2838 = vmatpush1.bf16.msra.mxu0 0
    %2839 = vmatprep.subr.bf16.mxu0 0
    %2840 = vmatpush1.bf16.msra.mxu0 0
    %2841 = vmatprep.subr.bf16.mxu0 0
    %2842 = vmatpush1.bf16.msra.mxu0 0
    %2843 = vmatprep.mubr.bf16.mxu0 0
    %2844 = vmatmul.mubr.bf16.gmra.mrb[0].mxu0 %v2035
    %v2845 = vpop.f32.mrb[0].mxu0
    %v2846 = vadd.f32 %v2803, %v2845
    %v2847 = vpop.f32.mrb[0].mxu0
    %v2848 = vadd.f32 %v2805, %v2847
    %v2849 = vpop.f32.mrb[0].mxu0
    %v2850 = vadd.f32 %v2807, %v2849
    %v2851 = vpop.f32.mrb[0].mxu0
    %v2852 = vadd.f32 %v2809, %v2851
    %2853 = vdwg.mxu0
    %2854 = vmatprep.subr.bf16.mxu0 %v2547
    %2855 = vmatpush1.bf16.msra.mxu0 %v2546
    %2856 = vmatprep.subr.bf16.mxu0 %v2549
    %2857 = vmatpush1.bf16.msra.mxu0 %v2548
    %2858 = vmatprep.subr.bf16.mxu0 %v2551
    %2859 = vmatpush1.bf16.msra.mxu0 %v2550
    %2860 = vmatprep.subr.bf16.mxu0 %v2553
    %2861 = vmatpush1.bf16.msra.mxu0 %v2552
    %2862 = vmatprep.subr.bf16.mxu0 %v2555
    %2863 = vmatpush1.bf16.msra.mxu0 %v2554
    %2864 = vmatprep.subr.bf16.mxu0 %v2557
    %2865 = vmatpush1.bf16.msra.mxu0 %v2556
    %2866 = vmatprep.subr.bf16.mxu0 %v2559
    %2867 = vmatpush1.bf16.msra.mxu0 %v2558
    %2868 = vmatprep.subr.bf16.mxu0 %v2561
    %2869 = vmatpush1.bf16.msra.mxu0 %v2560
    %2870 = vmatprep.subr.bf16.mxu0 0
    %2871 = vmatpush1.bf16.msra.mxu0 0
    %2872 = vmatprep.subr.bf16.mxu0 0
    %2873 = vmatpush1.bf16.msra.mxu0 0
    %2874 = vmatprep.subr.bf16.mxu0 0
    %2875 = vmatpush1.bf16.msra.mxu0 0
    %2876 = vmatprep.subr.bf16.mxu0 0
    %2877 = vmatpush1.bf16.msra.mxu0 0
    %2878 = vmatprep.subr.bf16.mxu0 0
    %2879 = vmatpush1.bf16.msra.mxu0 0
    %2880 = vmatprep.subr.bf16.mxu0 0
    %2881 = vmatpush1.bf16.msra.mxu0 0
    %2882 = vmatprep.subr.bf16.mxu0 0
    %2883 = vmatpush1.bf16.msra.mxu0 0
    %2884 = vmatprep.subr.bf16.mxu0 0
    %2885 = vmatpush1.bf16.msra.mxu0 0
    %2886 = vmatprep.mubr.bf16.mxu0 0
    %2887 = vmatmul.mubr.bf16.gmra.mrb[0].mxu0 %v2147
    %v2888 = vpop.f32.mrb[0].mxu0
    %v2889 = vadd.f32 0.0, %v2888
    %v2890 = vpop.f32.mrb[0].mxu0
    %v2891 = vadd.f32 0.0, %v2890
    %v2892 = vpop.f32.mrb[0].mxu0
    %v2893 = vadd.f32 0.0, %v2892
    %v2894 = vpop.f32.mrb[0].mxu0
    %v2895 = vadd.f32 0.0, %v2894
    %2896 = vdwg.mxu0
    %v2897 = vadd.f32 %v2846, %v2889
    %v2898 = vadd.f32 %v2848, %v2891
    %v2899 = vadd.f32 %v2850, %v2893
    %v2900 = vadd.f32 %v2852, %v2895
    %2901 = vmatprep.subr.bf16.mxu0 %v2690
    %2902 = vmatpush1.bf16.msra.mxu0 %v2689
    %2903 = vmatprep.subr.bf16.mxu0 %v2692
    %2904 = vmatpush1.bf16.msra.mxu0 %v2691
    %2905 = vmatprep.subr.bf16.mxu0 %v2694
    %2906 = vmatpush1.bf16.msra.mxu0 %v2693
    %2907 = vmatprep.subr.bf16.mxu0 %v2696
    %2908 = vmatpush1.bf16.msra.mxu0 %v2695
    %2909 = vmatprep.subr.bf16.mxu0 %v2698
    %2910 = vmatpush1.bf16.msra.mxu0 %v2697
    %2911 = vmatprep.subr.bf16.mxu0 %v2700
    %2912 = vmatpush1.bf16.msra.mxu0 %v2699
    %2913 = vmatprep.subr.bf16.mxu0 %v2702
    %2914 = vmatpush1.bf16.msra.mxu0 %v2701
    %2915 = vmatprep.subr.bf16.mxu0 %v2704
    %2916 = vmatpush1.bf16.msra.mxu0 %v2703
    %2917 = vmatprep.subr.bf16.mxu0 0
    %2918 = vmatpush1.bf16.msra.mxu0 0
    %2919 = vmatprep.subr.bf16.mxu0 0
    %2920 = vmatpush1.bf16.msra.mxu0 0
    %2921 = vmatprep.subr.bf16.mxu0 0
    %2922 = vmatpush1.bf16.msra.mxu0 0
    %2923 = vmatprep.subr.bf16.mxu0 0
    %2924 = vmatpush1.bf16.msra.mxu0 0
    %2925 = vmatprep.subr.bf16.mxu0 0
    %2926 = vmatpush1.bf16.msra.mxu0 0
    %2927 = vmatprep.subr.bf16.mxu0 0
    %2928 = vmatpush1.bf16.msra.mxu0 0
    %2929 = vmatprep.subr.bf16.mxu0 0
    %2930 = vmatpush1.bf16.msra.mxu0 0
    %2931 = vmatprep.subr.bf16.mxu0 0
    %2932 = vmatpush1.bf16.msra.mxu0 0
    %2933 = vmatprep.mubr.bf16.mxu0 0
    %2934 = vmatmul.mubr.bf16.gmra.mrb[0].mxu0 %v2203
    %v2935 = vpop.f32.mrb[0].mxu0
    %v2936 = vadd.f32 0.0, %v2935
    %v2937 = vpop.f32.mrb[0].mxu0
    %v2938 = vadd.f32 0.0, %v2937
    %v2939 = vpop.f32.mrb[0].mxu0
    %v2940 = vadd.f32 0.0, %v2939
    %v2941 = vpop.f32.mrb[0].mxu0
    %v2942 = vadd.f32 0.0, %v2941
    %2943 = vdwg.mxu0
    %v2944 = vadd.f32 %v2897, %v2936
    %v2945 = vadd.f32 %v2898, %v2938
    %v2946 = vadd.f32 %v2899, %v2940
    %v2947 = vadd.f32 %v2900, %v2942
    %v2948 = vsel %vm400, %v2766, 0.0
    %v2949 = vadd.f32 %v2764, %v2948
    %v2950 = vrot.slane %v2949, 4
    %v2951 = vadd.f32 %v2949, %v2950
    %v2952 = vrot.slane %v2951, 2
    %v2953 = vadd.f32 %v2951, %v2952
    %v2954 = vrot.slane %v2953, 1
    %v2955 = vadd.f32 %v2953, %v2954
    %v2956 = vsel %vm400, %v2767, 0.0
    %v2957 = vadd.f32 %v2765, %v2956
    %v2958 = vrot.slane %v2957, 4
    %v2959 = vadd.f32 %v2957, %v2958
    %v2960 = vrot.slane %v2959, 2
    %v2961 = vadd.f32 %v2959, %v2960
    %v2962 = vrot.slane %v2961, 1
    %v2963 = vadd.f32 %v2961, %v2962
    %v2964 = vmul.f32 %v2764, %v2764
    %v2965 = vmul.f32 %v2765, %v2765
    %v2966 = vmul.f32 %v2766, %v2766
    %v2967 = vmul.f32 %v2767, %v2767
    %v2968 = vsel %vm400, %v2966, 0.0
    %v2969 = vadd.f32 %v2964, %v2968
    %v2970 = vrot.slane %v2969, 4
    %v2971 = vadd.f32 %v2969, %v2970
    %v2972 = vrot.slane %v2971, 2
    %v2973 = vadd.f32 %v2971, %v2972
    %v2974 = vrot.slane %v2973, 1
    %v2975 = vadd.f32 %v2973, %v2974
    %v2976 = vsel %vm400, %v2967, 0.0
    %v2977 = vadd.f32 %v2965, %v2976
    %v2978 = vrot.slane %v2977, 4
    %v2979 = vadd.f32 %v2977, %v2978
    %v2980 = vrot.slane %v2979, 2
    %v2981 = vadd.f32 %v2979, %v2980
    %v2982 = vrot.slane %v2981, 1
    %v2983 = vadd.f32 %v2981, %v2982
    %v2984 = vsel %vm400, %v2946, 0.0
    %v2985 = vadd.f32 %v2944, %v2984
    %v2986 = vrot.slane %v2985, 4
    %v2987 = vadd.f32 %v2985, %v2986
    %v2988 = vrot.slane %v2987, 2
    %v2989 = vadd.f32 %v2987, %v2988
    %v2990 = vrot.slane %v2989, 1
    %v2991 = vadd.f32 %v2989, %v2990
    %v2992 = vsel %vm400, %v2947, 0.0
    %v2993 = vadd.f32 %v2945, %v2992
    %v2994 = vrot.slane %v2993, 4
    %v2995 = vadd.f32 %v2993, %v2994
    %v2996 = vrot.slane %v2995, 2
    %v2997 = vadd.f32 %v2995, %v2996
    %v2998 = vrot.slane %v2997, 1
    %v2999 = vadd.f32 %v2997, %v2998
    %v3000 = vadd.f32 %v2955, %v2991
    %v3001 = vadd.f32 %v2963, %v2999
    %v3002 = vmul.f32 %v2944, %v2944
    %v3003 = vmul.f32 %v2945, %v2945
    %v3004 = vmul.f32 %v2946, %v2946
    %v3005 = vmul.f32 %v2947, %v2947
    %v3006 = vsel %vm400, %v3004, 0.0
    %v3007 = vadd.f32 %v3002, %v3006
    %v3008 = vrot.slane %v3007, 4
    %v3009 = vadd.f32 %v3007, %v3008
    %v3010 = vrot.slane %v3009, 2
    %v3011 = vadd.f32 %v3009, %v3010
    %v3012 = vrot.slane %v3011, 1
    %v3013 = vadd.f32 %v3011, %v3012
    %v3014 = vsel %vm400, %v3005, 0.0
    %v3015 = vadd.f32 %v3003, %v3014
    %v3016 = vrot.slane %v3015, 4
    %v3017 = vadd.f32 %v3015, %v3016
    %v3018 = vrot.slane %v3017, 2
    %v3019 = vadd.f32 %v3017, %v3018
    %v3020 = vrot.slane %v3019, 1
    %v3021 = vadd.f32 %v3019, %v3020
    %v3022 = vadd.f32 %v2975, %v3013
    %v3023 = vadd.f32 %v2983, %v3021
    %v3024 = vmul.f32 %v3000, 0.055555556
    %v3025 = vmul.f32 %v3001, 0.055555556
    %v3026 = vmul.f32 %v3022, 0.055555556
    %v3027 = vmul.f32 %v3023, 0.055555556
    %v3028 = vmul.f32 %v3024, %v3024
    %v3029 = vmul.f32 %v3025, %v3025
    %v3030 = vsub.f32 %v3026, %v3028
    %v3031 = vsub.f32 %v3027, %v3029
    %v3032 = vld [vmem:[%s8] ss:$2 sm:$0x3]
    %v3033 = vadd.f32 %v3030, 1e-05
    %v3034 = vadd.f32 %v3031, 1e-05
    %v3035 = vrsqrt.pop %v3033
    %v3036 = vrsqrt.pop %v3034
    %v3039 = vcombine.low %v3035, %v3036
    %v3041 = vunpack.c.l.s4 1966171168
    %v3042 = vunpack.c.0.s8 %v3041
    %v3043 = vlaneseq
    %v3044 = vshrl.u32 %v3043, 7
    %v3045 = vsub.s32 %v3042, %v3044
    %v3046 = vrot.slane %v3039, %v3045
    %v3048 = vunpack.c.l.s4 1966171168
    %v3049 = vunpack.c.0.s8 %v3048
    %v3050 = vlaneseq
    %v3051 = vshrl.u32 %v3050, 7
    %v3052 = vsub.s32 %v3049, %v3051
    %v3053 = vrot.slane %v3046, %v3052
    %v3055 = vmul.f32 %v3032, %v3053
    %s3056 = scalar_lea.vmem %s8, 1
    %v3057 = vld [vmem:[%s3056] ss:$2 sm:$0x3]
    %v3059 = vlaneseq
    %v3060 = vshrl.u32 %v3059, 7
    %v3061 = vsub.s32 0, %v3060
    %v3062 = vrot.slane %v3055, %v3061
    %v3063 = vlaneseq
    %v3064 = vshrl.u32 %v3063, 7
    %v3065 = vsub.s32 1, %v3064
    %v3066 = vrot.slane %v3055, %v3065
    %v3069 = vmul.f32 %v3024, %v3062
    %v3070 = vmul.f32 %v3025, %v3066
    %v3073 = vcombine.low %v3069, %v3070
    %v3075 = vunpack.c.l.s4 1966171168
    %v3076 = vunpack.c.0.s8 %v3075
    %v3077 = vlaneseq
    %v3078 = vshrl.u32 %v3077, 7
    %v3079 = vsub.s32 %v3076, %v3078
    %v3080 = vrot.slane %v3073, %v3079
    %v3082 = vunpack.c.l.s4 1966171168
    %v3083 = vunpack.c.0.s8 %v3082
    %v3084 = vlaneseq
    %v3085 = vshrl.u32 %v3084, 7
    %v3086 = vsub.s32 %v3083, %v3085
    %v3087 = vrot.slane %v3080, %v3086
    %v3089 = vsub.f32 %v3057, %v3087
    %v3090 = vmul.f32 %v2764, %v3062
    %v3091 = vmul.f32 %v2765, %v3066
    %v3092 = vmul.f32 %v2766, %v3062
    %v3093 = vmul.f32 %v2767, %v3066
    %v3095 = vlaneseq
    %v3096 = vshrl.u32 %v3095, 7
    %v3097 = vsub.s32 0, %v3096
    %v3098 = vrot.slane %v3089, %v3097
    %v3099 = vlaneseq
    %v3100 = vshrl.u32 %v3099, 7
    %v3101 = vsub.s32 1, %v3100
    %v3102 = vrot.slane %v3089, %v3101
    %v3105 = vadd.f32 %v3090, %v3098
    %v3106 = vadd.f32 %v3091, %v3102
    %v3107 = vadd.f32 %v3092, %v3098
    %v3108 = vadd.f32 %v3093, %v3102
    %v3109 = vadd.f32 %v3105, %v3106
    %v3110 = vadd.f32 %v3107, %v3108
    %v3111 = vmax.f32 %v3109, 0.0
    %v3112 = vmax.f32 %v3110, 0.0
    %v3113 = vmul.f32 %v2944, %v3062
    %v3114 = vmul.f32 %v2945, %v3066
    %v3115 = vmul.f32 %v2946, %v3062
    %v3116 = vmul.f32 %v2947, %v3066
    %v3117 = vadd.f32 %v3113, %v3098
    %v3118 = vadd.f32 %v3114, %v3102
    %v3119 = vadd.f32 %v3115, %v3098
    %v3120 = vadd.f32 %v3116, %v3102
    %v3121 = vadd.f32 %v3117, %v3118
    %v3122 = vadd.f32 %v3119, %v3120
    %v3123 = vmax.f32 %v3121, 0.0
    %v3124 = vmax.f32 %v3122, 0.0
    %v3125 = vpack.c.bf16 %v3112, %v3111
    %v3126 = vpack.c.bf16 %v3124, %v3123
    %v3127 = vld [vmem:[%s9] sm:$0x3]
    %vm3128 = vcmask 72704
    %v3130 = vsel %vm3128, %v3127, 0
    %v3133 = vand.u32 %v3125, %v1984
    %v3136 = vand.u32 %v3126, %v1984
    %3138 = vmatprep.subr.bf16.mxu0 %v3136
    %3139 = vmatpush1.bf16.msra.mxu0 %v3133
    %3140 = vmatprep.subr.bf16.mxu0 0
    %3141 = vmatpush1.bf16.msra.mxu0 0
    %3142 = vmatprep.subr.bf16.mxu0 0
    %3143 = vmatpush1.bf16.msra.mxu0 0
    %3144 = vmatprep.subr.bf16.mxu0 0
    %3145 = vmatpush1.bf16.msra.mxu0 0
    %3146 = vmatprep.subr.bf16.mxu0 0
    %3147 = vmatpush1.bf16.msra.mxu0 0
    %3148 = vmatprep.subr.bf16.mxu0 0
    %3149 = vmatpush1.bf16.msra.mxu0 0
    %3150 = vmatprep.subr.bf16.mxu0 0
    %3151 = vmatpush1.bf16.msra.mxu0 0
    %3152 = vmatprep.subr.bf16.mxu0 0
    %3153 = vmatpush1.bf16.msra.mxu0 0
    %3154 = vmatprep.subr.bf16.mxu0 0
    %3155 = vmatpush1.bf16.msra.mxu0 0
    %3156 = vmatprep.subr.bf16.mxu0 0
    %3157 = vmatpush1.bf16.msra.mxu0 0
    %3158 = vmatprep.subr.bf16.mxu0 0
    %3159 = vmatpush1.bf16.msra.mxu0 0
    %3160 = vmatprep.subr.bf16.mxu0 0
    %3161 = vmatpush1.bf16.msra.mxu0 0
    %3162 = vmatprep.subr.bf16.mxu0 0
    %3163 = vmatpush1.bf16.msra.mxu0 0
    %3164 = vmatprep.subr.bf16.mxu0 0
    %3165 = vmatpush1.bf16.msra.mxu0 0
    %3166 = vmatprep.subr.bf16.mxu0 0
    %3167 = vmatpush1.bf16.msra.mxu0 0
    %3168 = vmatprep.subr.bf16.mxu0 0
    %3169 = vmatpush1.bf16.msra.mxu0 0
    %3170 = vmatprep.mubr.bf16.mxu0 0
    %3171 = vmatmul.mubr.bf16.gmra.mrb[0].mxu0 %v3130
    %v3172 = vpop.f32.mrb[0].mxu0
    %v3173 = vadd.f32 0.0, %v3172
    %v3174 = vpop.f32.mrb[0].mxu0
    %v3175 = vadd.f32 0.0, %v3174
    %v3176 = vpop.f32.mrb[0].mxu0
    %v3177 = vpop.f32.mrb[0].mxu0
    %3178 = vdwg.mxu0
    %v3179 = vpack.c.bf16 %v3173, %v3173
    %v3180 = vpack.c.bf16 %v3175, %v3175
    %s3181 = scalar_lea.vmem %s9, 2
    %v3182 = vld [vmem:[%s3181] sm:$0x3]
    %v3184 = vsel %vm3128, %v3182, 0
    %3186 = vmatprep.subr.bf16.mxu0 %v3136
    %3187 = vmatpush1.bf16.msra.mxu0 %v3133
    %3188 = vmatprep.subr.bf16.mxu0 0
    %3189 = vmatpush1.bf16.msra.mxu0 0
    %3190 = vmatprep.subr.bf16.mxu0 0
    %3191 = vmatpush1.bf16.msra.mxu0 0
    %3192 = vmatprep.subr.bf16.mxu0 0
    %3193 = vmatpush1.bf16.msra.mxu0 0
    %3194 = vmatprep.subr.bf16.mxu0 0
    %3195 = vmatpush1.bf16.msra.mxu0 0
    %3196 = vmatprep.subr.bf16.mxu0 0
    %3197 = vmatpush1.bf16.msra.mxu0 0
    %3198 = vmatprep.subr.bf16.mxu0 0
    %3199 = vmatpush1.bf16.msra.mxu0 0
    %3200 = vmatprep.subr.bf16.mxu0 0
    %3201 = vmatpush1.bf16.msra.mxu0 0
    %3202 = vmatprep.subr.bf16.mxu0 0
    %3203 = vmatpush1.bf16.msra.mxu0 0
    %3204 = vmatprep.subr.bf16.mxu0 0
    %3205 = vmatpush1.bf16.msra.mxu0 0
    %3206 = vmatprep.subr.bf16.mxu0 0
    %3207 = vmatpush1.bf16.msra.mxu0 0
    %3208 = vmatprep.subr.bf16.mxu0 0
    %3209 = vmatpush1.bf16.msra.mxu0 0
    %3210 = vmatprep.subr.bf16.mxu0 0
    %3211 = vmatpush1.bf16.msra.mxu0 0
    %3212 = vmatprep.subr.bf16.mxu0 0
    %3213 = vmatpush1.bf16.msra.mxu0 0
    %3214 = vmatprep.subr.bf16.mxu0 0
    %3215 = vmatpush1.bf16.msra.mxu0 0
    %3216 = vmatprep.subr.bf16.mxu0 0
    %3217 = vmatpush1.bf16.msra.mxu0 0
    %3218 = vmatprep.mubr.bf16.mxu0 0
    %3219 = vmatmul.mubr.bf16.gmra.mrb[0].mxu0 %v3184
    %v3220 = vpop.f32.mrb[0].mxu0
    %v3221 = vadd.f32 0.0, %v3220
    %v3222 = vpop.f32.mrb[0].mxu0
    %v3223 = vadd.f32 0.0, %v3222
    %v3224 = vpop.f32.mrb[0].mxu0
    %v3225 = vpop.f32.mrb[0].mxu0
    %3226 = vdwg.mxu0
    %v3227 = vpack.c.bf16 %v3221, %v3221
    %v3228 = vpack.c.bf16 %v3223, %v3223
    %s3229 = scalar_lea.vmem %s9, 4
    %v3230 = vld [vmem:[%s3229] sm:$0x3]
    %v3232 = vsel %vm3128, %v3230, 0
    %3234 = vmatprep.subr.bf16.mxu0 %v3136
    %3235 = vmatpush1.bf16.msra.mxu0 %v3133
    %3236 = vmatprep.subr.bf16.mxu0 0
    %3237 = vmatpush1.bf16.msra.mxu0 0
    %3238 = vmatprep.subr.bf16.mxu0 0
    %3239 = vmatpush1.bf16.msra.mxu0 0
    %3240 = vmatprep.subr.bf16.mxu0 0
    %3241 = vmatpush1.bf16.msra.mxu0 0
    %3242 = vmatprep.subr.bf16.mxu0 0
    %3243 = vmatpush1.bf16.msra.mxu0 0
    %3244 = vmatprep.subr.bf16.mxu0 0
    %3245 = vmatpush1.bf16.msra.mxu0 0
    %3246 = vmatprep.subr.bf16.mxu0 0
    %3247 = vmatpush1.bf16.msra.mxu0 0
    %3248 = vmatprep.subr.bf16.mxu0 0
    %3249 = vmatpush1.bf16.msra.mxu0 0
    %3250 = vmatprep.subr.bf16.mxu0 0
    %3251 = vmatpush1.bf16.msra.mxu0 0
    %3252 = vmatprep.subr.bf16.mxu0 0
    %3253 = vmatpush1.bf16.msra.mxu0 0
    %3254 = vmatprep.subr.bf16.mxu0 0
    %3255 = vmatpush1.bf16.msra.mxu0 0
    %3256 = vmatprep.subr.bf16.mxu0 0
    %3257 = vmatpush1.bf16.msra.mxu0 0
    %3258 = vmatprep.subr.bf16.mxu0 0
    %3259 = vmatpush1.bf16.msra.mxu0 0
    %3260 = vmatprep.subr.bf16.mxu0 0
    %3261 = vmatpush1.bf16.msra.mxu0 0
    %3262 = vmatprep.subr.bf16.mxu0 0
    %3263 = vmatpush1.bf16.msra.mxu0 0
    %3264 = vmatprep.subr.bf16.mxu0 0
    %3265 = vmatpush1.bf16.msra.mxu0 0
    %3266 = vmatprep.mubr.bf16.mxu0 0
    %3267 = vmatmul.mubr.bf16.gmra.mrb[0].mxu0 %v3232
    %v3268 = vpop.f32.mrb[0].mxu0
    %v3269 = vadd.f32 0.0, %v3268
    %v3270 = vpop.f32.mrb[0].mxu0
    %v3271 = vadd.f32 0.0, %v3270
    %v3272 = vpop.f32.mrb[0].mxu0
    %v3273 = vpop.f32.mrb[0].mxu0
    %3274 = vdwg.mxu0
    %v3275 = vpack.c.bf16 %v3269, %v3269
    %v3276 = vpack.c.bf16 %v3271, %v3271
    %s3277 = scalar_lea.vmem %s9, 6
    %v3278 = vld [vmem:[%s3277] sm:$0x3]
    %v3280 = vsel %vm3128, %v3278, 0
    %3282 = vmatprep.subr.bf16.mxu0 %v3136
    %3283 = vmatpush1.bf16.msra.mxu0 %v3133
    %3284 = vmatprep.subr.bf16.mxu0 0
    %3285 = vmatpush1.bf16.msra.mxu0 0
    %3286 = vmatprep.subr.bf16.mxu0 0
    %3287 = vmatpush1.bf16.msra.mxu0 0
    %3288 = vmatprep.subr.bf16.mxu0 0
    %3289 = vmatpush1.bf16.msra.mxu0 0
    %3290 = vmatprep.subr.bf16.mxu0 0
    %3291 = vmatpush1.bf16.msra.mxu0 0
    %3292 = vmatprep.subr.bf16.mxu0 0
    %3293 = vmatpush1.bf16.msra.mxu0 0
    %3294 = vmatprep.subr.bf16.mxu0 0
    %3295 = vmatpush1.bf16.msra.mxu0 0
    %3296 = vmatprep.subr.bf16.mxu0 0
    %3297 = vmatpush1.bf16.msra.mxu0 0
    %3298 = vmatprep.subr.bf16.mxu0 0
    %3299 = vmatpush1.bf16.msra.mxu0 0
    %3300 = vmatprep.subr.bf16.mxu0 0
    %3301 = vmatpush1.bf16.msra.mxu0 0
    %3302 = vmatprep.subr.bf16.mxu0 0
    %3303 = vmatpush1.bf16.msra.mxu0 0
    %3304 = vmatprep.subr.bf16.mxu0 0
    %3305 = vmatpush1.bf16.msra.mxu0 0
    %3306 = vmatprep.subr.bf16.mxu0 0
    %3307 = vmatpush1.bf16.msra.mxu0 0
    %3308 = vmatprep.subr.bf16.mxu0 0
    %3309 = vmatpush1.bf16.msra.mxu0 0
    %3310 = vmatprep.subr.bf16.mxu0 0
    %3311 = vmatpush1.bf16.msra.mxu0 0
    %3312 = vmatprep.subr.bf16.mxu0 0
    %3313 = vmatpush1.bf16.msra.mxu0 0
    %3314 = vmatprep.mubr.bf16.mxu0 0
    %3315 = vmatmul.mubr.bf16.gmra.mrb[0].mxu0 %v3280
    %v3316 = vpop.f32.mrb[0].mxu0
    %v3317 = vadd.f32 0.0, %v3316
    %v3318 = vpop.f32.mrb[0].mxu0
    %v3319 = vadd.f32 0.0, %v3318
    %v3320 = vpop.f32.mrb[0].mxu0
    %v3321 = vpop.f32.mrb[0].mxu0
    %3322 = vdwg.mxu0
    %v3323 = vpack.c.bf16 %v3317, %v3317
    %v3324 = vpack.c.bf16 %v3319, %v3319
    %v3325 = vld [vmem:[#allocation2] sm:$0xff]
    %v3326 = vld [vmem:[#allocation2 + $0x8] sm:$0xff]
    %v3327 = vld [vmem:[#allocation2 + $0x10] sm:$0xff]
    %v3328 = vld [vmem:[#allocation2 + $0x18] sm:$0xff]
    %v3329 = vld [vmem:[#allocation2 + $0x20] sm:$0xff]
    %v3330 = vld [vmem:[#allocation2 + $0x28] sm:$0xff]
    %v3331 = vld [vmem:[#allocation2 + $0x30] sm:$0xff]
    %v3332 = vld [vmem:[#allocation2 + $0x38] sm:$0xff]
    %v3333 = vld [vmem:[#allocation2 + $0x40] sm:$0xff]
    %v3334 = vld [vmem:[#allocation2 + $0x48] sm:$0xff]
    %v3335 = vld [vmem:[#allocation2 + $0x50] sm:$0xff]
    %v3336 = vld [vmem:[#allocation2 + $0x58] sm:$0xff]
    %v3337 = vld [vmem:[#allocation2 + $0x60] sm:$0xff]
    %v3338 = vld [vmem:[#allocation2 + $0x68] sm:$0xff]
    %v3339 = vld [vmem:[#allocation2 + $0x70] sm:$0xff]
    %v3340 = vld [vmem:[#allocation2 + $0x78] sm:$0xff]
    %v3341 = vld [vmem:[#allocation2 + $0x80] sm:$0xff]
    %v3342 = vld [vmem:[#allocation2 + $0x88] sm:$0xff]
    %v3343 = vld [vmem:[#allocation2 + $0x90] sm:$0xff]
    %v3344 = vld [vmem:[#allocation2 + $0x98] sm:$0xff]
    %v3345 = vld [vmem:[#allocation2 + $0xa0] sm:$0xff]
    %v3346 = vld [vmem:[#allocation2 + $0xa8] sm:$0xff]
    %v3347 = vld [vmem:[#allocation2 + $0xb0] sm:$0xff]
    %v3348 = vld [vmem:[#allocation2 + $0xb8] sm:$0xff]
    %v3349 = vld [vmem:[#allocation2 + $0xc0] sm:$0xff]
    %v3350 = vld [vmem:[#allocation2 + $0xc8] sm:$0xff]
    %v3351 = vld [vmem:[#allocation2 + $0xd0] sm:$0xff]
    %v3352 = vld [vmem:[#allocation2 + $0xd8] sm:$0xff]
    %v3353 = vld [vmem:[#allocation2 + $0xe0] sm:$0xff]
    %v3354 = vld [vmem:[#allocation2 + $0xe8] sm:$0xff]
    %v3355 = vld [vmem:[#allocation2 + $0xf0] sm:$0xff]
    %v3356 = vld [vmem:[#allocation2 + $0xf8] sm:$0xff]
    %v3373 = vunpack.c.l.b16 %v3341
    %v3374 = vunpack.c.h.b16 %v3341
    %v3375 = vunpack.c.l.b16 %v3342
    %v3376 = vunpack.c.h.b16 %v3342
    %v3377 = vunpack.c.l.b16 %v3343
    %v3378 = vunpack.c.h.b16 %v3343
    %v3379 = vunpack.c.l.b16 %v3344
    %v3380 = vunpack.c.h.b16 %v3344
    %v3381 = vunpack.c.l.b16 %v3345
    %v3382 = vunpack.c.h.b16 %v3345
    %v3383 = vunpack.c.l.b16 %v3346
    %v3384 = vunpack.c.h.b16 %v3346
    %v3385 = vunpack.c.l.b16 %v3347
    %v3386 = vunpack.c.h.b16 %v3347
    %v3387 = vunpack.c.l.b16 %v3348
    %v3388 = vunpack.c.h.b16 %v3348
    %v3389 = vunpack.c.l.b16 %v3349
    %v3390 = vunpack.c.h.b16 %v3349
    %v3391 = vunpack.c.l.b16 %v3350
    %v3392 = vunpack.c.h.b16 %v3350
    %v3393 = vunpack.c.l.b16 %v3351
    %v3394 = vunpack.c.h.b16 %v3351
    %v3395 = vunpack.c.l.b16 %v3352
    %v3396 = vunpack.c.h.b16 %v3352
    %v3397 = vunpack.c.l.b16 %v3353
    %v3398 = vunpack.c.h.b16 %v3353
    %v3399 = vunpack.c.l.b16 %v3354
    %v3400 = vunpack.c.h.b16 %v3354
    %v3401 = vunpack.c.l.b16 %v3355
    %v3402 = vunpack.c.h.b16 %v3355
    %v3403 = vunpack.c.l.b16 %v3356
    %v3404 = vunpack.c.h.b16 %v3356
    %v3405 = vpack.c.b16 %v3375, %v3373
    %v3406 = vpack.c.b16 %v3376, %v3374
    %v3407 = vpack.c.b16 %v3379, %v3377
    %v3408 = vpack.c.b16 %v3380, %v3378
    %v3409 = vpack.c.b16 %v3383, %v3381
    %v3410 = vpack.c.b16 %v3384, %v3382
    %v3411 = vpack.c.b16 %v3387, %v3385
    %v3412 = vpack.c.b16 %v3388, %v3386
    %v3413 = vpack.c.b16 %v3391, %v3389
    %v3414 = vpack.c.b16 %v3392, %v3390
    %v3415 = vpack.c.b16 %v3395, %v3393
    %v3416 = vpack.c.b16 %v3396, %v3394
    %v3417 = vpack.c.b16 %v3399, %v3397
    %v3418 = vpack.c.b16 %v3400, %v3398
    %v3419 = vpack.c.b16 %v3403, %v3401
    %v3420 = vpack.c.b16 %v3404, %v3402
    %3437 = vmatprep.subr.bf16.mxu0 %v3406
    %3438 = vmatpush1.bf16.msra.mxu0 %v3405
    %3439 = vmatprep.subr.bf16.mxu0 %v3408
    %3440 = vmatpush1.bf16.msra.mxu0 %v3407
    %3441 = vmatprep.subr.bf16.mxu0 %v3410
    %3442 = vmatpush1.bf16.msra.mxu0 %v3409
    %3443 = vmatprep.subr.bf16.mxu0 %v3412
    %3444 = vmatpush1.bf16.msra.mxu0 %v3411
    %3445 = vmatprep.subr.bf16.mxu0 %v3414
    %3446 = vmatpush1.bf16.msra.mxu0 %v3413
    %3447 = vmatprep.subr.bf16.mxu0 %v3416
    %3448 = vmatpush1.bf16.msra.mxu0 %v3415
    %3449 = vmatprep.subr.bf16.mxu0 %v3418
    %3450 = vmatpush1.bf16.msra.mxu0 %v3417
    %3451 = vmatprep.subr.bf16.mxu0 %v3420
    %3452 = vmatpush1.bf16.msra.mxu0 %v3419
    %3453 = vmatprep.subr.bf16.mxu0 0
    %3454 = vmatpush1.bf16.msra.mxu0 0
    %3455 = vmatprep.subr.bf16.mxu0 0
    %3456 = vmatpush1.bf16.msra.mxu0 0
    %3457 = vmatprep.subr.bf16.mxu0 0
    %3458 = vmatpush1.bf16.msra.mxu0 0
    %3459 = vmatprep.subr.bf16.mxu0 0
    %3460 = vmatpush1.bf16.msra.mxu0 0
    %3461 = vmatprep.subr.bf16.mxu0 0
    %3462 = vmatpush1.bf16.msra.mxu0 0
    %3463 = vmatprep.subr.bf16.mxu0 0
    %3464 = vmatpush1.bf16.msra.mxu0 0
    %3465 = vmatprep.subr.bf16.mxu0 0
    %3466 = vmatpush1.bf16.msra.mxu0 0
    %3467 = vmatprep.subr.bf16.mxu0 0
    %3468 = vmatpush1.bf16.msra.mxu0 0
    %3469 = vmatprep.mubr.bf16.mxu0 0
    %3470 = vmatmul.mubr.bf16.gmra.mrb[0].mxu0 %v3227
    %v3471 = vpop.f32.mrb[0].mxu0
    %v3472 = vadd.f32 0.0, %v3471
    %v3473 = vpop.f32.mrb[0].mxu0
    %v3474 = vadd.f32 0.0, %v3473
    %v3475 = vpop.f32.mrb[0].mxu0
    %v3476 = vpop.f32.mrb[0].mxu0
    %3477 = vdwg.mxu0
    %v3494 = vunpack.c.l.b16 %v3325
    %v3495 = vunpack.c.h.b16 %v3325
    %v3496 = vunpack.c.l.b16 %v3326
    %v3497 = vunpack.c.h.b16 %v3326
    %v3498 = vunpack.c.l.b16 %v3327
    %v3499 = vunpack.c.h.b16 %v3327
    %v3500 = vunpack.c.l.b16 %v3328
    %v3501 = vunpack.c.h.b16 %v3328
    %v3502 = vunpack.c.l.b16 %v3329
    %v3503 = vunpack.c.h.b16 %v3329
    %v3504 = vunpack.c.l.b16 %v3330
    %v3505 = vunpack.c.h.b16 %v3330
    %v3506 = vunpack.c.l.b16 %v3331
    %v3507 = vunpack.c.h.b16 %v3331
    %v3508 = vunpack.c.l.b16 %v3332
    %v3509 = vunpack.c.h.b16 %v3332
    %v3510 = vunpack.c.l.b16 %v3333
    %v3511 = vunpack.c.h.b16 %v3333
    %v3512 = vunpack.c.l.b16 %v3334
    %v3513 = vunpack.c.h.b16 %v3334
    %v3514 = vunpack.c.l.b16 %v3335
    %v3515 = vunpack.c.h.b16 %v3335
    %v3516 = vunpack.c.l.b16 %v3336
    %v3517 = vunpack.c.h.b16 %v3336
    %v3518 = vunpack.c.l.b16 %v3337
    %v3519 = vunpack.c.h.b16 %v3337
    %v3520 = vunpack.c.l.b16 %v3338
    %v3521 = vunpack.c.h.b16 %v3338
    %v3522 = vunpack.c.l.b16 %v3339
    %v3523 = vunpack.c.h.b16 %v3339
    %v3524 = vunpack.c.l.b16 %v3340
    %v3525 = vunpack.c.h.b16 %v3340
    %v3526 = vpack.c.b16 %v3496, %v3494
    %v3527 = vpack.c.b16 %v3497, %v3495
    %v3528 = vpack.c.b16 %v3500, %v3498
    %v3529 = vpack.c.b16 %v3501, %v3499
    %v3530 = vpack.c.b16 %v3504, %v3502
    %v3531 = vpack.c.b16 %v3505, %v3503
    %v3532 = vpack.c.b16 %v3508, %v3506
    %v3533 = vpack.c.b16 %v3509, %v3507
    %v3534 = vpack.c.b16 %v3512, %v3510
    %v3535 = vpack.c.b16 %v3513, %v3511
    %v3536 = vpack.c.b16 %v3516, %v3514
    %v3537 = vpack.c.b16 %v3517, %v3515
    %v3538 = vpack.c.b16 %v3520, %v3518
    %v3539 = vpack.c.b16 %v3521, %v3519
    %v3540 = vpack.c.b16 %v3524, %v3522
    %v3541 = vpack.c.b16 %v3525, %v3523
    %3558 = vmatprep.subr.bf16.mxu0 %v3527
    %3559 = vmatpush1.bf16.msra.mxu0 %v3526
    %3560 = vmatprep.subr.bf16.mxu0 %v3529
    %3561 = vmatpush1.bf16.msra.mxu0 %v3528
    %3562 = vmatprep.subr.bf16.mxu0 %v3531
    %3563 = vmatpush1.bf16.msra.mxu0 %v3530
    %3564 = vmatprep.subr.bf16.mxu0 %v3533
    %3565 = vmatpush1.bf16.msra.mxu0 %v3532
    %3566 = vmatprep.subr.bf16.mxu0 %v3535
    %3567 = vmatpush1.bf16.msra.mxu0 %v3534
    %3568 = vmatprep.subr.bf16.mxu0 %v3537
    %3569 = vmatpush1.bf16.msra.mxu0 %v3536
    %3570 = vmatprep.subr.bf16.mxu0 %v3539
    %3571 = vmatpush1.bf16.msra.mxu0 %v3538
    %3572 = vmatprep.subr.bf16.mxu0 %v3541
    %3573 = vmatpush1.bf16.msra.mxu0 %v3540
    %3574 = vmatprep.subr.bf16.mxu0 0
    %3575 = vmatpush1.bf16.msra.mxu0 0
    %3576 = vmatprep.subr.bf16.mxu0 0
    %3577 = vmatpush1.bf16.msra.mxu0 0
    %3578 = vmatprep.subr.bf16.mxu0 0
    %3579 = vmatpush1.bf16.msra.mxu0 0
    %3580 = vmatprep.subr.bf16.mxu0 0
    %3581 = vmatpush1.bf16.msra.mxu0 0
    %3582 = vmatprep.subr.bf16.mxu0 0
    %3583 = vmatpush1.bf16.msra.mxu0 0
    %3584 = vmatprep.subr.bf16.mxu0 0
    %3585 = vmatpush1.bf16.msra.mxu0 0
    %3586 = vmatprep.subr.bf16.mxu0 0
    %3587 = vmatpush1.bf16.msra.mxu0 0
    %3588 = vmatprep.subr.bf16.mxu0 0
    %3589 = vmatpush1.bf16.msra.mxu0 0
    %3590 = vmatprep.mubr.bf16.mxu0 0
    %3591 = vmatmul.mubr.bf16.gmra.mrb[0].mxu0 %v3179
    %v3592 = vpop.f32.mrb[0].mxu0
    %v3593 = vadd.f32 %v3472, %v3592
    %v3594 = vpop.f32.mrb[0].mxu0
    %v3595 = vadd.f32 %v3474, %v3594
    %v3596 = vpop.f32.mrb[0].mxu0
    %v3597 = vpop.f32.mrb[0].mxu0
    %3598 = vdwg.mxu0
    %v3599 = vld [vmem:[#allocation2 + $0x100] sm:$0xff]
    %v3600 = vld [vmem:[#allocation2 + $0x108] sm:$0xff]
    %v3601 = vld [vmem:[#allocation2 + $0x110] sm:$0xff]
    %v3602 = vld [vmem:[#allocation2 + $0x118] sm:$0xff]
    %v3603 = vld [vmem:[#allocation2 + $0x120] sm:$0xff]
    %v3604 = vld [vmem:[#allocation2 + $0x128] sm:$0xff]
    %v3605 = vld [vmem:[#allocation2 + $0x130] sm:$0xff]
    %v3606 = vld [vmem:[#allocation2 + $0x138] sm:$0xff]
    %v3607 = vld [vmem:[#allocation2 + $0x140] sm:$0xff]
    %v3608 = vld [vmem:[#allocation2 + $0x148] sm:$0xff]
    %v3609 = vld [vmem:[#allocation2 + $0x150] sm:$0xff]
    %v3610 = vld [vmem:[#allocation2 + $0x158] sm:$0xff]
    %v3611 = vld [vmem:[#allocation2 + $0x160] sm:$0xff]
    %v3612 = vld [vmem:[#allocation2 + $0x168] sm:$0xff]
    %v3613 = vld [vmem:[#allocation2 + $0x170] sm:$0xff]
    %v3614 = vld [vmem:[#allocation2 + $0x178] sm:$0xff]
    %v3631 = vunpack.c.l.b16 %v3599
    %v3632 = vunpack.c.h.b16 %v3599
    %v3633 = vunpack.c.l.b16 %v3600
    %v3634 = vunpack.c.h.b16 %v3600
    %v3635 = vunpack.c.l.b16 %v3601
    %v3636 = vunpack.c.h.b16 %v3601
    %v3637 = vunpack.c.l.b16 %v3602
    %v3638 = vunpack.c.h.b16 %v3602
    %v3639 = vunpack.c.l.b16 %v3603
    %v3640 = vunpack.c.h.b16 %v3603
    %v3641 = vunpack.c.l.b16 %v3604
    %v3642 = vunpack.c.h.b16 %v3604
    %v3643 = vunpack.c.l.b16 %v3605
    %v3644 = vunpack.c.h.b16 %v3605
    %v3645 = vunpack.c.l.b16 %v3606
    %v3646 = vunpack.c.h.b16 %v3606
    %v3647 = vunpack.c.l.b16 %v3607
    %v3648 = vunpack.c.h.b16 %v3607
    %v3649 = vunpack.c.l.b16 %v3608
    %v3650 = vunpack.c.h.b16 %v3608
    %v3651 = vunpack.c.l.b16 %v3609
    %v3652 = vunpack.c.h.b16 %v3609
    %v3653 = vunpack.c.l.b16 %v3610
    %v3654 = vunpack.c.h.b16 %v3610
    %v3655 = vunpack.c.l.b16 %v3611
    %v3656 = vunpack.c.h.b16 %v3611
    %v3657 = vunpack.c.l.b16 %v3612
    %v3658 = vunpack.c.h.b16 %v3612
    %v3659 = vunpack.c.l.b16 %v3613
    %v3660 = vunpack.c.h.b16 %v3613
    %v3661 = vunpack.c.l.b16 %v3614
    %v3662 = vunpack.c.h.b16 %v3614
    %v3663 = vpack.c.b16 %v3633, %v3631
    %v3664 = vpack.c.b16 %v3634, %v3632
    %v3665 = vpack.c.b16 %v3637, %v3635
    %v3666 = vpack.c.b16 %v3638, %v3636
    %v3667 = vpack.c.b16 %v3641, %v3639
    %v3668 = vpack.c.b16 %v3642, %v3640
    %v3669 = vpack.c.b16 %v3645, %v3643
    %v3670 = vpack.c.b16 %v3646, %v3644
    %v3671 = vpack.c.b16 %v3649, %v3647
    %v3672 = vpack.c.b16 %v3650, %v3648
    %v3673 = vpack.c.b16 %v3653, %v3651
    %v3674 = vpack.c.b16 %v3654, %v3652
    %v3675 = vpack.c.b16 %v3657, %v3655
    %v3676 = vpack.c.b16 %v3658, %v3656
    %v3677 = vpack.c.b16 %v3661, %v3659
    %v3678 = vpack.c.b16 %v3662, %v3660
    %3695 = vmatprep.subr.bf16.mxu0 %v3664
    %3696 = vmatpush1.bf16.msra.mxu0 %v3663
    %3697 = vmatprep.subr.bf16.mxu0 %v3666
    %3698 = vmatpush1.bf16.msra.mxu0 %v3665
    %3699 = vmatprep.subr.bf16.mxu0 %v3668
    %3700 = vmatpush1.bf16.msra.mxu0 %v3667
    %3701 = vmatprep.subr.bf16.mxu0 %v3670
    %3702 = vmatpush1.bf16.msra.mxu0 %v3669
    %3703 = vmatprep.subr.bf16.mxu0 %v3672
    %3704 = vmatpush1.bf16.msra.mxu0 %v3671
    %3705 = vmatprep.subr.bf16.mxu0 %v3674
    %3706 = vmatpush1.bf16.msra.mxu0 %v3673
    %3707 = vmatprep.subr.bf16.mxu0 %v3676
    %3708 = vmatpush1.bf16.msra.mxu0 %v3675
    %3709 = vmatprep.subr.bf16.mxu0 %v3678
    %3710 = vmatpush1.bf16.msra.mxu0 %v3677
    %3711 = vmatprep.subr.bf16.mxu0 0
    %3712 = vmatpush1.bf16.msra.mxu0 0
    %3713 = vmatprep.subr.bf16.mxu0 0
    %3714 = vmatpush1.bf16.msra.mxu0 0
    %3715 = vmatprep.subr.bf16.mxu0 0
    %3716 = vmatpush1.bf16.msra.mxu0 0
    %3717 = vmatprep.subr.bf16.mxu0 0
    %3718 = vmatpush1.bf16.msra.mxu0 0
    %3719 = vmatprep.subr.bf16.mxu0 0
    %3720 = vmatpush1.bf16.msra.mxu0 0
    %3721 = vmatprep.subr.bf16.mxu0 0
    %3722 = vmatpush1.bf16.msra.mxu0 0
    %3723 = vmatprep.subr.bf16.mxu0 0
    %3724 = vmatpush1.bf16.msra.mxu0 0
    %3725 = vmatprep.subr.bf16.mxu0 0
    %3726 = vmatpush1.bf16.msra.mxu0 0
    %3727 = vmatprep.mubr.bf16.mxu0 0
    %3728 = vmatmul.mubr.bf16.gmra.mrb[0].mxu0 %v3275
    %v3729 = vpop.f32.mrb[0].mxu0
    %v3730 = vadd.f32 0.0, %v3729
    %v3731 = vpop.f32.mrb[0].mxu0
    %v3732 = vadd.f32 0.0, %v3731
    %v3733 = vpop.f32.mrb[0].mxu0
    %v3734 = vpop.f32.mrb[0].mxu0
    %3735 = vdwg.mxu0
    %v3736 = vadd.f32 %v3593, %v3730
    %v3737 = vadd.f32 %v3595, %v3732
    %v3738 = vld [vmem:[#allocation2 + $0x180] sm:$0xff]
    %v3739 = vld [vmem:[#allocation2 + $0x188] sm:$0xff]
    %v3740 = vld [vmem:[#allocation2 + $0x190] sm:$0xff]
    %v3741 = vld [vmem:[#allocation2 + $0x198] sm:$0xff]
    %v3742 = vld [vmem:[#allocation2 + $0x1a0] sm:$0xff]
    %v3743 = vld [vmem:[#allocation2 + $0x1a8] sm:$0xff]
    %v3744 = vld [vmem:[#allocation2 + $0x1b0] sm:$0xff]
    %v3745 = vld [vmem:[#allocation2 + $0x1b8] sm:$0xff]
    %v3746 = vld [vmem:[#allocation2 + $0x1c0] sm:$0xff]
    %v3747 = vld [vmem:[#allocation2 + $0x1c8] sm:$0xff]
    %v3748 = vld [vmem:[#allocation2 + $0x1d0] sm:$0xff]
    %v3749 = vld [vmem:[#allocation2 + $0x1d8] sm:$0xff]
    %v3750 = vld [vmem:[#allocation2 + $0x1e0] sm:$0xff]
    %v3751 = vld [vmem:[#allocation2 + $0x1e8] sm:$0xff]
    %v3752 = vld [vmem:[#allocation2 + $0x1f0] sm:$0xff]
    %v3753 = vld [vmem:[#allocation2 + $0x1f8] sm:$0xff]
    %v3770 = vunpack.c.l.b16 %v3738
    %v3771 = vunpack.c.h.b16 %v3738
    %v3772 = vunpack.c.l.b16 %v3739
    %v3773 = vunpack.c.h.b16 %v3739
    %v3774 = vunpack.c.l.b16 %v3740
    %v3775 = vunpack.c.h.b16 %v3740
    %v3776 = vunpack.c.l.b16 %v3741
    %v3777 = vunpack.c.h.b16 %v3741
    %v3778 = vunpack.c.l.b16 %v3742
    %v3779 = vunpack.c.h.b16 %v3742
    %v3780 = vunpack.c.l.b16 %v3743
    %v3781 = vunpack.c.h.b16 %v3743
    %v3782 = vunpack.c.l.b16 %v3744
    %v3783 = vunpack.c.h.b16 %v3744
    %v3784 = vunpack.c.l.b16 %v3745
    %v3785 = vunpack.c.h.b16 %v3745
    %v3786 = vunpack.c.l.b16 %v3746
    %v3787 = vunpack.c.h.b16 %v3746
    %v3788 = vunpack.c.l.b16 %v3747
    %v3789 = vunpack.c.h.b16 %v3747
    %v3790 = vunpack.c.l.b16 %v3748
    %v3791 = vunpack.c.h.b16 %v3748
    %v3792 = vunpack.c.l.b16 %v3749
    %v3793 = vunpack.c.h.b16 %v3749
    %v3794 = vunpack.c.l.b16 %v3750
    %v3795 = vunpack.c.h.b16 %v3750
    %v3796 = vunpack.c.l.b16 %v3751
    %v3797 = vunpack.c.h.b16 %v3751
    %v3798 = vunpack.c.l.b16 %v3752
    %v3799 = vunpack.c.h.b16 %v3752
    %v3800 = vunpack.c.l.b16 %v3753
    %v3801 = vunpack.c.h.b16 %v3753
    %v3802 = vpack.c.b16 %v3772, %v3770
    %v3803 = vpack.c.b16 %v3773, %v3771
    %v3804 = vpack.c.b16 %v3776, %v3774
    %v3805 = vpack.c.b16 %v3777, %v3775
    %v3806 = vpack.c.b16 %v3780, %v3778
    %v3807 = vpack.c.b16 %v3781, %v3779
    %v3808 = vpack.c.b16 %v3784, %v3782
    %v3809 = vpack.c.b16 %v3785, %v3783
    %v3810 = vpack.c.b16 %v3788, %v3786
    %v3811 = vpack.c.b16 %v3789, %v3787
    %v3812 = vpack.c.b16 %v3792, %v3790
    %v3813 = vpack.c.b16 %v3793, %v3791
    %v3814 = vpack.c.b16 %v3796, %v3794
    %v3815 = vpack.c.b16 %v3797, %v3795
    %v3816 = vpack.c.b16 %v3800, %v3798
    %v3817 = vpack.c.b16 %v3801, %v3799
    %3834 = vmatprep.subr.bf16.mxu0 %v3803
    %3835 = vmatpush1.bf16.msra.mxu0 %v3802
    %3836 = vmatprep.subr.bf16.mxu0 %v3805
    %3837 = vmatpush1.bf16.msra.mxu0 %v3804
    %3838 = vmatprep.subr.bf16.mxu0 %v3807
    %3839 = vmatpush1.bf16.msra.mxu0 %v3806
    %3840 = vmatprep.subr.bf16.mxu0 %v3809
    %3841 = vmatpush1.bf16.msra.mxu0 %v3808
    %3842 = vmatprep.subr.bf16.mxu0 %v3811
    %3843 = vmatpush1.bf16.msra.mxu0 %v3810
    %3844 = vmatprep.subr.bf16.mxu0 %v3813
    %3845 = vmatpush1.bf16.msra.mxu0 %v3812
    %3846 = vmatprep.subr.bf16.mxu0 %v3815
    %3847 = vmatpush1.bf16.msra.mxu0 %v3814
    %3848 = vmatprep.subr.bf16.mxu0 %v3817
    %3849 = vmatpush1.bf16.msra.mxu0 %v3816
    %3850 = vmatprep.subr.bf16.mxu0 0
    %3851 = vmatpush1.bf16.msra.mxu0 0
    %3852 = vmatprep.subr.bf16.mxu0 0
    %3853 = vmatpush1.bf16.msra.mxu0 0
    %3854 = vmatprep.subr.bf16.mxu0 0
    %3855 = vmatpush1.bf16.msra.mxu0 0
    %3856 = vmatprep.subr.bf16.mxu0 0
    %3857 = vmatpush1.bf16.msra.mxu0 0
    %3858 = vmatprep.subr.bf16.mxu0 0
    %3859 = vmatpush1.bf16.msra.mxu0 0
    %3860 = vmatprep.subr.bf16.mxu0 0
    %3861 = vmatpush1.bf16.msra.mxu0 0
    %3862 = vmatprep.subr.bf16.mxu0 0
    %3863 = vmatpush1.bf16.msra.mxu0 0
    %3864 = vmatprep.subr.bf16.mxu0 0
    %3865 = vmatpush1.bf16.msra.mxu0 0
    %3866 = vmatprep.mubr.bf16.mxu0 0
    %3867 = vmatmul.mubr.bf16.gmra.mrb[0].mxu0 %v3323
    %v3868 = vpop.f32.mrb[0].mxu0
    %v3869 = vadd.f32 0.0, %v3868
    %v3870 = vpop.f32.mrb[0].mxu0
    %v3871 = vadd.f32 0.0, %v3870
    %v3872 = vpop.f32.mrb[0].mxu0
    %v3873 = vpop.f32.mrb[0].mxu0
    %3874 = vdwg.mxu0
    %v3875 = vadd.f32 %v3736, %v3869
    %v3876 = vadd.f32 %v3737, %v3871
    %3877 = vmatprep.subr.bf16.mxu0 %v3406
    %3878 = vmatpush1.bf16.msra.mxu0 %v3405
    %3879 = vmatprep.subr.bf16.mxu0 %v3408
    %3880 = vmatpush1.bf16.msra.mxu0 %v3407
    %3881 = vmatprep.subr.bf16.mxu0 %v3410
    %3882 = vmatpush1.bf16.msra.mxu0 %v3409
    %3883 = vmatprep.subr.bf16.mxu0 %v3412
    %3884 = vmatpush1.bf16.msra.mxu0 %v3411
    %3885 = vmatprep.subr.bf16.mxu0 %v3414
    %3886 = vmatpush1.bf16.msra.mxu0 %v3413
    %3887 = vmatprep.subr.bf16.mxu0 %v3416
    %3888 = vmatpush1.bf16.msra.mxu0 %v3415
    %3889 = vmatprep.subr.bf16.mxu0 %v3418
    %3890 = vmatpush1.bf16.msra.mxu0 %v3417
    %3891 = vmatprep.subr.bf16.mxu0 %v3420
    %3892 = vmatpush1.bf16.msra.mxu0 %v3419
    %3893 = vmatprep.subr.bf16.mxu0 0
    %3894 = vmatpush1.bf16.msra.mxu0 0
    %3895 = vmatprep.subr.bf16.mxu0 0
    %3896 = vmatpush1.bf16.msra.mxu0 0
    %3897 = vmatprep.subr.bf16.mxu0 0
    %3898 = vmatpush1.bf16.msra.mxu0 0
    %3899 = vmatprep.subr.bf16.mxu0 0
    %3900 = vmatpush1.bf16.msra.mxu0 0
    %3901 = vmatprep.subr.bf16.mxu0 0
    %3902 = vmatpush1.bf16.msra.mxu0 0
    %3903 = vmatprep.subr.bf16.mxu0 0
    %3904 = vmatpush1.bf16.msra.mxu0 0
    %3905 = vmatprep.subr.bf16.mxu0 0
    %3906 = vmatpush1.bf16.msra.mxu0 0
    %3907 = vmatprep.subr.bf16.mxu0 0
    %3908 = vmatpush1.bf16.msra.mxu0 0
    %3909 = vmatprep.mubr.bf16.mxu0 0
    %3910 = vmatmul.mubr.bf16.gmra.mrb[0].mxu0 %v3228
    %v3911 = vpop.f32.mrb[0].mxu0
    %v3912 = vadd.f32 0.0, %v3911
    %v3913 = vpop.f32.mrb[0].mxu0
    %v3914 = vadd.f32 0.0, %v3913
    %v3915 = vpop.f32.mrb[0].mxu0
    %v3916 = vpop.f32.mrb[0].mxu0
    %3917 = vdwg.mxu0
    %3918 = vmatprep.subr.bf16.mxu0 %v3527
    %3919 = vmatpush1.bf16.msra.mxu0 %v3526
    %3920 = vmatprep.subr.bf16.mxu0 %v3529
    %3921 = vmatpush1.bf16.msra.mxu0 %v3528
    %3922 = vmatprep.subr.bf16.mxu0 %v3531
    %3923 = vmatpush1.bf16.msra.mxu0 %v3530
    %3924 = vmatprep.subr.bf16.mxu0 %v3533
    %3925 = vmatpush1.bf16.msra.mxu0 %v3532
    %3926 = vmatprep.subr.bf16.mxu0 %v3535
    %3927 = vmatpush1.bf16.msra.mxu0 %v3534
    %3928 = vmatprep.subr.bf16.mxu0 %v3537
    %3929 = vmatpush1.bf16.msra.mxu0 %v3536
    %3930 = vmatprep.subr.bf16.mxu0 %v3539
    %3931 = vmatpush1.bf16.msra.mxu0 %v3538
    %3932 = vmatprep.subr.bf16.mxu0 %v3541
    %3933 = vmatpush1.bf16.msra.mxu0 %v3540
    %3934 = vmatprep.subr.bf16.mxu0 0
    %3935 = vmatpush1.bf16.msra.mxu0 0
    %3936 = vmatprep.subr.bf16.mxu0 0
    %3937 = vmatpush1.bf16.msra.mxu0 0
    %3938 = vmatprep.subr.bf16.mxu0 0
    %3939 = vmatpush1.bf16.msra.mxu0 0
    %3940 = vmatprep.subr.bf16.mxu0 0
    %3941 = vmatpush1.bf16.msra.mxu0 0
    %3942 = vmatprep.subr.bf16.mxu0 0
    %3943 = vmatpush1.bf16.msra.mxu0 0
    %3944 = vmatprep.subr.bf16.mxu0 0
    %3945 = vmatpush1.bf16.msra.mxu0 0
    %3946 = vmatprep.subr.bf16.mxu0 0
    %3947 = vmatpush1.bf16.msra.mxu0 0
    %3948 = vmatprep.subr.bf16.mxu0 0
    %3949 = vmatpush1.bf16.msra.mxu0 0
    %3950 = vmatprep.mubr.bf16.mxu0 0
    %3951 = vmatmul.mubr.bf16.gmra.mrb[0].mxu0 %v3180
    %v3952 = vpop.f32.mrb[0].mxu0
    %v3953 = vadd.f32 %v3912, %v3952
    %v3954 = vpop.f32.mrb[0].mxu0
    %v3955 = vadd.f32 %v3914, %v3954
    %v3956 = vpop.f32.mrb[0].mxu0
    %v3957 = vpop.f32.mrb[0].mxu0
    %3958 = vdwg.mxu0
    %3959 = vmatprep.subr.bf16.mxu0 %v3664
    %3960 = vmatpush1.bf16.msra.mxu0 %v3663
    %3961 = vmatprep.subr.bf16.mxu0 %v3666
    %3962 = vmatpush1.bf16.msra.mxu0 %v3665
    %3963 = vmatprep.subr.bf16.mxu0 %v3668
    %3964 = vmatpush1.bf16.msra.mxu0 %v3667
    %3965 = vmatprep.subr.bf16.mxu0 %v3670
    %3966 = vmatpush1.bf16.msra.mxu0 %v3669
    %3967 = vmatprep.subr.bf16.mxu0 %v3672
    %3968 = vmatpush1.bf16.msra.mxu0 %v3671
    %3969 = vmatprep.subr.bf16.mxu0 %v3674
    %3970 = vmatpush1.bf16.msra.mxu0 %v3673
    %3971 = vmatprep.subr.bf16.mxu0 %v3676
    %3972 = vmatpush1.bf16.msra.mxu0 %v3675
    %3973 = vmatprep.subr.bf16.mxu0 %v3678
    %3974 = vmatpush1.bf16.msra.mxu0 %v3677
    %3975 = vmatprep.subr.bf16.mxu0 0
    %3976 = vmatpush1.bf16.msra.mxu0 0
    %3977 = vmatprep.subr.bf16.mxu0 0
    %3978 = vmatpush1.bf16.msra.mxu0 0
    %3979 = vmatprep.subr.bf16.mxu0 0
    %3980 = vmatpush1.bf16.msra.mxu0 0
    %3981 = vmatprep.subr.bf16.mxu0 0
    %3982 = vmatpush1.bf16.msra.mxu0 0
    %3983 = vmatprep.subr.bf16.mxu0 0
    %3984 = vmatpush1.bf16.msra.mxu0 0
    %3985 = vmatprep.subr.bf16.mxu0 0
    %3986 = vmatpush1.bf16.msra.mxu0 0
    %3987 = vmatprep.subr.bf16.mxu0 0
    %3988 = vmatpush1.bf16.msra.mxu0 0
    %3989 = vmatprep.subr.bf16.mxu0 0
    %3990 = vmatpush1.bf16.msra.mxu0 0
    %3991 = vmatprep.mubr.bf16.mxu0 0
    %3992 = vmatmul.mubr.bf16.gmra.mrb[0].mxu0 %v3276
    %v3993 = vpop.f32.mrb[0].mxu0
    %v3994 = vadd.f32 0.0, %v3993
    %v3995 = vpop.f32.mrb[0].mxu0
    %v3996 = vadd.f32 0.0, %v3995
    %v3997 = vpop.f32.mrb[0].mxu0
    %v3998 = vpop.f32.mrb[0].mxu0
    %3999 = vdwg.mxu0
    %v4000 = vadd.f32 %v3953, %v3994
    %v4001 = vadd.f32 %v3955, %v3996
    %4002 = vmatprep.subr.bf16.mxu0 %v3803
    %4003 = vmatpush1.bf16.msra.mxu0 %v3802
    %4004 = vmatprep.subr.bf16.mxu0 %v3805
    %4005 = vmatpush1.bf16.msra.mxu0 %v3804
    %4006 = vmatprep.subr.bf16.mxu0 %v3807
    %4007 = vmatpush1.bf16.msra.mxu0 %v3806
    %4008 = vmatprep.subr.bf16.mxu0 %v3809
    %4009 = vmatpush1.bf16.msra.mxu0 %v3808
    %4010 = vmatprep.subr.bf16.mxu0 %v3811
    %4011 = vmatpush1.bf16.msra.mxu0 %v3810
    %4012 = vmatprep.subr.bf16.mxu0 %v3813
    %4013 = vmatpush1.bf16.msra.mxu0 %v3812
    %4014 = vmatprep.subr.bf16.mxu0 %v3815
    %4015 = vmatpush1.bf16.msra.mxu0 %v3814
    %4016 = vmatprep.subr.bf16.mxu0 %v3817
    %4017 = vmatpush1.bf16.msra.mxu0 %v3816
    %4018 = vmatprep.subr.bf16.mxu0 0
    %4019 = vmatpush1.bf16.msra.mxu0 0
    %4020 = vmatprep.subr.bf16.mxu0 0
    %4021 = vmatpush1.bf16.msra.mxu0 0
    %4022 = vmatprep.subr.bf16.mxu0 0
    %4023 = vmatpush1.bf16.msra.mxu0 0
    %4024 = vmatprep.subr.bf16.mxu0 0
    %4025 = vmatpush1.bf16.msra.mxu0 0
    %4026 = vmatprep.subr.bf16.mxu0 0
    %4027 = vmatpush1.bf16.msra.mxu0 0
    %4028 = vmatprep.subr.bf16.mxu0 0
    %4029 = vmatpush1.bf16.msra.mxu0 0
    %4030 = vmatprep.subr.bf16.mxu0 0
    %4031 = vmatpush1.bf16.msra.mxu0 0
    %4032 = vmatprep.subr.bf16.mxu0 0
    %4033 = vmatpush1.bf16.msra.mxu0 0
    %4034 = vmatprep.mubr.bf16.mxu0 0
    %4035 = vmatmul.mubr.bf16.gmra.mrb[0].mxu0 %v3324
    %v4036 = vpop.f32.mrb[0].mxu0
    %v4037 = vadd.f32 0.0, %v4036
    %v4038 = vpop.f32.mrb[0].mxu0
    %v4039 = vadd.f32 0.0, %v4038
    %v4040 = vpop.f32.mrb[0].mxu0
    %v4041 = vpop.f32.mrb[0].mxu0
    %4042 = vdwg.mxu0
    %v4043 = vadd.f32 %v4000, %v4037
    %v4044 = vadd.f32 %v4001, %v4039
    %v4045 = vsel %vm1981, %v3875, 0.0
    %v4046 = vrot.slane %v4045, 4
    %v4047 = vadd.f32 %v4045, %v4046
    %v4048 = vrot.slane %v4047, 2
    %v4049 = vadd.f32 %v4047, %v4048
    %v4050 = vrot.slane %v4049, 1
    %v4051 = vadd.f32 %v4049, %v4050
    %v4052 = vsel %vm1981, %v3876, 0.0
    %v4053 = vrot.slane %v4052, 4
    %v4054 = vadd.f32 %v4052, %v4053
    %v4055 = vrot.slane %v4054, 2
    %v4056 = vadd.f32 %v4054, %v4055
    %v4057 = vrot.slane %v4056, 1
    %v4058 = vadd.f32 %v4056, %v4057
    %v4059 = vmul.f32 %v3875, %v3875
    %v4060 = vmul.f32 %v3876, %v3876
    %v4061 = vsel %vm1981, %v4059, 0.0
    %v4062 = vrot.slane %v4061, 4
    %v4063 = vadd.f32 %v4061, %v4062
    %v4064 = vrot.slane %v4063, 2
    %v4065 = vadd.f32 %v4063, %v4064
    %v4066 = vrot.slane %v4065, 1
    %v4067 = vadd.f32 %v4065, %v4066
    %v4068 = vsel %vm1981, %v4060, 0.0
    %v4069 = vrot.slane %v4068, 4
    %v4070 = vadd.f32 %v4068, %v4069
    %v4071 = vrot.slane %v4070, 2
    %v4072 = vadd.f32 %v4070, %v4071
    %v4073 = vrot.slane %v4072, 1
    %v4074 = vadd.f32 %v4072, %v4073
    %v4075 = vsel %vm1981, %v4043, 0.0
    %v4076 = vrot.slane %v4075, 4
    %v4077 = vadd.f32 %v4075, %v4076
    %v4078 = vrot.slane %v4077, 2
    %v4079 = vadd.f32 %v4077, %v4078
    %v4080 = vrot.slane %v4079, 1
    %v4081 = vadd.f32 %v4079, %v4080
    %v4082 = vsel %vm1981, %v4044, 0.0
    %v4083 = vrot.slane %v4082, 4
    %v4084 = vadd.f32 %v4082, %v4083
    %v4085 = vrot.slane %v4084, 2
    %v4086 = vadd.f32 %v4084, %v4085
    %v4087 = vrot.slane %v4086, 1
    %v4088 = vadd.f32 %v4086, %v4087
    %v4089 = vadd.f32 %v4051, %v4081
    %v4090 = vadd.f32 %v4058, %v4088
    %v4091 = vmul.f32 %v4043, %v4043
    %v4092 = vmul.f32 %v4044, %v4044
    %v4093 = vsel %vm1981, %v4091, 0.0
    %v4094 = vrot.slane %v4093, 4
    %v4095 = vadd.f32 %v4093, %v4094
    %v4096 = vrot.slane %v4095, 2
    %v4097 = vadd.f32 %v4095, %v4096
    %v4098 = vrot.slane %v4097, 1
    %v4099 = vadd.f32 %v4097, %v4098
    %v4100 = vsel %vm1981, %v4092, 0.0
    %v4101 = vrot.slane %v4100, 4
    %v4102 = vadd.f32 %v4100, %v4101
    %v4103 = vrot.slane %v4102, 2
    %v4104 = vadd.f32 %v4102, %v4103
    %v4105 = vrot.slane %v4104, 1
    %v4106 = vadd.f32 %v4104, %v4105
    %v4107 = vadd.f32 %v4067, %v4099
    %v4108 = vadd.f32 %v4074, %v4106
    %v4109 = vmul.f32 %v4089, 0.125
    %v4110 = vmul.f32 %v4090, 0.125
    %v4111 = vmul.f32 %v4107, 0.125
    %v4112 = vmul.f32 %v4108, 0.125
    %v4113 = vmul.f32 %v4109, %v4109
    %v4114 = vmul.f32 %v4110, %v4110
    %v4115 = vsub.f32 %v4111, %v4113
    %v4116 = vsub.f32 %v4112, %v4114
    %v4117 = vld [vmem:[%s11] ss:$2 sm:$0x3]
    %v4118 = vadd.f32 %v4115, 1e-05
    %v4119 = vadd.f32 %v4116, 1e-05
    %v4120 = vrsqrt.pop %v4118
    %v4121 = vrsqrt.pop %v4119
    %v4124 = vcombine.low %v4120, %v4121
    %v4126 = vunpack.c.l.s4 1966171168
    %v4127 = vunpack.c.0.s8 %v4126
    %v4128 = vlaneseq
    %v4129 = vshrl.u32 %v4128, 7
    %v4130 = vsub.s32 %v4127, %v4129
    %v4131 = vrot.slane %v4124, %v4130
    %v4133 = vunpack.c.l.s4 1966171168
    %v4134 = vunpack.c.0.s8 %v4133
    %v4135 = vlaneseq
    %v4136 = vshrl.u32 %v4135, 7
    %v4137 = vsub.s32 %v4134, %v4136
    %v4138 = vrot.slane %v4131, %v4137
    %v4140 = vmul.f32 %v4117, %v4138
    %s4141 = scalar_lea.vmem %s11, 1
    %v4142 = vld [vmem:[%s4141] ss:$2 sm:$0x3]
    %v4144 = vlaneseq
    %v4145 = vshrl.u32 %v4144, 7
    %v4146 = vsub.s32 0, %v4145
    %v4147 = vrot.slane %v4140, %v4146
    %v4148 = vlaneseq
    %v4149 = vshrl.u32 %v4148, 7
    %v4150 = vsub.s32 1, %v4149
    %v4151 = vrot.slane %v4140, %v4150
    %v4154 = vmul.f32 %v4109, %v4147
    %v4155 = vmul.f32 %v4110, %v4151
    %v4158 = vcombine.low %v4154, %v4155
    %v4160 = vunpack.c.l.s4 1966171168
    %v4161 = vunpack.c.0.s8 %v4160
    %v4162 = vlaneseq
    %v4163 = vshrl.u32 %v4162, 7
    %v4164 = vsub.s32 %v4161, %v4163
    %v4165 = vrot.slane %v4158, %v4164
    %v4167 = vunpack.c.l.s4 1966171168
    %v4168 = vunpack.c.0.s8 %v4167
    %v4169 = vlaneseq
    %v4170 = vshrl.u32 %v4169, 7
    %v4171 = vsub.s32 %v4168, %v4170
    %v4172 = vrot.slane %v4165, %v4171
    %v4174 = vsub.f32 %v4142, %v4172
    %v4175 = vmul.f32 %v3875, %v4147
    %v4176 = vmul.f32 %v3876, %v4151
    %v4178 = vlaneseq
    %v4179 = vshrl.u32 %v4178, 7
    %v4180 = vsub.s32 0, %v4179
    %v4181 = vrot.slane %v4174, %v4180
    %v4182 = vlaneseq
    %v4183 = vshrl.u32 %v4182, 7
    %v4184 = vsub.s32 1, %v4183
    %v4185 = vrot.slane %v4174, %v4184
    %v4188 = vadd.f32 %v4175, %v4181
    %v4189 = vadd.f32 %v4176, %v4185
    %v4190 = vadd.f32 %v4188, %v4189
    %v4191 = vmax.f32 %v4190, 0.0
    %v4192 = vmul.f32 %v4043, %v4147
    %v4193 = vmul.f32 %v4044, %v4151
    %v4194 = vadd.f32 %v4192, %v4181
    %v4195 = vadd.f32 %v4193, %v4185
    %v4196 = vadd.f32 %v4194, %v4195
    %v4197 = vmax.f32 %v4196, 0.0
    %v4198 = vld [vmem:[#allocation4] sm:$0xff]
    %v4199 = vld [vmem:[#allocation4 + $0x8] sm:$0xff]
    %v4200 = vld [vmem:[#allocation4 + $0x10] sm:$0xff]
    %v4201 = vld [vmem:[#allocation4 + $0x18] sm:$0xff]
    %v4202 = vld [vmem:[#allocation4 + $0x20] sm:$0xff]
    %v4203 = vld [vmem:[#allocation4 + $0x28] sm:$0xff]
    %v4204 = vld [vmem:[#allocation4 + $0x30] sm:$0xff]
    %v4205 = vld [vmem:[#allocation4 + $0x38] sm:$0xff]
    %v4206 = vld [vmem:[#allocation4 + $0x40] sm:$0xff]
    %v4207 = vld [vmem:[#allocation4 + $0x48] sm:$0xff]
    %v4208 = vld [vmem:[#allocation4 + $0x50] sm:$0xff]
    %v4209 = vld [vmem:[#allocation4 + $0x58] sm:$0xff]
    %v4210 = vld [vmem:[#allocation4 + $0x60] sm:$0xff]
    %v4211 = vld [vmem:[#allocation4 + $0x68] sm:$0xff]
    %v4212 = vld [vmem:[#allocation4 + $0x70] sm:$0xff]
    %v4213 = vld [vmem:[#allocation4 + $0x78] sm:$0xff]
    %v4214 = vld [vmem:[#allocation4 + $0x80] sm:$0xff]
    %v4215 = vld [vmem:[#allocation4 + $0x88] sm:$0xff]
    %v4216 = vld [vmem:[#allocation4 + $0x90] sm:$0xff]
    %v4217 = vld [vmem:[#allocation4 + $0x98] sm:$0xff]
    %v4218 = vld [vmem:[#allocation4 + $0xa0] sm:$0xff]
    %v4219 = vld [vmem:[#allocation4 + $0xa8] sm:$0xff]
    %v4220 = vld [vmem:[#allocation4 + $0xb0] sm:$0xff]
    %v4221 = vld [vmem:[#allocation4 + $0xb8] sm:$0xff]
    %v4222 = vld [vmem:[#allocation4 + $0xc0] sm:$0xff]
    %v4223 = vld [vmem:[#allocation4 + $0xc8] sm:$0xff]
    %v4224 = vld [vmem:[#allocation4 + $0xd0] sm:$0xff]
    %v4225 = vld [vmem:[#allocation4 + $0xd8] sm:$0xff]
    %v4226 = vld [vmem:[#allocation4 + $0xe0] sm:$0xff]
    %v4227 = vld [vmem:[#allocation4 + $0xe8] sm:$0xff]
    %v4228 = vld [vmem:[#allocation4 + $0xf0] sm:$0xff]
    %v4229 = vld [vmem:[#allocation4 + $0xf8] sm:$0xff]
    %v4230 = vlaneseq
    %v4231 = vshrl.u32 %v4230, 7
    %v4232 = vpack.c.bf16 %v4191, %v4191
    %v4265 = vunpack.c.l.b16 %v4198
    %v4266 = vunpack.c.h.b16 %v4198
    %v4267 = vunpack.c.l.b16 %v4199
    %v4268 = vunpack.c.h.b16 %v4199
    %v4269 = vunpack.c.l.b16 %v4200
    %v4270 = vunpack.c.h.b16 %v4200
    %v4271 = vunpack.c.l.b16 %v4201
    %v4272 = vunpack.c.h.b16 %v4201
    %v4273 = vunpack.c.l.b16 %v4202
    %v4274 = vunpack.c.h.b16 %v4202
    %v4275 = vunpack.c.l.b16 %v4203
    %v4276 = vunpack.c.h.b16 %v4203
    %v4277 = vunpack.c.l.b16 %v4204
    %v4278 = vunpack.c.h.b16 %v4204
    %v4279 = vunpack.c.l.b16 %v4205
    %v4280 = vunpack.c.h.b16 %v4205
    %v4281 = vunpack.c.l.b16 %v4206
    %v4282 = vunpack.c.h.b16 %v4206
    %v4283 = vunpack.c.l.b16 %v4207
    %v4284 = vunpack.c.h.b16 %v4207
    %v4285 = vunpack.c.l.b16 %v4208
    %v4286 = vunpack.c.h.b16 %v4208
    %v4287 = vunpack.c.l.b16 %v4209
    %v4288 = vunpack.c.h.b16 %v4209
    %v4289 = vunpack.c.l.b16 %v4210
    %v4290 = vunpack.c.h.b16 %v4210
    %v4291 = vunpack.c.l.b16 %v4211
    %v4292 = vunpack.c.h.b16 %v4211
    %v4293 = vunpack.c.l.b16 %v4212
    %v4294 = vunpack.c.h.b16 %v4212
    %v4295 = vunpack.c.l.b16 %v4213
    %v4296 = vunpack.c.h.b16 %v4213
    %v4297 = vunpack.c.l.b16 %v4214
    %v4298 = vunpack.c.h.b16 %v4214
    %v4299 = vunpack.c.l.b16 %v4215
    %v4300 = vunpack.c.h.b16 %v4215
    %v4301 = vunpack.c.l.b16 %v4216
    %v4302 = vunpack.c.h.b16 %v4216
    %v4303 = vunpack.c.l.b16 %v4217
    %v4304 = vunpack.c.h.b16 %v4217
    %v4305 = vunpack.c.l.b16 %v4218
    %v4306 = vunpack.c.h.b16 %v4218
    %v4307 = vunpack.c.l.b16 %v4219
    %v4308 = vunpack.c.h.b16 %v4219
    %v4309 = vunpack.c.l.b16 %v4220
    %v4310 = vunpack.c.h.b16 %v4220
    %v4311 = vunpack.c.l.b16 %v4221
    %v4312 = vunpack.c.h.b16 %v4221
    %v4313 = vunpack.c.l.b16 %v4222
    %v4314 = vunpack.c.h.b16 %v4222
    %v4315 = vunpack.c.l.b16 %v4223
    %v4316 = vunpack.c.h.b16 %v4223
    %v4317 = vunpack.c.l.b16 %v4224
    %v4318 = vunpack.c.h.b16 %v4224
    %v4319 = vunpack.c.l.b16 %v4225
    %v4320 = vunpack.c.h.b16 %v4225
    %v4321 = vunpack.c.l.b16 %v4226
    %v4322 = vunpack.c.h.b16 %v4226
    %v4323 = vunpack.c.l.b16 %v4227
    %v4324 = vunpack.c.h.b16 %v4227
    %v4325 = vunpack.c.l.b16 %v4228
    %v4326 = vunpack.c.h.b16 %v4228
    %v4327 = vunpack.c.l.b16 %v4229
    %v4328 = vunpack.c.h.b16 %v4229
    %v4329 = vpack.c.b16 %v4269, %v4265
    %v4330 = vpack.c.b16 %v4270, %v4266
    %v4331 = vpack.c.b16 %v4271, %v4267
    %v4332 = vpack.c.b16 %v4272, %v4268
    %v4333 = vpack.c.b16 %v4277, %v4273
    %v4334 = vpack.c.b16 %v4278, %v4274
    %v4335 = vpack.c.b16 %v4279, %v4275
    %v4336 = vpack.c.b16 %v4280, %v4276
    %v4337 = vpack.c.b16 %v4285, %v4281
    %v4338 = vpack.c.b16 %v4286, %v4282
    %v4339 = vpack.c.b16 %v4287, %v4283
    %v4340 = vpack.c.b16 %v4288, %v4284
    %v4341 = vpack.c.b16 %v4293, %v4289
    %v4342 = vpack.c.b16 %v4294, %v4290
    %v4343 = vpack.c.b16 %v4295, %v4291
    %v4344 = vpack.c.b16 %v4296, %v4292
    %v4345 = vpack.c.b16 %v4301, %v4297
    %v4346 = vpack.c.b16 %v4302, %v4298
    %v4347 = vpack.c.b16 %v4303, %v4299
    %v4348 = vpack.c.b16 %v4304, %v4300
    %v4349 = vpack.c.b16 %v4309, %v4305
    %v4350 = vpack.c.b16 %v4310, %v4306
    %v4351 = vpack.c.b16 %v4311, %v4307
    %v4352 = vpack.c.b16 %v4312, %v4308
    %v4353 = vpack.c.b16 %v4317, %v4313
    %v4354 = vpack.c.b16 %v4318, %v4314
    %v4355 = vpack.c.b16 %v4319, %v4315
    %v4356 = vpack.c.b16 %v4320, %v4316
    %v4357 = vpack.c.b16 %v4325, %v4321
    %v4358 = vpack.c.b16 %v4326, %v4322
    %v4359 = vpack.c.b16 %v4327, %v4323
    %v4360 = vpack.c.b16 %v4328, %v4324
    %4393 = vmatprep.subr.bf16.mxu0 %v4330
    %4394 = vmatpush1.bf16.msra.mxu0 %v4329
    %4395 = vmatprep.subr.bf16.mxu0 %v4334
    %4396 = vmatpush1.bf16.msra.mxu0 %v4333
    %4397 = vmatprep.subr.bf16.mxu0 %v4338
    %4398 = vmatpush1.bf16.msra.mxu0 %v4337
    %4399 = vmatprep.subr.bf16.mxu0 %v4342
    %4400 = vmatpush1.bf16.msra.mxu0 %v4341
    %4401 = vmatprep.subr.bf16.mxu0 %v4346
    %4402 = vmatpush1.bf16.msra.mxu0 %v4345
    %4403 = vmatprep.subr.bf16.mxu0 %v4350
    %4404 = vmatpush1.bf16.msra.mxu0 %v4349
    %4405 = vmatprep.subr.bf16.mxu0 %v4354
    %4406 = vmatpush1.bf16.msra.mxu0 %v4353
    %4407 = vmatprep.subr.bf16.mxu0 %v4358
    %4408 = vmatpush1.bf16.msra.mxu0 %v4357
    %4409 = vmatprep.subr.bf16.mxu0 0
    %4410 = vmatpush1.bf16.msra.mxu0 0
    %4411 = vmatprep.subr.bf16.mxu0 0
    %4412 = vmatpush1.bf16.msra.mxu0 0
    %4413 = vmatprep.subr.bf16.mxu0 0
    %4414 = vmatpush1.bf16.msra.mxu0 0
    %4415 = vmatprep.subr.bf16.mxu0 0
    %4416 = vmatpush1.bf16.msra.mxu0 0
    %4417 = vmatprep.subr.bf16.mxu0 0
    %4418 = vmatpush1.bf16.msra.mxu0 0
    %4419 = vmatprep.subr.bf16.mxu0 0
    %4420 = vmatpush1.bf16.msra.mxu0 0
    %4421 = vmatprep.subr.bf16.mxu0 0
    %4422 = vmatpush1.bf16.msra.mxu0 0
    %4423 = vmatprep.subr.bf16.mxu0 0
    %4424 = vmatpush1.bf16.msra.mxu0 0
    %4425 = vmatprep.mubr.bf16.mxu0 0
    %4426 = vmatmul.mubr.bf16.gmra.mrb[0].mxu0 %v4232
    %v4427 = vpop.f32.mrb[0].mxu0
    %v4428 = vadd.f32 0.0, %v4427
    %v4429 = vpop.f32.mrb[0].mxu0
    %v4430 = vadd.f32 0.0, %v4429
    %v4431 = vpop.f32.mrb[0].mxu0
    %v4432 = vpop.f32.mrb[0].mxu0
    %4433 = vdwg.mxu0
    %4434 = vmatprep.subr.bf16.mxu0 %v4332
    %4435 = vmatpush1.bf16.msra.mxu0 %v4331
    %4436 = vmatprep.subr.bf16.mxu0 %v4336
    %4437 = vmatpush1.bf16.msra.mxu0 %v4335
    %4438 = vmatprep.subr.bf16.mxu0 %v4340
    %4439 = vmatpush1.bf16.msra.mxu0 %v4339
    %4440 = vmatprep.subr.bf16.mxu0 %v4344
    %4441 = vmatpush1.bf16.msra.mxu0 %v4343
    %4442 = vmatprep.subr.bf16.mxu0 %v4348
    %4443 = vmatpush1.bf16.msra.mxu0 %v4347
    %4444 = vmatprep.subr.bf16.mxu0 %v4352
    %4445 = vmatpush1.bf16.msra.mxu0 %v4351
    %4446 = vmatprep.subr.bf16.mxu0 %v4356
    %4447 = vmatpush1.bf16.msra.mxu0 %v4355
    %4448 = vmatprep.subr.bf16.mxu0 %v4360
    %4449 = vmatpush1.bf16.msra.mxu0 %v4359
    %4450 = vmatprep.subr.bf16.mxu0 0
    %4451 = vmatpush1.bf16.msra.mxu0 0
    %4452 = vmatprep.subr.bf16.mxu0 0
    %4453 = vmatpush1.bf16.msra.mxu0 0
    %4454 = vmatprep.subr.bf16.mxu0 0
    %4455 = vmatpush1.bf16.msra.mxu0 0
    %4456 = vmatprep.subr.bf16.mxu0 0
    %4457 = vmatpush1.bf16.msra.mxu0 0
    %4458 = vmatprep.subr.bf16.mxu0 0
    %4459 = vmatpush1.bf16.msra.mxu0 0
    %4460 = vmatprep.subr.bf16.mxu0 0
    %4461 = vmatpush1.bf16.msra.mxu0 0
    %4462 = vmatprep.subr.bf16.mxu0 0
    %4463 = vmatpush1.bf16.msra.mxu0 0
    %4464 = vmatprep.subr.bf16.mxu0 0
    %4465 = vmatpush1.bf16.msra.mxu0 0
    %4466 = vmatprep.mubr.bf16.mxu0 0
    %4467 = vmatmul.mubr.bf16.gmra.mrb[0].mxu0 %v4232
    %v4468 = vpop.f32.mrb[0].mxu0
    %v4469 = vadd.f32 0.0, %v4468
    %v4470 = vpop.f32.mrb[0].mxu0
    %v4471 = vadd.f32 0.0, %v4470
    %v4472 = vpop.f32.mrb[0].mxu0
    %v4473 = vpop.f32.mrb[0].mxu0
    %4474 = vdwg.mxu0
    %vm4475 = vcmp.eq.s32.totalorder %v4231, 0
    %v4476 = vsel %vm4475, 1, 0
    %vm4477 = vcmp.eq.s32.totalorder %v4476, 1
    %v4478 = vsel %vm4477, %v4428, 0.0
    %v4479 = vadd.f32 %v4478, 0.0
    %vm4480 = vcmp.eq.s32.totalorder %v4231, 1
    %v4481 = vsel %vm4480, 1, 0
    %vm4482 = vcmp.eq.s32.totalorder %v4481, 1
    %v4483 = vsel %vm4482, %v4430, 0.0
    %v4484 = vadd.f32 %v4479, %v4483
    %vm4485 = vcmp.eq.s32.totalorder %v4231, 2
    %v4486 = vsel %vm4485, 1, 0
    %vm4487 = vcmp.eq.s32.totalorder %v4486, 1
    %v4488 = vsel %vm4487, %v4469, 0.0
    %v4489 = vadd.f32 %v4484, %v4488
    %vm4490 = vcmp.eq.s32.totalorder %v4231, 3
    %v4491 = vsel %vm4490, 1, 0
    %vm4492 = vcmp.eq.s32.totalorder %v4491, 1
    %v4493 = vsel %vm4492, %v4471, 0.0
    %v4494 = vadd.f32 %v4489, %v4493
    %v4495 = vsel %vm1981, %v4494, 0.0
    %v4496 = vrot.slane %v4495, 4
    %v4497 = vadd.f32 %v4495, %v4496
    %v4498 = vrot.slane %v4497, 2
    %v4499 = vadd.f32 %v4497, %v4498
    %v4500 = vrot.slane %v4499, 1
    %v4501 = vadd.f32 %v4499, %v4500
    %v4502 = vsel %vm4477, %v4501, 0.0
    %v4503 = vadd.f32 %v4502, 0.0
    %v4504 = vpack.c.bf16 %v4197, %v4197
    %4505 = vmatprep.subr.bf16.mxu0 %v4330
    %4506 = vmatpush1.bf16.msra.mxu0 %v4329
    %4507 = vmatprep.subr.bf16.mxu0 %v4334
    %4508 = vmatpush1.bf16.msra.mxu0 %v4333
    %4509 = vmatprep.subr.bf16.mxu0 %v4338
    %4510 = vmatpush1.bf16.msra.mxu0 %v4337
    %4511 = vmatprep.subr.bf16.mxu0 %v4342
    %4512 = vmatpush1.bf16.msra.mxu0 %v4341
    %4513 = vmatprep.subr.bf16.mxu0 %v4346
    %4514 = vmatpush1.bf16.msra.mxu0 %v4345
    %4515 = vmatprep.subr.bf16.mxu0 %v4350
    %4516 = vmatpush1.bf16.msra.mxu0 %v4349
    %4517 = vmatprep.subr.bf16.mxu0 %v4354
    %4518 = vmatpush1.bf16.msra.mxu0 %v4353
    %4519 = vmatprep.subr.bf16.mxu0 %v4358
    %4520 = vmatpush1.bf16.msra.mxu0 %v4357
    %4521 = vmatprep.subr.bf16.mxu0 0
    %4522 = vmatpush1.bf16.msra.mxu0 0
    %4523 = vmatprep.subr.bf16.mxu0 0
    %4524 = vmatpush1.bf16.msra.mxu0 0
    %4525 = vmatprep.subr.bf16.mxu0 0
    %4526 = vmatpush1.bf16.msra.mxu0 0
    %4527 = vmatprep.subr.bf16.mxu0 0
    %4528 = vmatpush1.bf16.msra.mxu0 0
    %4529 = vmatprep.subr.bf16.mxu0 0
    %4530 = vmatpush1.bf16.msra.mxu0 0
    %4531 = vmatprep.subr.bf16.mxu0 0
    %4532 = vmatpush1.bf16.msra.mxu0 0
    %4533 = vmatprep.subr.bf16.mxu0 0
    %4534 = vmatpush1.bf16.msra.mxu0 0
    %4535 = vmatprep.subr.bf16.mxu0 0
    %4536 = vmatpush1.bf16.msra.mxu0 0
    %4537 = vmatprep.mubr.bf16.mxu0 0
    %4538 = vmatmul.mubr.bf16.gmra.mrb[0].mxu0 %v4504
    %v4539 = vpop.f32.mrb[0].mxu0
    %v4540 = vadd.f32 0.0, %v4539
    %v4541 = vpop.f32.mrb[0].mxu0
    %v4542 = vadd.f32 0.0, %v4541
    %v4543 = vpop.f32.mrb[0].mxu0
    %v4544 = vpop.f32.mrb[0].mxu0
    %4545 = vdwg.mxu0
    %4546 = vmatprep.subr.bf16.mxu0 %v4332
    %4547 = vmatpush1.bf16.msra.mxu0 %v4331
    %4548 = vmatprep.subr.bf16.mxu0 %v4336
    %4549 = vmatpush1.bf16.msra.mxu0 %v4335
    %4550 = vmatprep.subr.bf16.mxu0 %v4340
    %4551 = vmatpush1.bf16.msra.mxu0 %v4339
    %4552 = vmatprep.subr.bf16.mxu0 %v4344
    %4553 = vmatpush1.bf16.msra.mxu0 %v4343
    %4554 = vmatprep.subr.bf16.mxu0 %v4348
    %4555 = vmatpush1.bf16.msra.mxu0 %v4347
    %4556 = vmatprep.subr.bf16.mxu0 %v4352
    %4557 = vmatpush1.bf16.msra.mxu0 %v4351
    %4558 = vmatprep.subr.bf16.mxu0 %v4356
    %4559 = vmatpush1.bf16.msra.mxu0 %v4355
    %4560 = vmatprep.subr.bf16.mxu0 %v4360
    %4561 = vmatpush1.bf16.msra.mxu0 %v4359
    %4562 = vmatprep.subr.bf16.mxu0 0
    %4563 = vmatpush1.bf16.msra.mxu0 0
    %4564 = vmatprep.subr.bf16.mxu0 0
    %4565 = vmatpush1.bf16.msra.mxu0 0
    %4566 = vmatprep.subr.bf16.mxu0 0
    %4567 = vmatpush1.bf16.msra.mxu0 0
    %4568 = vmatprep.subr.bf16.mxu0 0
    %4569 = vmatpush1.bf16.msra.mxu0 0
    %4570 = vmatprep.subr.bf16.mxu0 0
    %4571 = vmatpush1.bf16.msra.mxu0 0
    %4572 = vmatprep.subr.bf16.mxu0 0
    %4573 = vmatpush1.bf16.msra.mxu0 0
    %4574 = vmatprep.subr.bf16.mxu0 0
    %4575 = vmatpush1.bf16.msra.mxu0 0
    %4576 = vmatprep.subr.bf16.mxu0 0
    %4577 = vmatpush1.bf16.msra.mxu0 0
    %4578 = vmatprep.mubr.bf16.mxu0 0
    %4579 = vmatmul.mubr.bf16.gmra.mrb[0].mxu0 %v4504
    %v4580 = vpop.f32.mrb[0].mxu0
    %v4581 = vadd.f32 0.0, %v4580
    %v4582 = vpop.f32.mrb[0].mxu0
    %v4583 = vadd.f32 0.0, %v4582
    %v4584 = vpop.f32.mrb[0].mxu0
    %v4585 = vpop.f32.mrb[0].mxu0
    %4586 = vdwg.mxu0
    %v4587 = vsel %vm4477, %v4540, 0.0
    %v4588 = vadd.f32 %v4587, 0.0
    %v4589 = vsel %vm4482, %v4542, 0.0
    %v4590 = vadd.f32 %v4588, %v4589
    %v4591 = vsel %vm4487, %v4581, 0.0
    %v4592 = vadd.f32 %v4590, %v4591
    %v4593 = vsel %vm4492, %v4583, 0.0
    %v4594 = vadd.f32 %v4592, %v4593
    %v4595 = vsel %vm1981, %v4594, 0.0
    %v4596 = vrot.slane %v4595, 4
    %v4597 = vadd.f32 %v4595, %v4596
    %v4598 = vrot.slane %v4597, 2
    %v4599 = vadd.f32 %v4597, %v4598
    %v4600 = vrot.slane %v4599, 1
    %v4601 = vadd.f32 %v4599, %v4600
    %v4602 = vsel %vm4482, %v4601, 0.0
    %v4603 = vadd.f32 %v4503, %v4602
    %v4604 = vld [vmem:[%s13] sm:$0x1]
    %v4606 = vlaneseq
    %v4607 = vshrl.u32 %v4606, 7
    %v4608 = vsub.s32 0, %v4607
    %v4609 = vrot.slane %v4604, %v4608
    %v4611 = vadd.f32 %v4603, %v4609
    %4612 = vst [vmem:[%s14] sm:$0xff] %v4611
    // Predicated region
    $region66: #{resnet_forward.1} parent=1 // pred_check
      _
    $region67: #{resnet_forward.1} parent=1 // pred_check_branch
      %4614 = sbr.rel (0) target = $region69
    $region68: #{resnet_forward.1} parent=1 // pred_region
      _
    $region69: #{resnet_forward.1} parent=1 // pred_fallthru
      _
    // Predicated region
    $region70: #{resnet_forward.1} parent=1 // pred_check
      _
    $region71: #{resnet_forward.1} parent=1 // pred_check_branch
      %4616 = sbr.rel (0) target = $region73
    $region72: #{resnet_forward.1} parent=1 // pred_region
      _
    $region73: #{resnet_forward.1} parent=1 // pred_fallthru
      _
    %4617 = vsyncpa [#allocation3], 1
    %4618 = vsyncpa [#allocation5], 1

</llo_original>
